<compile_context>
chip_gen: v6e
topology: v6e:2x2x1
jax: 0.10.0
libtpu: 0.0.40
codegen_flags: <defaults>
</compile_context>

<pallas_src>
import numpy as np
import jax
import jax.numpy as jnp
from jax.experimental import pallas as pl
from jax.experimental.pallas import tpu as pltpu

BN_EPS = 1e-5
GW = 128          # padded gate-group width: each of r/z/n starts on a 128-lane boundary
HP = 128          # padded hidden width: real 2H lanes + zero pad


# --------------------------------------------------------------------------- kernel
def grunet_kernel(x_aug_ref, state_ref,
                  w0_ref, whh0_ref, gb0_ref, bhhn0_ref,
                  wih1a_ref, wih1b_ref, whh1_ref, gb1_ref, bhhn1_ref,
                  w1fa_ref, w1fb_ref, b1f_ref, w2row_ref, b2f_ref,
                  wlinx_ref, selT_ref, blin_ref,
                  out_ref, hcat_ref,
                  gi_s, st0_s, st1_s):
    f32, bf16 = jnp.float32, jnp.bfloat16
    B = state_ref.shape[1]
    SB = gi_s.shape[0]
    S = SB // B
    gw = gi_s.shape[1] // 3                   # = GW (128)
    H2 = hcat_ref.shape[1] // 2               # real 2H lanes

    # ------------- fused bidirectional GRU recurrence (one serial chain per layer) -----
    # gi_s holds the hoisted input gates; block i (B rows) = fused step i =
    # (forward direction at time i, backward direction at time S-1-i).  Per-step critical
    # path: one bf16 (B,128)@(128,384) MXU matmul, sigmoid/tanh, a few full-vreg VPU ops
    # and a single aligned 128-lane store.  All slices are at 128-lane boundaries.
    def run_layer(whh_ref, bhhn_ref, h0, stage_ref):
        whh = whh_ref[...]                                        # (HP, 3GW) bf16
        bhhn = jnp.broadcast_to(bhhn_ref[...], (B, gw))           # hoisted broadcast
        h = h0                                                    # (B, HP) f32, pads = 0
        for i in range(S):                                        # static unroll, S small
            gi = gi_s[i * B:(i + 1) * B, :]                       # (B, 3GW) f32
            gh = jnp.dot(h.astype(bf16), whh,
                         preferred_element_type=f32)              # (B, 3GW) f32 accum
            rz = jax.nn.sigmoid(gi[:, :2 * gw] + gh[:, :2 * gw])  # [r group | z group]
            r = rz[:, 0:gw]
            z = rz[:, gw:2 * gw]
            n = jnp.tanh(gi[:, 2 * gw:] + r * (gh[:, 2 * gw:] + bhhn))
            h = n + z * (h - n)                                   # (1-z)*n + z*h
            stage_ref[i * B:(i + 1) * B, :] = h                   # ONE aligned 128-lane store
        return h

    def time_reverse(v):                                          # 8 static block copies,
        return jnp.concatenate(                                   # off the serial chain
            [v[(S - 1 - i) * B:(S - i) * B, :] for i in range(S)], axis=0)

    xf = x_aug_ref[:, 0:1]                                        # fwd-time input column
    xb = x_aug_ref[:, 1:2]                                        # reversed-time input column

    # ------------- layer 0: hoisted input gates (input_size == 1 -> lane-broadcast FMA) -
    gi_s[...] = xf * w0_ref[0:1, :] + xb * w0_ref[1:2, :] + gb0_ref[...]
    h0_fin = run_layer(whh0_ref, bhhn0_ref, state_ref[0], st0_s)

    # ------------- layer 1: input gates from the stage buffer + its time reversal -------
    st0 = st0_s[...]
    gi_s[...] = (jnp.dot(st0.astype(bf16), wih1a_ref[...], preferred_element_type=f32)
                 + jnp.dot(time_reverse(st0).astype(bf16), wih1b_ref[...],
                           preferred_element_type=f32)
                 + gb1_ref[...])
    h1_fin = run_layer(whh1_ref, bhhn1_ref, state_ref[1], st1_s)

    # ------------- h_out: one lane-dense (B, 4H) store (split to (4,B,H) in the wrapper) -
    hcat_ref[...] = jnp.concatenate([h0_fin[:, 0:H2], h1_fin[:, 0:H2]], axis=-1)

    # ------------- head, batched over all S*B rows (BatchNorm folded, reversal folded) ---
    st1 = st1_s[...]
    h1 = jnp.maximum(
        jnp.dot(st1.astype(bf16), w1fa_ref[...], preferred_element_type=f32)
        + jnp.dot(time_reverse(st1).astype(bf16), w1fb_ref[...], preferred_element_type=f32)
        + b1f_ref[...], 0.0)                                      # (S*B, 128), real 0:H
    h2 = jnp.maximum(jnp.sum(h1 * w2row_ref[...], axis=-1, keepdims=True)
                     + b2f_ref[...], 0.0)                         # (S*B, 1) lane reduction
    res = xf + h2                                                 # residual with the input

    # ------------- tail: one lane-broadcast multiply + one (B,S*B)@(S*B,Ppad) matmul -----
    out_ref[...] = jax.nn.sigmoid(
        jnp.dot(selT_ref[...], res * wlinx_ref[...], preferred_element_type=f32)
        + blin_ref[...])


# --------------------------------------------------------------------------- one-time param prep
def prepare_params(p):
    """Fuse directions/gates, pad to vreg-aligned layouts, fold biases + BatchNorm,
    pre-cast matmul weights to bf16.  Called once."""
    f32, bf16 = jnp.float32, jnp.bfloat16
    H = p['w_hh_l0'].shape[-1]
    P, S = p['Wlin'].shape
    B = p['state'].shape[1]
    assert 2 * H <= GW and 2 * H <= HP

    def place(mat3h, d):
        # (..., 3H) torch gate order (r,z,n) -> (..., 3*GW); direction-d, gate g lives at
        # lanes [g*GW + d*H : g*GW + (d+1)*H]; the rest of each group is zero padding.
        out = jnp.zeros(mat3h.shape[:-1] + (3 * GW,), f32)
        for g in range(3):
            c = g * GW + d * H
            out = out.at[..., c:c + H].set(mat3h[..., g * H:(g + 1) * H])
        return out

    def fuse(w):              # (2, 3H, F) -> (2F, 3*GW): rows 0:F fwd part, F:2F bwd part
        return jnp.concatenate(
            [place(jnp.transpose(w[d]).astype(f32), d) for d in (0, 1)], axis=0)

    def pad_rows(m, rows):
        return jnp.zeros((rows, m.shape[1]), f32).at[:m.shape[0], :].set(m)

    def fuse_bias(b_ih, b_hh):
        gb = jnp.zeros((1, 3 * GW), f32)
        for d in (0, 1):
            rz_only = jnp.concatenate([b_hh[d][:2 * H], jnp.zeros((H,), f32)])
            gb = gb + place((b_ih[d] + rz_only)[None, :], d)
        bhhn = (jnp.zeros((1, GW), f32)
                .at[0, 0:H].set(b_hh[0][2 * H:])
                .at[0, H:2 * H].set(b_hh[1][2 * H:]))
        return gb, bhhn

    prep = {'H': H, 'P': P, 'S': S, 'B': B}

    # ----- layer 0
    prep['w0'] = fuse(p['w_ih_l0'])                                       # (2, 3GW) f32
    prep['whh0'] = pad_rows(fuse(p['w_hh_l0']), HP).astype(bf16)          # (HP, 3GW) bf16
    prep['gb0'], prep['bhhn0'] = fuse_bias(p['b_ih_l0'], p['b_hh_l0'])

    # ----- layer 1: split fused W_ih into the row-halves multiplying the stage buffer
    # (rows = [fwd-dir x out0_fwd | bwd-dir x out0_bwd]) and its time-reversed copy.
    wih1 = fuse(p['w_ih_l1'])                                             # (4H, 3GW)
    w_a = jnp.concatenate([wih1[0:H], wih1[3 * H:4 * H]], axis=0)         # stage rows
    w_b = jnp.concatenate([wih1[2 * H:3 * H], wih1[H:2 * H]], axis=0)     # reversed rows
    prep['wih1a'] = pad_rows(w_a, HP).astype(bf16)
    prep['wih1b'] = pad_rows(w_b, HP).astype(bf16)
    prep['whh1'] = pad_rows(fuse(p['w_hh_l1']), HP).astype(bf16)
    prep['gb1'], prep['bhhn1'] = fuse_bias(p['b_ih_l1'], p['b_hh_l1'])

    # ----- initial hidden states, fused per layer: [h_fwd | h_bwd | 0-pad]  -> (2, B, HP)
    st = p['state'].astype(f32)

    def cat_state(a, b):
        return jnp.zeros((B, HP), f32).at[:, 0:H].set(a).at[:, H:2 * H].set(b)

    prep['state_cat'] = jnp.stack([cat_state(st[0], st[1]), cat_state(st[2], st[3])], axis=0)

    # ----- head: BatchNorm (eval running stats) folded, lane-dense (128-wide) outputs.
    s1 = p['bn1_g'] / jnp.sqrt(p['bn1_rv'] + BN_EPS)
    w1f = (p['W1'].T * s1[None, :]).astype(f32)                           # (2H, H)
    prep['w1fa'] = jnp.zeros((HP, 128), f32).at[0:H, 0:H].set(w1f[0:H]).astype(bf16)
    prep['w1fb'] = jnp.zeros((HP, 128), f32).at[H:2 * H, 0:H].set(w1f[H:2 * H]).astype(bf16)
    prep['b1f'] = jnp.zeros((1, 128), f32).at[0, 0:H].set(
        (p['b1'] - p['bn1_rm']) * s1 + p['bn1_b'])
    s2 = p['bn2_g'] / jnp.sqrt(p['bn2_rv'] + BN_EPS)
    w2f = (p['W2'].T * s2[None, :]).astype(f32)                           # (H, 1)
    prep['w2row'] = jnp.zeros((1, 128), f32).at[0, 0:H].set(w2f[:, 0])
    prep['b2f'] = ((p['b2'] - p['bn2_rm']) * s2 + p['bn2_b'])[None, :].astype(f32)  # (1,1)

    # ----- final Linear(seq_len -> pre_len): laid out so the kernel tail is one
    # lane-broadcast multiply + one (B, S*B)@(S*B, Ppad) matmul, lane-dense output.
    Ppad = max(128, ((P + 127) // 128) * 128)
    prep['Ppad'] = Ppad
    wlinT = jnp.zeros((S, Ppad), f32).at[:, :P].set(p['Wlin'].T.astype(f32))
    prep['wlinx'] = jnp.repeat(wlinT, B, axis=0)                          # (S*B, Ppad)
    prep['selT'] = jnp.tile(jnp.eye(B, dtype=f32), (1, S))                # (B, S*B)
    prep['blin'] = jnp.zeros((1, Ppad), f32).at[:, :P].set(p['blin'][None, :].astype(f32))
    return prep


# --------------------------------------------------------------------------- wrapper
def _padded_bytes(shape, dtype):
    shape = (1, 1) + tuple(int(d) for d in shape)
    lanes = -(-shape[-1] // 128) * 128
    subl = -(-shape[-2] // 16) * 16
    lead = int(np.prod(shape[:-2]))
    return lead * subl * lanes * jnp.dtype(dtype).itemsize


def grunet_forward(x, prep):
    bz, S, nodes = x.shape
    B = bz * nodes
    H, P, Ppad = prep['H'], prep['P'], prep['Ppad']
    assert S == prep['S'] and B == prep['B']

    # x.permute(1,0,2).reshape(seq_len, bz*nodes) plus its time-reversed copy (used by the
    # backward direction of the fused recurrence) -- layout glue stays in plain JAX.
    xs = jnp.transpose(x, (1, 0, 2)).reshape(S, B).astype(jnp.float32)
    x_aug = jnp.stack([xs.reshape(S * B), xs[::-1].reshape(S * B)], axis=-1)   # (S*B, 2)

    args = (x_aug, prep['state_cat'],
            prep['w0'], prep['whh0'], prep['gb0'], prep['bhhn0'],
            prep['wih1a'], prep['wih1b'], prep['whh1'], prep['gb1'], prep['bhhn1'],
            prep['w1fa'], prep['w1fb'], prep['b1f'], prep['w2row'], prep['b2f'],
            prep['wlinx'], prep['selT'], prep['blin'])

    out_shapes = (jax.ShapeDtypeStruct((B, Ppad), jnp.float32),
                  jax.ShapeDtypeStruct((B, 4 * H), jnp.float32))
    scratch_specs = [((S * B, 3 * GW), jnp.float32),   # fused input gates
                     ((S * B, HP), jnp.float32),       # layer-0 stage buffer
                     ((S * B, HP), jnp.float32)]       # layer-1 stage buffer
    scratch = [pltpu.VMEM(s, d) for s, d in scratch_specs]

    # VMEM limit derived from the actual buffer footprint (plus headroom), not a blanket cap.
    need = (sum(_padded_bytes(a.shape, a.dtype) for a in args)
            + sum(_padded_bytes(o.shape, o.dtype) for o in out_shapes)
            + sum(_padded_bytes(s, d) for s, d in scratch_specs))
    vmem_limit = int(min(128 * 1024 * 1024, 2 * need + (1 << 20)))

    vmem = lambda: pl.BlockSpec(memory_space=pltpu.MemorySpace.VMEM)
    out_pad, hcat = pl.pallas_call(
        grunet_kernel,
        out_shape=out_shapes,
        in_specs=[vmem() for _ in args],
        out_specs=(vmem(), vmem()),
        scratch_shapes=scratch,
        compiler_params=pltpu.CompilerParams(vmem_limit_bytes=vmem_limit),
        # TODO(synk): at production batch sizes add grid=(pl.cdiv(B, B_blk),) with
        # dimension_semantics=("parallel",) (B_blk a multiple of 8; ~2x larger on
        # v5e/v6e than on v7x, whose 2 TensorCores share 64 MiB VMEM) so the kernel
        # shards across cores; at this demo size a single resident block is optimal,
        # and batching more sequences per call is the main MXU-utilization lever.
    )(*args)

    out = out_pad[:, :P].reshape(bz, nodes, P)   # matches reshape(S,bz,nodes).permute(1,2,0)@Wlin.T
    h_out = jnp.stack([hcat[:, i * H:(i + 1) * H] for i in range(4)], axis=0)
    return out, h_out


# --------------------------------------------------------------------------- reference (pure JAX)
def grunet_reference(x, p):
    bz, S, nodes = x.shape
    B = bz * nodes
    H = p['w_hh_l0'].shape[-1]
    xs = jnp.transpose(x, (1, 0, 2)).reshape(S, B, 1)
    layer_input = xs
    h_finals = []
    for l in range(2):
        outs = []
        for d in range(2):
            w_ih, w_hh = p[f'w_ih_l{l}'][d], p[f'w_hh_l{l}'][d]
            b_ih, b_hh = p[f'b_ih_l{l}'][d], p[f'b_hh_l{l}'][d]
            h = p['state'][l * 2 + d]
            hs = [None] * S
            order = range(S) if d == 0 else range(S - 1, -1, -1)
            for t in order:
                gi = layer_input[t] @ w_ih.T + b_ih
                gh = h @ w_hh.T + b_hh
                r = jax.nn.sigmoid(gi[:, :H] + gh[:, :H])
                z = jax.nn.sigmoid(gi[:, H:2 * H] + gh[:, H:2 * H])
                n = jnp.tanh(gi[:, 2 * H:] + r * gh[:, 2 * H:])
                h = (1.0 - z) * n + z * h
                hs[t] = h
            outs.append(jnp.stack(hs, axis=0))
            h_finals.append(h)
        layer_input = jnp.concatenate(outs, axis=-1)
    h_out = jnp.stack(h_finals, axis=0)
    y = layer_input.reshape(S * B, 2 * H)
    h1 = y @ p['W1'].T + p['b1']
    h1 = (h1 - p['bn1_rm']) / jnp.sqrt(p['bn1_rv'] + BN_EPS) * p['bn1_g'] + p['bn1_b']
    h1 = jnp.maximum(h1, 0.0)
    h2 = h1 @ p['W2'].T + p['b2']
    h2 = (h2 - p['bn2_rm']) / jnp.sqrt(p['bn2_rv'] + BN_EPS) * p['bn2_g'] + p['bn2_b']
    h2 = jnp.maximum(h2, 0.0)
    res = xs + h2.reshape(S, B, 1)
    t = jnp.transpose(res[..., 0].reshape(S, bz, nodes), (1, 2, 0))
    out = jax.nn.sigmoid(t @ p['Wlin'].T + p['blin'])
    return out, h_out


# --------------------------------------------------------------------------- params
def init_params(key, bz, nodes, seq_len, pre_len, H=32):
    B = bz * nodes
    ks = jax.random.split(key, 24)
    bnd = 1.0 / np.sqrt(H)
    u = lambda kk, shape: jax.random.uniform(kk, shape, jnp.float32, -bnd, bnd)
    p = {}
    p['w_ih_l0'] = u(ks[0], (2, 3 * H, 1))
    p['w_hh_l0'] = u(ks[1], (2, 3 * H, H))
    p['b_ih_l0'] = u(ks[2], (2, 3 * H))
    p['b_hh_l0'] = u(ks[3], (2, 3 * H))
    p['w_ih_l1'] = u(ks[4], (2, 3 * H, 2 * H))
    p['w_hh_l1'] = u(ks[5], (2, 3 * H, H))
    p['b_ih_l1'] = u(ks[6], (2, 3 * H))
    p['b_hh_l1'] = u(ks[7], (2, 3 * H))
    p['state'] = jax.random.normal(ks[8], (4, B, H), jnp.float32) * 0.1      # xavier-ish
    p['W1'] = jax.random.normal(ks[9], (H, 2 * H), jnp.float32) / np.sqrt(2 * H)
    p['b1'] = jax.random.normal(ks[10], (H,), jnp.float32) * 0.01
    p['bn1_g'] = 1.0 + 0.1 * jax.random.normal(ks[11], (H,), jnp.float32)
    p['bn1_b'] = 0.05 * jax.random.normal(ks[12], (H,), jnp.float32)
    p['bn1_rm'] = 0.1 * jax.random.normal(ks[13], (H,), jnp.float32)
    p['bn1_rv'] = 1.0 + 0.1 * jax.random.uniform(ks[14], (H,), jnp.float32)
    p['W2'] = jax.random.normal(ks[15], (1, H), jnp.float32) / np.sqrt(H)
    p['b2'] = jax.random.normal(ks[16], (1,), jnp.float32) * 0.01
    p['bn2_g'] = 1.0 + 0.1 * jax.random.normal(ks[17], (1,), jnp.float32)
    p['bn2_b'] = 0.05 * jax.random.normal(ks[18], (1,), jnp.float32)
    p['bn2_rm'] = 0.1 * jax.random.normal(ks[19], (1,), jnp.float32)
    p['bn2_rv'] = 1.0 + 0.1 * jax.random.uniform(ks[20], (1,), jnp.float32)
    p['Wlin'] = jax.random.normal(ks[21], (pre_len, seq_len), jnp.float32) / np.sqrt(seq_len)
    p['blin'] = jax.random.normal(ks[22], (pre_len,), jnp.float32) * 0.01
    return p


# --------------------------------------------------------------------------- main
if __name__ == "__main__":
    bz, nodes, seq_len, pre_len, hidden = 2, 4, 8, 3, 32
    key = jax.random.PRNGKey(0)
    kx, kp = jax.random.split(key)
    x = jax.random.normal(kx, (bz, seq_len, nodes), jnp.float32)
    params = init_params(kp, bz, nodes, seq_len, pre_len, H=hidden)

    prep = prepare_params(params)          # one-time weight fusion / layout / bf16 prep
    out, h_out = grunet_forward(x, prep)
    jax.block_until_ready((out, h_out))

    assert out.shape == (bz, nodes, pre_len)
    assert h_out.shape == (4, bz * nodes, hidden)

    ref_out, ref_h = grunet_reference(x, params)
    # Matmul operands are bf16 (f32 accumulation, f32 gate math) per the perf review, so
    # validate against the f32 reference at 1e-2; structural errors would be O(0.1..1).
    np.testing.assert_allclose(np.asarray(out), np.asarray(ref_out), rtol=1e-2, atol=1e-2)
    np.testing.assert_allclose(np.asarray(h_out), np.asarray(ref_h), rtol=1e-2, atol=1e-2)

    print("KERNEL_OK")
</pallas_src>

<mosaic_0001>
module attributes {stable_mosaic.version = 11 : i64} {
  func.func @grunet_kernel(%arg0: memref<64x2xf32, #tpu.memory_space<vmem>>, %arg1: memref<2x8x128xf32, #tpu.memory_space<vmem>>, %arg2: memref<2x384xf32, #tpu.memory_space<vmem>>, %arg3: memref<128x384xbf16, #tpu.memory_space<vmem>>, %arg4: memref<1x384xf32, #tpu.memory_space<vmem>>, %arg5: memref<1x128xf32, #tpu.memory_space<vmem>>, %arg6: memref<128x384xbf16, #tpu.memory_space<vmem>>, %arg7: memref<128x384xbf16, #tpu.memory_space<vmem>>, %arg8: memref<128x384xbf16, #tpu.memory_space<vmem>>, %arg9: memref<1x384xf32, #tpu.memory_space<vmem>>, %arg10: memref<1x128xf32, #tpu.memory_space<vmem>>, %arg11: memref<128x128xbf16, #tpu.memory_space<vmem>>, %arg12: memref<128x128xbf16, #tpu.memory_space<vmem>>, %arg13: memref<1x128xf32, #tpu.memory_space<vmem>>, %arg14: memref<1x128xf32, #tpu.memory_space<vmem>>, %arg15: memref<1x1xf32, #tpu.memory_space<vmem>>, %arg16: memref<64x128xf32, #tpu.memory_space<vmem>>, %arg17: memref<8x64xf32, #tpu.memory_space<vmem>>, %arg18: memref<1x128xf32, #tpu.memory_space<vmem>>, %arg19: memref<8x128xf32, #tpu.memory_space<vmem>>, %arg20: memref<8x128xf32, #tpu.memory_space<vmem>>, %arg21: memref<64x384xf32, #tpu.memory_space<vmem>>, %arg22: memref<64x128xf32, #tpu.memory_space<vmem>>, %arg23: memref<64x128xf32, #tpu.memory_space<vmem>>) attributes {dimension_semantics = [], scalar_prefetch = 0 : i64, scratch_operands = 3 : i64, tpu.core_type = #tpu.core_type<tc>} {
    %c0 = arith.constant 0 : index
    %c0_0 = arith.constant 0 : index
    %0 = vector.load %arg0[%c0, %c0_0] : memref<64x2xf32, #tpu.memory_space<vmem>>, vector<64x1xf32>
    %c0_1 = arith.constant 0 : index
    %c1 = arith.constant 1 : index
    %1 = vector.load %arg0[%c0_1, %c1] : memref<64x2xf32, #tpu.memory_space<vmem>>, vector<64x1xf32>
    %c0_2 = arith.constant 0 : index
    %c0_3 = arith.constant 0 : index
    %2 = vector.load %arg2[%c0_2, %c0_3] : memref<2x384xf32, #tpu.memory_space<vmem>>, vector<1x384xf32>
    %3 = vector.broadcast %0 : vector<64x1xf32> to vector<64x384xf32>
    %4 = vector.broadcast %2 : vector<1x384xf32> to vector<64x384xf32>
    %5 = arith.mulf %3, %4 : vector<64x384xf32>
    %c1_4 = arith.constant 1 : index
    %c0_5 = arith.constant 0 : index
    %6 = vector.load %arg2[%c1_4, %c0_5] : memref<2x384xf32, #tpu.memory_space<vmem>>, vector<1x384xf32>
    %7 = vector.broadcast %1 : vector<64x1xf32> to vector<64x384xf32>
    %8 = vector.broadcast %6 : vector<1x384xf32> to vector<64x384xf32>
    %9 = arith.mulf %7, %8 : vector<64x384xf32>
    %10 = arith.addf %5, %9 : vector<64x384xf32>
    %c0_6 = arith.constant 0 : index
    %c0_7 = arith.constant 0 : index
    %11 = vector.load %arg4[%c0_6, %c0_7] : memref<1x384xf32, #tpu.memory_space<vmem>>, vector<1x384xf32>
    %12 = vector.broadcast %11 : vector<1x384xf32> to vector<64x384xf32>
    %13 = arith.addf %10, %12 : vector<64x384xf32>
    %c0_8 = arith.constant 0 : index
    %c0_9 = arith.constant 0 : index
    %14 = vector.load %arg21[%c0_8, %c0_9] : memref<64x384xf32, #tpu.memory_space<vmem>>, vector<64x384xf32>
    tpu.vector_store %arg21[%c0_8, %c0_9], %13 {strides = array<i32>} : memref<64x384xf32, #tpu.memory_space<vmem>>, vector<64x384xf32>,
    %c0_10 = arith.constant 0 : index
    %c0_11 = arith.constant 0 : index
    %c0_12 = arith.constant 0 : index
    %15 = vector.load %arg1[%c0_10, %c0_11, %c0_12] : memref<2x8x128xf32, #tpu.memory_space<vmem>>, vector<1x8x128xf32>
    %16 = vector.shape_cast %15 : vector<1x8x128xf32> to vector<8x128xf32>
    %c0_13 = arith.constant 0 : index
    %c0_14 = arith.constant 0 : index
    %17 = vector.load %arg3[%c0_13, %c0_14] : memref<128x384xbf16, #tpu.memory_space<vmem>>, vector<128x384xbf16>
    %c0_15 = arith.constant 0 : index
    %c0_16 = arith.constant 0 : index
    %18 = vector.load %arg5[%c0_15, %c0_16] : memref<1x128xf32, #tpu.memory_space<vmem>>, vector<1x128xf32>
    %19 = vector.shape_cast %18 : vector<1x128xf32> to vector<1x128xf32>
    %20 = vector.broadcast %19 : vector<1x128xf32> to vector<8x128xf32>
    %c0_17 = arith.constant 0 : index
    %c0_18 = arith.constant 0 : index
    %21 = vector.load %arg21[%c0_17, %c0_18] : memref<64x384xf32, #tpu.memory_space<vmem>>, vector<8x384xf32>
    %22 = arith.truncf %16 : vector<8x128xf32> to vector<8x128xbf16>
    %cst = arith.constant dense<0.000000e+00> : vector<8x384xf32>
    %23 = tpu.matmul %22, %17, %cst {dimension_numbers = #tpu.dot_dimension_numbers<[1], [0], [0], [1], [0, 0, 1, 1], [], []>} : vector<8x128xbf16>, vector<128x384xbf16>, vector<8x384xf32> -> vector<8x384xf32>
    %24 = vector.extract_strided_slice %21 {offsets = [0, 0], sizes = [8, 256], strides = [1, 1]} : vector<8x384xf32> to vector<8x256xf32>
    %25 = vector.extract_strided_slice %23 {offsets = [0, 0], sizes = [8, 256], strides = [1, 1]} : vector<8x384xf32> to vector<8x256xf32>
    %26 = arith.addf %24, %25 : vector<8x256xf32>
    %27 = arith.negf %26 : vector<8x256xf32>
    %28 = math.exp %27 : vector<8x256xf32>
    %cst_19 = arith.constant 1.000000e+00 : f32
    %29 = vector.broadcast %cst_19 : f32 to vector<8x256xf32>
    %30 = arith.addf %29, %28 : vector<8x256xf32>
    %31 = arith.divf %29, %30 : vector<8x256xf32>
    %32 = vector.extract_strided_slice %31 {offsets = [0, 0], sizes = [8, 128], strides = [1, 1]} : vector<8x256xf32> to vector<8x128xf32>
    %33 = vector.extract_strided_slice %31 {offsets = [0, 128], sizes = [8, 128], strides = [1, 1]} : vector<8x256xf32> to vector<8x128xf32>
    %34 = vector.extract_strided_slice %21 {offsets = [0, 256], sizes = [8, 128], strides = [1, 1]} : vector<8x384xf32> to vector<8x128xf32>
    %35 = vector.extract_strided_slice %23 {offsets = [0, 256], sizes = [8, 128], strides = [1, 1]} : vector<8x384xf32> to vector<8x128xf32>
    %36 = arith.addf %35, %20 : vector<8x128xf32>
    %37 = arith.mulf %32, %36 : vector<8x128xf32>
    %38 = arith.addf %34, %37 : vector<8x128xf32>
    %39 = math.tanh %38 : vector<8x128xf32>
    %40 = arith.subf %16, %39 : vector<8x128xf32>
    %41 = arith.mulf %33, %40 : vector<8x128xf32>
    %42 = arith.addf %39, %41 : vector<8x128xf32>
    %c0_20 = arith.constant 0 : index
    %c0_21 = arith.constant 0 : index
    %43 = vector.load %arg22[%c0_20, %c0_21] : memref<64x128xf32, #tpu.memory_space<vmem>>, vector<8x128xf32>
    tpu.vector_store %arg22[%c0_20, %c0_21], %42 {strides = array<i32>} : memref<64x128xf32, #tpu.memory_space<vmem>>, vector<8x128xf32>,
    %c8 = arith.constant 8 : index
    %c0_22 = arith.constant 0 : index
    %44 = vector.load %arg21[%c8, %c0_22] : memref<64x384xf32, #tpu.memory_space<vmem>>, vector<8x384xf32>
    %45 = arith.truncf %42 : vector<8x128xf32> to vector<8x128xbf16>
    %cst_23 = arith.constant dense<0.000000e+00> : vector<8x384xf32>
    %46 = tpu.matmul %45, %17, %cst_23 {dimension_numbers = #tpu.dot_dimension_numbers<[1], [0], [0], [1], [0, 0, 1, 1], [], []>} : vector<8x128xbf16>, vector<128x384xbf16>, vector<8x384xf32> -> vector<8x384xf32>
    %47 = vector.extract_strided_slice %44 {offsets = [0, 0], sizes = [8, 256], strides = [1, 1]} : vector<8x384xf32> to vector<8x256xf32>
    %48 = vector.extract_strided_slice %46 {offsets = [0, 0], sizes = [8, 256], strides = [1, 1]} : vector<8x384xf32> to vector<8x256xf32>
    %49 = arith.addf %47, %48 : vector<8x256xf32>
    %50 = arith.negf %49 : vector<8x256xf32>
    %51 = math.exp %50 : vector<8x256xf32>
    %cst_24 = arith.constant 1.000000e+00 : f32
    %52 = vector.broadcast %cst_24 : f32 to vector<8x256xf32>
    %53 = arith.addf %52, %51 : vector<8x256xf32>
    %54 = arith.divf %52, %53 : vector<8x256xf32>
    %55 = vector.extract_strided_slice %54 {offsets = [0, 0], sizes = [8, 128], strides = [1, 1]} : vector<8x256xf32> to vector<8x128xf32>
    %56 = vector.extract_strided_slice %54 {offsets = [0, 128], sizes = [8, 128], strides = [1, 1]} : vector<8x256xf32> to vector<8x128xf32>
    %57 = vector.extract_strided_slice %44 {offsets = [0, 256], sizes = [8, 128], strides = [1, 1]} : vector<8x384xf32> to vector<8x128xf32>
    %58 = vector.extract_strided_slice %46 {offsets = [0, 256], sizes = [8, 128], strides = [1, 1]} : vector<8x384xf32> to vector<8x128xf32>
    %59 = arith.addf %58, %20 : vector<8x128xf32>
    %60 = arith.mulf %55, %59 : vector<8x128xf32>
    %61 = arith.addf %57, %60 : vector<8x128xf32>
    %62 = math.tanh %61 : vector<8x128xf32>
    %63 = arith.subf %42, %62 : vector<8x128xf32>
    %64 = arith.mulf %56, %63 : vector<8x128xf32>
    %65 = arith.addf %62, %64 : vector<8x128xf32>
    %c8_25 = arith.constant 8 : index
    %c0_26 = arith.constant 0 : index
    %66 = vector.load %arg22[%c8_25, %c0_26] : memref<64x128xf32, #tpu.memory_space<vmem>>, vector<8x128xf32>
    tpu.vector_store %arg22[%c8_25, %c0_26], %65 {strides = array<i32>} : memref<64x128xf32, #tpu.memory_space<vmem>>, vector<8x128xf32>,
    %c16 = arith.constant 16 : index
    %c0_27 = arith.constant 0 : index
    %67 = vector.load %arg21[%c16, %c0_27] : memref<64x384xf32, #tpu.memory_space<vmem>>, vector<8x384xf32>
    %68 = arith.truncf %65 : vector<8x128xf32> to vector<8x128xbf16>
    %cst_28 = arith.constant dense<0.000000e+00> : vector<8x384xf32>
    %69 = tpu.matmul %68, %17, %cst_28 {dimension_numbers = #tpu.dot_dimension_numbers<[1], [0], [0], [1], [0, 0, 1, 1], [], []>} : vector<8x128xbf16>, vector<128x384xbf16>, vector<8x384xf32> -> vector<8x384xf32>
    %70 = vector.extract_strided_slice %67 {offsets = [0, 0], sizes = [8, 256], strides = [1, 1]} : vector<8x384xf32> to vector<8x256xf32>
    %71 = vector.extract_strided_slice %69 {offsets = [0, 0], sizes = [8, 256], strides = [1, 1]} : vector<8x384xf32> to vector<8x256xf32>
    %72 = arith.addf %70, %71 : vector<8x256xf32>
    %73 = arith.negf %72 : vector<8x256xf32>
    %74 = math.exp %73 : vector<8x256xf32>
    %cst_29 = arith.constant 1.000000e+00 : f32
    %75 = vector.broadcast %cst_29 : f32 to vector<8x256xf32>
    %76 = arith.addf %75, %74 : vector<8x256xf32>
    %77 = arith.divf %75, %76 : vector<8x256xf32>
    %78 = vector.extract_strided_slice %77 {offsets = [0, 0], sizes = [8, 128], strides = [1, 1]} : vector<8x256xf32> to vector<8x128xf32>
    %79 = vector.extract_strided_slice %77 {offsets = [0, 128], sizes = [8, 128], strides = [1, 1]} : vector<8x256xf32> to vector<8x128xf32>
    %80 = vector.extract_strided_slice %67 {offsets = [0, 256], sizes = [8, 128], strides = [1, 1]} : vector<8x384xf32> to vector<8x128xf32>
    %81 = vector.extract_strided_slice %69 {offsets = [0, 256], sizes = [8, 128], strides = [1, 1]} : vector<8x384xf32> to vector<8x128xf32>
    %82 = arith.addf %81, %20 : vector<8x128xf32>
    %83 = arith.mulf %78, %82 : vector<8x128xf32>
    %84 = arith.addf %80, %83 : vector<8x128xf32>
    %85 = math.tanh %84 : vector<8x128xf32>
    %86 = arith.subf %65, %85 : vector<8x128xf32>
    %87 = arith.mulf %79, %86 : vector<8x128xf32>
    %88 = arith.addf %85, %87 : vector<8x128xf32>
    %c16_30 = arith.constant 16 : index
    %c0_31 = arith.constant 0 : index
    %89 = vector.load %arg22[%c16_30, %c0_31] : memref<64x128xf32, #tpu.memory_space<vmem>>, vector<8x128xf32>
    tpu.vector_store %arg22[%c16_30, %c0_31], %88 {strides = array<i32>} : memref<64x128xf32, #tpu.memory_space<vmem>>, vector<8x128xf32>,
    %c24 = arith.constant 24 : index
    %c0_32 = arith.constant 0 : index
    %90 = vector.load %arg21[%c24, %c0_32] : memref<64x384xf32, #tpu.memory_space<vmem>>, vector<8x384xf32>
    %91 = arith.truncf %88 : vector<8x128xf32> to vector<8x128xbf16>
    %cst_33 = arith.constant dense<0.000000e+00> : vector<8x384xf32>
    %92 = tpu.matmul %91, %17, %cst_33 {dimension_numbers = #tpu.dot_dimension_numbers<[1], [0], [0], [1], [0, 0, 1, 1], [], []>} : vector<8x128xbf16>, vector<128x384xbf16>, vector<8x384xf32> -> vector<8x384xf32>
    %93 = vector.extract_strided_slice %90 {offsets = [0, 0], sizes = [8, 256], strides = [1, 1]} : vector<8x384xf32> to vector<8x256xf32>
    %94 = vector.extract_strided_slice %92 {offsets = [0, 0], sizes = [8, 256], strides = [1, 1]} : vector<8x384xf32> to vector<8x256xf32>
    %95 = arith.addf %93, %94 : vector<8x256xf32>
    %96 = arith.negf %95 : vector<8x256xf32>
    %97 = math.exp %96 : vector<8x256xf32>
    %cst_34 = arith.constant 1.000000e+00 : f32
    %98 = vector.broadcast %cst_34 : f32 to vector<8x256xf32>
    %99 = arith.addf %98, %97 : vector<8x256xf32>
    %100 = arith.divf %98, %99 : vector<8x256xf32>
    %101 = vector.extract_strided_slice %100 {offsets = [0, 0], sizes = [8, 128], strides = [1, 1]} : vector<8x256xf32> to vector<8x128xf32>
    %102 = vector.extract_strided_slice %100 {offsets = [0, 128], sizes = [8, 128], strides = [1, 1]} : vector<8x256xf32> to vector<8x128xf32>
    %103 = vector.extract_strided_slice %90 {offsets = [0, 256], sizes = [8, 128], strides = [1, 1]} : vector<8x384xf32> to vector<8x128xf32>
    %104 = vector.extract_strided_slice %92 {offsets = [0, 256], sizes = [8, 128], strides = [1, 1]} : vector<8x384xf32> to vector<8x128xf32>
    %105 = arith.addf %104, %20 : vector<8x128xf32>
    %106 = arith.mulf %101, %105 : vector<8x128xf32>
    %107 = arith.addf %103, %106 : vector<8x128xf32>
    %108 = math.tanh %107 : vector<8x128xf32>
    %109 = arith.subf %88, %108 : vector<8x128xf32>
    %110 = arith.mulf %102, %109 : vector<8x128xf32>
    %111 = arith.addf %108, %110 : vector<8x128xf32>
    %c24_35 = arith.constant 24 : index
    %c0_36 = arith.constant 0 : index
    %112 = vector.load %arg22[%c24_35, %c0_36] : memref<64x128xf32, #tpu.memory_space<vmem>>, vector<8x128xf32>
    tpu.vector_store %arg22[%c24_35, %c0_36], %111 {strides = array<i32>} : memref<64x128xf32, #tpu.memory_space<vmem>>, vector<8x128xf32>,
    %c32 = arith.constant 32 : index
    %c0_37 = arith.constant 0 : index
    %113 = vector.load %arg21[%c32, %c0_37] : memref<64x384xf32, #tpu.memory_space<vmem>>, vector<8x384xf32>
    %114 = arith.truncf %111 : vector<8x128xf32> to vector<8x128xbf16>
    %cst_38 = arith.constant dense<0.000000e+00> : vector<8x384xf32>
    %115 = tpu.matmul %114, %17, %cst_38 {dimension_numbers = #tpu.dot_dimension_numbers<[1], [0], [0], [1], [0, 0, 1, 1], [], []>} : vector<8x128xbf16>, vector<128x384xbf16>, vector<8x384xf32> -> vector<8x384xf32>
    %116 = vector.extract_strided_slice %113 {offsets = [0, 0], sizes = [8, 256], strides = [1, 1]} : vector<8x384xf32> to vector<8x256xf32>
    %117 = vector.extract_strided_slice %115 {offsets = [0, 0], sizes = [8, 256], strides = [1, 1]} : vector<8x384xf32> to vector<8x256xf32>
    %118 = arith.addf %116, %117 : vector<8x256xf32>
    %119 = arith.negf %118 : vector<8x256xf32>
    %120 = math.exp %119 : vector<8x256xf32>
    %cst_39 = arith.constant 1.000000e+00 : f32
    %121 = vector.broadcast %cst_39 : f32 to vector<8x256xf32>
    %122 = arith.addf %121, %120 : vector<8x256xf32>
    %123 = arith.divf %121, %122 : vector<8x256xf32>
    %124 = vector.extract_strided_slice %123 {offsets = [0, 0], sizes = [8, 128], strides = [1, 1]} : vector<8x256xf32> to vector<8x128xf32>
    %125 = vector.extract_strided_slice %123 {offsets = [0, 128], sizes = [8, 128], strides = [1, 1]} : vector<8x256xf32> to vector<8x128xf32>
    %126 = vector.extract_strided_slice %113 {offsets = [0, 256], sizes = [8, 128], strides = [1, 1]} : vector<8x384xf32> to vector<8x128xf32>
    %127 = vector.extract_strided_slice %115 {offsets = [0, 256], sizes = [8, 128], strides = [1, 1]} : vector<8x384xf32> to vector<8x128xf32>
    %128 = arith.addf %127, %20 : vector<8x128xf32>
    %129 = arith.mulf %124, %128 : vector<8x128xf32>
    %130 = arith.addf %126, %129 : vector<8x128xf32>
    %131 = math.tanh %130 : vector<8x128xf32>
    %132 = arith.subf %111, %131 : vector<8x128xf32>
    %133 = arith.mulf %125, %132 : vector<8x128xf32>
    %134 = arith.addf %131, %133 : vector<8x128xf32>
    %c32_40 = arith.constant 32 : index
    %c0_41 = arith.constant 0 : index
    %135 = vector.load %arg22[%c32_40, %c0_41] : memref<64x128xf32, #tpu.memory_space<vmem>>, vector<8x128xf32>
    tpu.vector_store %arg22[%c32_40, %c0_41], %134 {strides = array<i32>} : memref<64x128xf32, #tpu.memory_space<vmem>>, vector<8x128xf32>,
    %c40 = arith.constant 40 : index
    %c0_42 = arith.constant 0 : index
    %136 = vector.load %arg21[%c40, %c0_42] : memref<64x384xf32, #tpu.memory_space<vmem>>, vector<8x384xf32>
    %137 = arith.truncf %134 : vector<8x128xf32> to vector<8x128xbf16>
    %cst_43 = arith.constant dense<0.000000e+00> : vector<8x384xf32>
    %138 = tpu.matmul %137, %17, %cst_43 {dimension_numbers = #tpu.dot_dimension_numbers<[1], [0], [0], [1], [0, 0, 1, 1], [], []>} : vector<8x128xbf16>, vector<128x384xbf16>, vector<8x384xf32> -> vector<8x384xf32>
    %139 = vector.extract_strided_slice %136 {offsets = [0, 0], sizes = [8, 256], strides = [1, 1]} : vector<8x384xf32> to vector<8x256xf32>
    %140 = vector.extract_strided_slice %138 {offsets = [0, 0], sizes = [8, 256], strides = [1, 1]} : vector<8x384xf32> to vector<8x256xf32>
    %141 = arith.addf %139, %140 : vector<8x256xf32>
    %142 = arith.negf %141 : vector<8x256xf32>
    %143 = math.exp %142 : vector<8x256xf32>
    %cst_44 = arith.constant 1.000000e+00 : f32
    %144 = vector.broadcast %cst_44 : f32 to vector<8x256xf32>
    %145 = arith.addf %144, %143 : vector<8x256xf32>
    %146 = arith.divf %144, %145 : vector<8x256xf32>
    %147 = vector.extract_strided_slice %146 {offsets = [0, 0], sizes = [8, 128], strides = [1, 1]} : vector<8x256xf32> to vector<8x128xf32>
    %148 = vector.extract_strided_slice %146 {offsets = [0, 128], sizes = [8, 128], strides = [1, 1]} : vector<8x256xf32> to vector<8x128xf32>
    %149 = vector.extract_strided_slice %136 {offsets = [0, 256], sizes = [8, 128], strides = [1, 1]} : vector<8x384xf32> to vector<8x128xf32>
    %150 = vector.extract_strided_slice %138 {offsets = [0, 256], sizes = [8, 128], strides = [1, 1]} : vector<8x384xf32> to vector<8x128xf32>
    %151 = arith.addf %150, %20 : vector<8x128xf32>
    %152 = arith.mulf %147, %151 : vector<8x128xf32>
    %153 = arith.addf %149, %152 : vector<8x128xf32>
    %154 = math.tanh %153 : vector<8x128xf32>
    %155 = arith.subf %134, %154 : vector<8x128xf32>
    %156 = arith.mulf %148, %155 : vector<8x128xf32>
    %157 = arith.addf %154, %156 : vector<8x128xf32>
    %c40_45 = arith.constant 40 : index
    %c0_46 = arith.constant 0 : index
    %158 = vector.load %arg22[%c40_45, %c0_46] : memref<64x128xf32, #tpu.memory_space<vmem>>, vector<8x128xf32>
    tpu.vector_store %arg22[%c40_45, %c0_46], %157 {strides = array<i32>} : memref<64x128xf32, #tpu.memory_space<vmem>>, vector<8x128xf32>,
    %c48 = arith.constant 48 : index
    %c0_47 = arith.constant 0 : index
    %159 = vector.load %arg21[%c48, %c0_47] : memref<64x384xf32, #tpu.memory_space<vmem>>, vector<8x384xf32>
    %160 = arith.truncf %157 : vector<8x128xf32> to vector<8x128xbf16>
    %cst_48 = arith.constant dense<0.000000e+00> : vector<8x384xf32>
    %161 = tpu.matmul %160, %17, %cst_48 {dimension_numbers = #tpu.dot_dimension_numbers<[1], [0], [0], [1], [0, 0, 1, 1], [], []>} : vector<8x128xbf16>, vector<128x384xbf16>, vector<8x384xf32> -> vector<8x384xf32>
    %162 = vector.extract_strided_slice %159 {offsets = [0, 0], sizes = [8, 256], strides = [1, 1]} : vector<8x384xf32> to vector<8x256xf32>
    %163 = vector.extract_strided_slice %161 {offsets = [0, 0], sizes = [8, 256], strides = [1, 1]} : vector<8x384xf32> to vector<8x256xf32>
    %164 = arith.addf %162, %163 : vector<8x256xf32>
    %165 = arith.negf %164 : vector<8x256xf32>
    %166 = math.exp %165 : vector<8x256xf32>
    %cst_49 = arith.constant 1.000000e+00 : f32
    %167 = vector.broadcast %cst_49 : f32 to vector<8x256xf32>
    %168 = arith.addf %167, %166 : vector<8x256xf32>
    %169 = arith.divf %167, %168 : vector<8x256xf32>
    %170 = vector.extract_strided_slice %169 {offsets = [0, 0], sizes = [8, 128], strides = [1, 1]} : vector<8x256xf32> to vector<8x128xf32>
    %171 = vector.extract_strided_slice %169 {offsets = [0, 128], sizes = [8, 128], strides = [1, 1]} : vector<8x256xf32> to vector<8x128xf32>
    %172 = vector.extract_strided_slice %159 {offsets = [0, 256], sizes = [8, 128], strides = [1, 1]} : vector<8x384xf32> to vector<8x128xf32>
    %173 = vector.extract_strided_slice %161 {offsets = [0, 256], sizes = [8, 128], strides = [1, 1]} : vector<8x384xf32> to vector<8x128xf32>
    %174 = arith.addf %173, %20 : vector<8x128xf32>
    %175 = arith.mulf %170, %174 : vector<8x128xf32>
    %176 = arith.addf %172, %175 : vector<8x128xf32>
    %177 = math.tanh %176 : vector<8x128xf32>
    %178 = arith.subf %157, %177 : vector<8x128xf32>
    %179 = arith.mulf %171, %178 : vector<8x128xf32>
    %180 = arith.addf %177, %179 : vector<8x128xf32>
    %c48_50 = arith.constant 48 : index
    %c0_51 = arith.constant 0 : index
    %181 = vector.load %arg22[%c48_50, %c0_51] : memref<64x128xf32, #tpu.memory_space<vmem>>, vector<8x128xf32>
    tpu.vector_store %arg22[%c48_50, %c0_51], %180 {strides = array<i32>} : memref<64x128xf32, #tpu.memory_space<vmem>>, vector<8x128xf32>,
    %c56 = arith.constant 56 : index
    %c0_52 = arith.constant 0 : index
    %182 = vector.load %arg21[%c56, %c0_52] : memref<64x384xf32, #tpu.memory_space<vmem>>, vector<8x384xf32>
    %183 = arith.truncf %180 : vector<8x128xf32> to vector<8x128xbf16>
    %cst_53 = arith.constant dense<0.000000e+00> : vector<8x384xf32>
    %184 = tpu.matmul %183, %17, %cst_53 {dimension_numbers = #tpu.dot_dimension_numbers<[1], [0], [0], [1], [0, 0, 1, 1], [], []>} : vector<8x128xbf16>, vector<128x384xbf16>, vector<8x384xf32> -> vector<8x384xf32>
    %185 = vector.extract_strided_slice %182 {offsets = [0, 0], sizes = [8, 256], strides = [1, 1]} : vector<8x384xf32> to vector<8x256xf32>
    %186 = vector.extract_strided_slice %184 {offsets = [0, 0], sizes = [8, 256], strides = [1, 1]} : vector<8x384xf32> to vector<8x256xf32>
    %187 = arith.addf %185, %186 : vector<8x256xf32>
    %188 = arith.negf %187 : vector<8x256xf32>
    %189 = math.exp %188 : vector<8x256xf32>
    %cst_54 = arith.constant 1.000000e+00 : f32
    %190 = vector.broadcast %cst_54 : f32 to vector<8x256xf32>
    %191 = arith.addf %190, %189 : vector<8x256xf32>
    %192 = arith.divf %190, %191 : vector<8x256xf32>
    %193 = vector.extract_strided_slice %192 {offsets = [0, 0], sizes = [8, 128], strides = [1, 1]} : vector<8x256xf32> to vector<8x128xf32>
    %194 = vector.extract_strided_slice %192 {offsets = [0, 128], sizes = [8, 128], strides = [1, 1]} : vector<8x256xf32> to vector<8x128xf32>
    %195 = vector.extract_strided_slice %182 {offsets = [0, 256], sizes = [8, 128], strides = [1, 1]} : vector<8x384xf32> to vector<8x128xf32>
    %196 = vector.extract_strided_slice %184 {offsets = [0, 256], sizes = [8, 128], strides = [1, 1]} : vector<8x384xf32> to vector<8x128xf32>
    %197 = arith.addf %196, %20 : vector<8x128xf32>
    %198 = arith.mulf %193, %197 : vector<8x128xf32>
    %199 = arith.addf %195, %198 : vector<8x128xf32>
    %200 = math.tanh %199 : vector<8x128xf32>
    %201 = arith.subf %180, %200 : vector<8x128xf32>
    %202 = arith.mulf %194, %201 : vector<8x128xf32>
    %203 = arith.addf %200, %202 : vector<8x128xf32>
    %c56_55 = arith.constant 56 : index
    %c0_56 = arith.constant 0 : index
    %204 = vector.load %arg22[%c56_55, %c0_56] : memref<64x128xf32, #tpu.memory_space<vmem>>, vector<8x128xf32>
    tpu.vector_store %arg22[%c56_55, %c0_56], %203 {strides = array<i32>} : memref<64x128xf32, #tpu.memory_space<vmem>>, vector<8x128xf32>,
    %c0_57 = arith.constant 0 : index
    %c0_58 = arith.constant 0 : index
    %205 = vector.load %arg22[%c0_57, %c0_58] : memref<64x128xf32, #tpu.memory_space<vmem>>, vector<64x128xf32>
    %206 = arith.truncf %205 : vector<64x128xf32> to vector<64x128xbf16>
    %c0_59 = arith.constant 0 : index
    %c0_60 = arith.constant 0 : index
    %207 = vector.load %arg6[%c0_59, %c0_60] : memref<128x384xbf16, #tpu.memory_space<vmem>>, vector<128x384xbf16>
    %cst_61 = arith.constant dense<0.000000e+00> : vector<64x384xf32>
    %208 = tpu.matmul %206, %207, %cst_61 {dimension_numbers = #tpu.dot_dimension_numbers<[1], [0], [0], [1], [0, 0, 1, 1], [], []>} : vector<64x128xbf16>, vector<128x384xbf16>, vector<64x384xf32> -> vector<64x384xf32>
    %209 = vector.extract_strided_slice %205 {offsets = [56, 0], sizes = [8, 128], strides = [1, 1]} : vector<64x128xf32> to vector<8x128xf32>
    %210 = vector.extract_strided_slice %205 {offsets = [48, 0], sizes = [8, 128], strides = [1, 1]} : vector<64x128xf32> to vector<8x128xf32>
    %211 = vector.extract_strided_slice %205 {offsets = [40, 0], sizes = [8, 128], strides = [1, 1]} : vector<64x128xf32> to vector<8x128xf32>
    %212 = vector.extract_strided_slice %205 {offsets = [32, 0], sizes = [8, 128], strides = [1, 1]} : vector<64x128xf32> to vector<8x128xf32>
    %213 = vector.extract_strided_slice %205 {offsets = [24, 0], sizes = [8, 128], strides = [1, 1]} : vector<64x128xf32> to vector<8x128xf32>
    %214 = vector.extract_strided_slice %205 {offsets = [16, 0], sizes = [8, 128], strides = [1, 1]} : vector<64x128xf32> to vector<8x128xf32>
    %215 = vector.extract_strided_slice %205 {offsets = [8, 0], sizes = [8, 128], strides = [1, 1]} : vector<64x128xf32> to vector<8x128xf32>
    %216 = vector.extract_strided_slice %205 {offsets = [0, 0], sizes = [8, 128], strides = [1, 1]} : vector<64x128xf32> to vector<8x128xf32>
    %217 = tpu.concatenate %209, %210, %211, %212, %213, %214, %215, %216 in 0 : vector<8x128xf32>, vector<8x128xf32>, vector<8x128xf32>, vector<8x128xf32>, vector<8x128xf32>, vector<8x128xf32>, vector<8x128xf32>, vector<8x128xf32> -> vector<64x128xf32>
    %218 = arith.truncf %217 : vector<64x128xf32> to vector<64x128xbf16>
    %c0_62 = arith.constant 0 : index
    %c0_63 = arith.constant 0 : index
    %219 = vector.load %arg7[%c0_62, %c0_63] : memref<128x384xbf16, #tpu.memory_space<vmem>>, vector<128x384xbf16>
    %cst_64 = arith.constant dense<0.000000e+00> : vector<64x384xf32>
    %220 = tpu.matmul %218, %219, %cst_64 {dimension_numbers = #tpu.dot_dimension_numbers<[1], [0], [0], [1], [0, 0, 1, 1], [], []>} : vector<64x128xbf16>, vector<128x384xbf16>, vector<64x384xf32> -> vector<64x384xf32>
    %221 = arith.addf %208, %220 : vector<64x384xf32>
    %c0_65 = arith.constant 0 : index
    %c0_66 = arith.constant 0 : index
    %222 = vector.load %arg9[%c0_65, %c0_66] : memref<1x384xf32, #tpu.memory_space<vmem>>, vector<1x384xf32>
    %223 = vector.broadcast %222 : vector<1x384xf32> to vector<64x384xf32>
    %224 = arith.addf %221, %223 : vector<64x384xf32>
    %c0_67 = arith.constant 0 : index
    %c0_68 = arith.constant 0 : index
    %225 = vector.load %arg21[%c0_67, %c0_68] : memref<64x384xf32, #tpu.memory_space<vmem>>, vector<64x384xf32>
    tpu.vector_store %arg21[%c0_67, %c0_68], %224 {strides = array<i32>} : memref<64x384xf32, #tpu.memory_space<vmem>>, vector<64x384xf32>,
    %c1_69 = arith.constant 1 : index
    %c0_70 = arith.constant 0 : index
    %c0_71 = arith.constant 0 : index
    %226 = vector.load %arg1[%c1_69, %c0_70, %c0_71] : memref<2x8x128xf32, #tpu.memory_space<vmem>>, vector<1x8x128xf32>
    %227 = vector.shape_cast %226 : vector<1x8x128xf32> to vector<8x128xf32>
    %c0_72 = arith.constant 0 : index
    %c0_73 = arith.constant 0 : index
    %228 = vector.load %arg8[%c0_72, %c0_73] : memref<128x384xbf16, #tpu.memory_space<vmem>>, vector<128x384xbf16>
    %c0_74 = arith.constant 0 : index
    %c0_75 = arith.constant 0 : index
    %229 = vector.load %arg10[%c0_74, %c0_75] : memref<1x128xf32, #tpu.memory_space<vmem>>, vector<1x128xf32>
    %230 = vector.shape_cast %229 : vector<1x128xf32> to vector<1x128xf32>
    %231 = vector.broadcast %230 : vector<1x128xf32> to vector<8x128xf32>
    %c0_76 = arith.constant 0 : index
    %c0_77 = arith.constant 0 : index
    %232 = vector.load %arg21[%c0_76, %c0_77] : memref<64x384xf32, #tpu.memory_space<vmem>>, vector<8x384xf32>
    %233 = arith.truncf %227 : vector<8x128xf32> to vector<8x128xbf16>
    %cst_78 = arith.constant dense<0.000000e+00> : vector<8x384xf32>
    %234 = tpu.matmul %233, %228, %cst_78 {dimension_numbers = #tpu.dot_dimension_numbers<[1], [0], [0], [1], [0, 0, 1, 1], [], []>} : vector<8x128xbf16>, vector<128x384xbf16>, vector<8x384xf32> -> vector<8x384xf32>
    %235 = vector.extract_strided_slice %232 {offsets = [0, 0], sizes = [8, 256], strides = [1, 1]} : vector<8x384xf32> to vector<8x256xf32>
    %236 = vector.extract_strided_slice %234 {offsets = [0, 0], sizes = [8, 256], strides = [1, 1]} : vector<8x384xf32> to vector<8x256xf32>
    %237 = arith.addf %235, %236 : vector<8x256xf32>
    %238 = arith.negf %237 : vector<8x256xf32>
    %239 = math.exp %238 : vector<8x256xf32>
    %cst_79 = arith.constant 1.000000e+00 : f32
    %240 = vector.broadcast %cst_79 : f32 to vector<8x256xf32>
    %241 = arith.addf %240, %239 : vector<8x256xf32>
    %242 = arith.divf %240, %241 : vector<8x256xf32>
    %243 = vector.extract_strided_slice %242 {offsets = [0, 0], sizes = [8, 128], strides = [1, 1]} : vector<8x256xf32> to vector<8x128xf32>
    %244 = vector.extract_strided_slice %242 {offsets = [0, 128], sizes = [8, 128], strides = [1, 1]} : vector<8x256xf32> to vector<8x128xf32>
    %245 = vector.extract_strided_slice %232 {offsets = [0, 256], sizes = [8, 128], strides = [1, 1]} : vector<8x384xf32> to vector<8x128xf32>
    %246 = vector.extract_strided_slice %234 {offsets = [0, 256], sizes = [8, 128], strides = [1, 1]} : vector<8x384xf32> to vector<8x128xf32>
    %247 = arith.addf %246, %231 : vector<8x128xf32>
    %248 = arith.mulf %243, %247 : vector<8x128xf32>
    %249 = arith.addf %245, %248 : vector<8x128xf32>
    %250 = math.tanh %249 : vector<8x128xf32>
    %251 = arith.subf %227, %250 : vector<8x128xf32>
    %252 = arith.mulf %244, %251 : vector<8x128xf32>
    %253 = arith.addf %250, %252 : vector<8x128xf32>
    %c0_80 = arith.constant 0 : index
    %c0_81 = arith.constant 0 : index
    %254 = vector.load %arg23[%c0_80, %c0_81] : memref<64x128xf32, #tpu.memory_space<vmem>>, vector<8x128xf32>
    tpu.vector_store %arg23[%c0_80, %c0_81], %253 {strides = array<i32>} : memref<64x128xf32, #tpu.memory_space<vmem>>, vector<8x128xf32>,
    %c8_82 = arith.constant 8 : index
    %c0_83 = arith.constant 0 : index
    %255 = vector.load %arg21[%c8_82, %c0_83] : memref<64x384xf32, #tpu.memory_space<vmem>>, vector<8x384xf32>
    %256 = arith.truncf %253 : vector<8x128xf32> to vector<8x128xbf16>
    %cst_84 = arith.constant dense<0.000000e+00> : vector<8x384xf32>
    %257 = tpu.matmul %256, %228, %cst_84 {dimension_numbers = #tpu.dot_dimension_numbers<[1], [0], [0], [1], [0, 0, 1, 1], [], []>} : vector<8x128xbf16>, vector<128x384xbf16>, vector<8x384xf32> -> vector<8x384xf32>
    %258 = vector.extract_strided_slice %255 {offsets = [0, 0], sizes = [8, 256], strides = [1, 1]} : vector<8x384xf32> to vector<8x256xf32>
    %259 = vector.extract_strided_slice %257 {offsets = [0, 0], sizes = [8, 256], strides = [1, 1]} : vector<8x384xf32> to vector<8x256xf32>
    %260 = arith.addf %258, %259 : vector<8x256xf32>
    %261 = arith.negf %260 : vector<8x256xf32>
    %262 = math.exp %261 : vector<8x256xf32>
    %cst_85 = arith.constant 1.000000e+00 : f32
    %263 = vector.broadcast %cst_85 : f32 to vector<8x256xf32>
    %264 = arith.addf %263, %262 : vector<8x256xf32>
    %265 = arith.divf %263, %264 : vector<8x256xf32>
    %266 = vector.extract_strided_slice %265 {offsets = [0, 0], sizes = [8, 128], strides = [1, 1]} : vector<8x256xf32> to vector<8x128xf32>
    %267 = vector.extract_strided_slice %265 {offsets = [0, 128], sizes = [8, 128], strides = [1, 1]} : vector<8x256xf32> to vector<8x128xf32>
    %268 = vector.extract_strided_slice %255 {offsets = [0, 256], sizes = [8, 128], strides = [1, 1]} : vector<8x384xf32> to vector<8x128xf32>
    %269 = vector.extract_strided_slice %257 {offsets = [0, 256], sizes = [8, 128], strides = [1, 1]} : vector<8x384xf32> to vector<8x128xf32>
    %270 = arith.addf %269, %231 : vector<8x128xf32>
    %271 = arith.mulf %266, %270 : vector<8x128xf32>
    %272 = arith.addf %268, %271 : vector<8x128xf32>
    %273 = math.tanh %272 : vector<8x128xf32>
    %274 = arith.subf %253, %273 : vector<8x128xf32>
    %275 = arith.mulf %267, %274 : vector<8x128xf32>
    %276 = arith.addf %273, %275 : vector<8x128xf32>
    %c8_86 = arith.constant 8 : index
    %c0_87 = arith.constant 0 : index
    %277 = vector.load %arg23[%c8_86, %c0_87] : memref<64x128xf32, #tpu.memory_space<vmem>>, vector<8x128xf32>
    tpu.vector_store %arg23[%c8_86, %c0_87], %276 {strides = array<i32>} : memref<64x128xf32, #tpu.memory_space<vmem>>, vector<8x128xf32>,
    %c16_88 = arith.constant 16 : index
    %c0_89 = arith.constant 0 : index
    %278 = vector.load %arg21[%c16_88, %c0_89] : memref<64x384xf32, #tpu.memory_space<vmem>>, vector<8x384xf32>
    %279 = arith.truncf %276 : vector<8x128xf32> to vector<8x128xbf16>
    %cst_90 = arith.constant dense<0.000000e+00> : vector<8x384xf32>
    %280 = tpu.matmul %279, %228, %cst_90 {dimension_numbers = #tpu.dot_dimension_numbers<[1], [0], [0], [1], [0, 0, 1, 1], [], []>} : vector<8x128xbf16>, vector<128x384xbf16>, vector<8x384xf32> -> vector<8x384xf32>
    %281 = vector.extract_strided_slice %278 {offsets = [0, 0], sizes = [8, 256], strides = [1, 1]} : vector<8x384xf32> to vector<8x256xf32>
    %282 = vector.extract_strided_slice %280 {offsets = [0, 0], sizes = [8, 256], strides = [1, 1]} : vector<8x384xf32> to vector<8x256xf32>
    %283 = arith.addf %281, %282 : vector<8x256xf32>
    %284 = arith.negf %283 : vector<8x256xf32>
    %285 = math.exp %284 : vector<8x256xf32>
    %cst_91 = arith.constant 1.000000e+00 : f32
    %286 = vector.broadcast %cst_91 : f32 to vector<8x256xf32>
    %287 = arith.addf %286, %285 : vector<8x256xf32>
    %288 = arith.divf %286, %287 : vector<8x256xf32>
    %289 = vector.extract_strided_slice %288 {offsets = [0, 0], sizes = [8, 128], strides = [1, 1]} : vector<8x256xf32> to vector<8x128xf32>
    %290 = vector.extract_strided_slice %288 {offsets = [0, 128], sizes = [8, 128], strides = [1, 1]} : vector<8x256xf32> to vector<8x128xf32>
    %291 = vector.extract_strided_slice %278 {offsets = [0, 256], sizes = [8, 128], strides = [1, 1]} : vector<8x384xf32> to vector<8x128xf32>
    %292 = vector.extract_strided_slice %280 {offsets = [0, 256], sizes = [8, 128], strides = [1, 1]} : vector<8x384xf32> to vector<8x128xf32>
    %293 = arith.addf %292, %231 : vector<8x128xf32>
    %294 = arith.mulf %289, %293 : vector<8x128xf32>
    %295 = arith.addf %291, %294 : vector<8x128xf32>
    %296 = math.tanh %295 : vector<8x128xf32>
    %297 = arith.subf %276, %296 : vector<8x128xf32>
    %298 = arith.mulf %290, %297 : vector<8x128xf32>
    %299 = arith.addf %296, %298 : vector<8x128xf32>
    %c16_92 = arith.constant 16 : index
    %c0_93 = arith.constant 0 : index
    %300 = vector.load %arg23[%c16_92, %c0_93] : memref<64x128xf32, #tpu.memory_space<vmem>>, vector<8x128xf32>
    tpu.vector_store %arg23[%c16_92, %c0_93], %299 {strides = array<i32>} : memref<64x128xf32, #tpu.memory_space<vmem>>, vector<8x128xf32>,
    %c24_94 = arith.constant 24 : index
    %c0_95 = arith.constant 0 : index
    %301 = vector.load %arg21[%c24_94, %c0_95] : memref<64x384xf32, #tpu.memory_space<vmem>>, vector<8x384xf32>
    %302 = arith.truncf %299 : vector<8x128xf32> to vector<8x128xbf16>
    %cst_96 = arith.constant dense<0.000000e+00> : vector<8x384xf32>
    %303 = tpu.matmul %302, %228, %cst_96 {dimension_numbers = #tpu.dot_dimension_numbers<[1], [0], [0], [1], [0, 0, 1, 1], [], []>} : vector<8x128xbf16>, vector<128x384xbf16>, vector<8x384xf32> -> vector<8x384xf32>
    %304 = vector.extract_strided_slice %301 {offsets = [0, 0], sizes = [8, 256], strides = [1, 1]} : vector<8x384xf32> to vector<8x256xf32>
    %305 = vector.extract_strided_slice %303 {offsets = [0, 0], sizes = [8, 256], strides = [1, 1]} : vector<8x384xf32> to vector<8x256xf32>
    %306 = arith.addf %304, %305 : vector<8x256xf32>
    %307 = arith.negf %306 : vector<8x256xf32>
    %308 = math.exp %307 : vector<8x256xf32>
    %cst_97 = arith.constant 1.000000e+00 : f32
    %309 = vector.broadcast %cst_97 : f32 to vector<8x256xf32>
    %310 = arith.addf %309, %308 : vector<8x256xf32>
    %311 = arith.divf %309, %310 : vector<8x256xf32>
    %312 = vector.extract_strided_slice %311 {offsets = [0, 0], sizes = [8, 128], strides = [1, 1]} : vector<8x256xf32> to vector<8x128xf32>
    %313 = vector.extract_strided_slice %311 {offsets = [0, 128], sizes = [8, 128], strides = [1, 1]} : vector<8x256xf32> to vector<8x128xf32>
    %314 = vector.extract_strided_slice %301 {offsets = [0, 256], sizes = [8, 128], strides = [1, 1]} : vector<8x384xf32> to vector<8x128xf32>
    %315 = vector.extract_strided_slice %303 {offsets = [0, 256], sizes = [8, 128], strides = [1, 1]} : vector<8x384xf32> to vector<8x128xf32>
    %316 = arith.addf %315, %231 : vector<8x128xf32>
    %317 = arith.mulf %312, %316 : vector<8x128xf32>
    %318 = arith.addf %314, %317 : vector<8x128xf32>
    %319 = math.tanh %318 : vector<8x128xf32>
    %320 = arith.subf %299, %319 : vector<8x128xf32>
    %321 = arith.mulf %313, %320 : vector<8x128xf32>
    %322 = arith.addf %319, %321 : vector<8x128xf32>
    %c24_98 = arith.constant 24 : index
    %c0_99 = arith.constant 0 : index
    %323 = vector.load %arg23[%c24_98, %c0_99] : memref<64x128xf32, #tpu.memory_space<vmem>>, vector<8x128xf32>
    tpu.vector_store %arg23[%c24_98, %c0_99], %322 {strides = array<i32>} : memref<64x128xf32, #tpu.memory_space<vmem>>, vector<8x128xf32>,
    %c32_100 = arith.constant 32 : index
    %c0_101 = arith.constant 0 : index
    %324 = vector.load %arg21[%c32_100, %c0_101] : memref<64x384xf32, #tpu.memory_space<vmem>>, vector<8x384xf32>
    %325 = arith.truncf %322 : vector<8x128xf32> to vector<8x128xbf16>
    %cst_102 = arith.constant dense<0.000000e+00> : vector<8x384xf32>
    %326 = tpu.matmul %325, %228, %cst_102 {dimension_numbers = #tpu.dot_dimension_numbers<[1], [0], [0], [1], [0, 0, 1, 1], [], []>} : vector<8x128xbf16>, vector<128x384xbf16>, vector<8x384xf32> -> vector<8x384xf32>
    %327 = vector.extract_strided_slice %324 {offsets = [0, 0], sizes = [8, 256], strides = [1, 1]} : vector<8x384xf32> to vector<8x256xf32>
    %328 = vector.extract_strided_slice %326 {offsets = [0, 0], sizes = [8, 256], strides = [1, 1]} : vector<8x384xf32> to vector<8x256xf32>
    %329 = arith.addf %327, %328 : vector<8x256xf32>
    %330 = arith.negf %329 : vector<8x256xf32>
    %331 = math.exp %330 : vector<8x256xf32>
    %cst_103 = arith.constant 1.000000e+00 : f32
    %332 = vector.broadcast %cst_103 : f32 to vector<8x256xf32>
    %333 = arith.addf %332, %331 : vector<8x256xf32>
    %334 = arith.divf %332, %333 : vector<8x256xf32>
    %335 = vector.extract_strided_slice %334 {offsets = [0, 0], sizes = [8, 128], strides = [1, 1]} : vector<8x256xf32> to vector<8x128xf32>
    %336 = vector.extract_strided_slice %334 {offsets = [0, 128], sizes = [8, 128], strides = [1, 1]} : vector<8x256xf32> to vector<8x128xf32>
    %337 = vector.extract_strided_slice %324 {offsets = [0, 256], sizes = [8, 128], strides = [1, 1]} : vector<8x384xf32> to vector<8x128xf32>
    %338 = vector.extract_strided_slice %326 {offsets = [0, 256], sizes = [8, 128], strides = [1, 1]} : vector<8x384xf32> to vector<8x128xf32>
    %339 = arith.addf %338, %231 : vector<8x128xf32>
    %340 = arith.mulf %335, %339 : vector<8x128xf32>
    %341 = arith.addf %337, %340 : vector<8x128xf32>
    %342 = math.tanh %341 : vector<8x128xf32>
    %343 = arith.subf %322, %342 : vector<8x128xf32>
    %344 = arith.mulf %336, %343 : vector<8x128xf32>
    %345 = arith.addf %342, %344 : vector<8x128xf32>
    %c32_104 = arith.constant 32 : index
    %c0_105 = arith.constant 0 : index
    %346 = vector.load %arg23[%c32_104, %c0_105] : memref<64x128xf32, #tpu.memory_space<vmem>>, vector<8x128xf32>
    tpu.vector_store %arg23[%c32_104, %c0_105], %345 {strides = array<i32>} : memref<64x128xf32, #tpu.memory_space<vmem>>, vector<8x128xf32>,
    %c40_106 = arith.constant 40 : index
    %c0_107 = arith.constant 0 : index
    %347 = vector.load %arg21[%c40_106, %c0_107] : memref<64x384xf32, #tpu.memory_space<vmem>>, vector<8x384xf32>
    %348 = arith.truncf %345 : vector<8x128xf32> to vector<8x128xbf16>
    %cst_108 = arith.constant dense<0.000000e+00> : vector<8x384xf32>
    %349 = tpu.matmul %348, %228, %cst_108 {dimension_numbers = #tpu.dot_dimension_numbers<[1], [0], [0], [1], [0, 0, 1, 1], [], []>} : vector<8x128xbf16>, vector<128x384xbf16>, vector<8x384xf32> -> vector<8x384xf32>
    %350 = vector.extract_strided_slice %347 {offsets = [0, 0], sizes = [8, 256], strides = [1, 1]} : vector<8x384xf32> to vector<8x256xf32>
    %351 = vector.extract_strided_slice %349 {offsets = [0, 0], sizes = [8, 256], strides = [1, 1]} : vector<8x384xf32> to vector<8x256xf32>
    %352 = arith.addf %350, %351 : vector<8x256xf32>
    %353 = arith.negf %352 : vector<8x256xf32>
    %354 = math.exp %353 : vector<8x256xf32>
    %cst_109 = arith.constant 1.000000e+00 : f32
    %355 = vector.broadcast %cst_109 : f32 to vector<8x256xf32>
    %356 = arith.addf %355, %354 : vector<8x256xf32>
    %357 = arith.divf %355, %356 : vector<8x256xf32>
    %358 = vector.extract_strided_slice %357 {offsets = [0, 0], sizes = [8, 128], strides = [1, 1]} : vector<8x256xf32> to vector<8x128xf32>
    %359 = vector.extract_strided_slice %357 {offsets = [0, 128], sizes = [8, 128], strides = [1, 1]} : vector<8x256xf32> to vector<8x128xf32>
    %360 = vector.extract_strided_slice %347 {offsets = [0, 256], sizes = [8, 128], strides = [1, 1]} : vector<8x384xf32> to vector<8x128xf32>
    %361 = vector.extract_strided_slice %349 {offsets = [0, 256], sizes = [8, 128], strides = [1, 1]} : vector<8x384xf32> to vector<8x128xf32>
    %362 = arith.addf %361, %231 : vector<8x128xf32>
    %363 = arith.mulf %358, %362 : vector<8x128xf32>
    %364 = arith.addf %360, %363 : vector<8x128xf32>
    %365 = math.tanh %364 : vector<8x128xf32>
    %366 = arith.subf %345, %365 : vector<8x128xf32>
    %367 = arith.mulf %359, %366 : vector<8x128xf32>
    %368 = arith.addf %365, %367 : vector<8x128xf32>
    %c40_110 = arith.constant 40 : index
    %c0_111 = arith.constant 0 : index
    %369 = vector.load %arg23[%c40_110, %c0_111] : memref<64x128xf32, #tpu.memory_space<vmem>>, vector<8x128xf32>
    tpu.vector_store %arg23[%c40_110, %c0_111], %368 {strides = array<i32>} : memref<64x128xf32, #tpu.memory_space<vmem>>, vector<8x128xf32>,
    %c48_112 = arith.constant 48 : index
    %c0_113 = arith.constant 0 : index
    %370 = vector.load %arg21[%c48_112, %c0_113] : memref<64x384xf32, #tpu.memory_space<vmem>>, vector<8x384xf32>
    %371 = arith.truncf %368 : vector<8x128xf32> to vector<8x128xbf16>
    %cst_114 = arith.constant dense<0.000000e+00> : vector<8x384xf32>
    %372 = tpu.matmul %371, %228, %cst_114 {dimension_numbers = #tpu.dot_dimension_numbers<[1], [0], [0], [1], [0, 0, 1, 1], [], []>} : vector<8x128xbf16>, vector<128x384xbf16>, vector<8x384xf32> -> vector<8x384xf32>
    %373 = vector.extract_strided_slice %370 {offsets = [0, 0], sizes = [8, 256], strides = [1, 1]} : vector<8x384xf32> to vector<8x256xf32>
    %374 = vector.extract_strided_slice %372 {offsets = [0, 0], sizes = [8, 256], strides = [1, 1]} : vector<8x384xf32> to vector<8x256xf32>
    %375 = arith.addf %373, %374 : vector<8x256xf32>
    %376 = arith.negf %375 : vector<8x256xf32>
    %377 = math.exp %376 : vector<8x256xf32>
    %cst_115 = arith.constant 1.000000e+00 : f32
    %378 = vector.broadcast %cst_115 : f32 to vector<8x256xf32>
    %379 = arith.addf %378, %377 : vector<8x256xf32>
    %380 = arith.divf %378, %379 : vector<8x256xf32>
    %381 = vector.extract_strided_slice %380 {offsets = [0, 0], sizes = [8, 128], strides = [1, 1]} : vector<8x256xf32> to vector<8x128xf32>
    %382 = vector.extract_strided_slice %380 {offsets = [0, 128], sizes = [8, 128], strides = [1, 1]} : vector<8x256xf32> to vector<8x128xf32>
    %383 = vector.extract_strided_slice %370 {offsets = [0, 256], sizes = [8, 128], strides = [1, 1]} : vector<8x384xf32> to vector<8x128xf32>
    %384 = vector.extract_strided_slice %372 {offsets = [0, 256], sizes = [8, 128], strides = [1, 1]} : vector<8x384xf32> to vector<8x128xf32>
    %385 = arith.addf %384, %231 : vector<8x128xf32>
    %386 = arith.mulf %381, %385 : vector<8x128xf32>
    %387 = arith.addf %383, %386 : vector<8x128xf32>
    %388 = math.tanh %387 : vector<8x128xf32>
    %389 = arith.subf %368, %388 : vector<8x128xf32>
    %390 = arith.mulf %382, %389 : vector<8x128xf32>
    %391 = arith.addf %388, %390 : vector<8x128xf32>
    %c48_116 = arith.constant 48 : index
    %c0_117 = arith.constant 0 : index
    %392 = vector.load %arg23[%c48_116, %c0_117] : memref<64x128xf32, #tpu.memory_space<vmem>>, vector<8x128xf32>
    tpu.vector_store %arg23[%c48_116, %c0_117], %391 {strides = array<i32>} : memref<64x128xf32, #tpu.memory_space<vmem>>, vector<8x128xf32>,
    %c56_118 = arith.constant 56 : index
    %c0_119 = arith.constant 0 : index
    %393 = vector.load %arg21[%c56_118, %c0_119] : memref<64x384xf32, #tpu.memory_space<vmem>>, vector<8x384xf32>
    %394 = arith.truncf %391 : vector<8x128xf32> to vector<8x128xbf16>
    %cst_120 = arith.constant dense<0.000000e+00> : vector<8x384xf32>
    %395 = tpu.matmul %394, %228, %cst_120 {dimension_numbers = #tpu.dot_dimension_numbers<[1], [0], [0], [1], [0, 0, 1, 1], [], []>} : vector<8x128xbf16>, vector<128x384xbf16>, vector<8x384xf32> -> vector<8x384xf32>
    %396 = vector.extract_strided_slice %393 {offsets = [0, 0], sizes = [8, 256], strides = [1, 1]} : vector<8x384xf32> to vector<8x256xf32>
    %397 = vector.extract_strided_slice %395 {offsets = [0, 0], sizes = [8, 256], strides = [1, 1]} : vector<8x384xf32> to vector<8x256xf32>
    %398 = arith.addf %396, %397 : vector<8x256xf32>
    %399 = arith.negf %398 : vector<8x256xf32>
    %400 = math.exp %399 : vector<8x256xf32>
    %cst_121 = arith.constant 1.000000e+00 : f32
    %401 = vector.broadcast %cst_121 : f32 to vector<8x256xf32>
    %402 = arith.addf %401, %400 : vector<8x256xf32>
    %403 = arith.divf %401, %402 : vector<8x256xf32>
    %404 = vector.extract_strided_slice %403 {offsets = [0, 0], sizes = [8, 128], strides = [1, 1]} : vector<8x256xf32> to vector<8x128xf32>
    %405 = vector.extract_strided_slice %403 {offsets = [0, 128], sizes = [8, 128], strides = [1, 1]} : vector<8x256xf32> to vector<8x128xf32>
    %406 = vector.extract_strided_slice %393 {offsets = [0, 256], sizes = [8, 128], strides = [1, 1]} : vector<8x384xf32> to vector<8x128xf32>
    %407 = vector.extract_strided_slice %395 {offsets = [0, 256], sizes = [8, 128], strides = [1, 1]} : vector<8x384xf32> to vector<8x128xf32>
    %408 = arith.addf %407, %231 : vector<8x128xf32>
    %409 = arith.mulf %404, %408 : vector<8x128xf32>
    %410 = arith.addf %406, %409 : vector<8x128xf32>
    %411 = math.tanh %410 : vector<8x128xf32>
    %412 = arith.subf %391, %411 : vector<8x128xf32>
    %413 = arith.mulf %405, %412 : vector<8x128xf32>
    %414 = arith.addf %411, %413 : vector<8x128xf32>
    %c56_122 = arith.constant 56 : index
    %c0_123 = arith.constant 0 : index
    %415 = vector.load %arg23[%c56_122, %c0_123] : memref<64x128xf32, #tpu.memory_space<vmem>>, vector<8x128xf32>
    tpu.vector_store %arg23[%c56_122, %c0_123], %414 {strides = array<i32>} : memref<64x128xf32, #tpu.memory_space<vmem>>, vector<8x128xf32>,
    %416 = vector.extract_strided_slice %203 {offsets = [0, 0], sizes = [8, 64], strides = [1, 1]} : vector<8x128xf32> to vector<8x64xf32>
    %417 = vector.extract_strided_slice %414 {offsets = [0, 0], sizes = [8, 64], strides = [1, 1]} : vector<8x128xf32> to vector<8x64xf32>
    %418 = tpu.concatenate %416, %417 in 1 : vector<8x64xf32>, vector<8x64xf32> -> vector<8x128xf32>
    %c0_124 = arith.constant 0 : index
    %c0_125 = arith.constant 0 : index
    %419 = vector.load %arg20[%c0_124, %c0_125] : memref<8x128xf32, #tpu.memory_space<vmem>>, vector<8x128xf32>
    tpu.vector_store %arg20[%c0_124, %c0_125], %418 {strides = array<i32>} : memref<8x128xf32, #tpu.memory_space<vmem>>, vector<8x128xf32>,
    %c0_126 = arith.constant 0 : index
    %c0_127 = arith.constant 0 : index
    %420 = vector.load %arg23[%c0_126, %c0_127] : memref<64x128xf32, #tpu.memory_space<vmem>>, vector<64x128xf32>
    %421 = arith.truncf %420 : vector<64x128xf32> to vector<64x128xbf16>
    %c0_128 = arith.constant 0 : index
    %c0_129 = arith.constant 0 : index
    %422 = vector.load %arg11[%c0_128, %c0_129] : memref<128x128xbf16, #tpu.memory_space<vmem>>, vector<128x128xbf16>
    %cst_130 = arith.constant dense<0.000000e+00> : vector<64x128xf32>
    %423 = tpu.matmul %421, %422, %cst_130 {dimension_numbers = #tpu.dot_dimension_numbers<[1], [0], [0], [1], [0, 0, 1, 1], [], []>} : vector<64x128xbf16>, vector<128x128xbf16>, vector<64x128xf32> -> vector<64x128xf32>
    %424 = vector.extract_strided_slice %420 {offsets = [56, 0], sizes = [8, 128], strides = [1, 1]} : vector<64x128xf32> to vector<8x128xf32>
    %425 = vector.extract_strided_slice %420 {offsets = [48, 0], sizes = [8, 128], strides = [1, 1]} : vector<64x128xf32> to vector<8x128xf32>
    %426 = vector.extract_strided_slice %420 {offsets = [40, 0], sizes = [8, 128], strides = [1, 1]} : vector<64x128xf32> to vector<8x128xf32>
    %427 = vector.extract_strided_slice %420 {offsets = [32, 0], sizes = [8, 128], strides = [1, 1]} : vector<64x128xf32> to vector<8x128xf32>
    %428 = vector.extract_strided_slice %420 {offsets = [24, 0], sizes = [8, 128], strides = [1, 1]} : vector<64x128xf32> to vector<8x128xf32>
    %429 = vector.extract_strided_slice %420 {offsets = [16, 0], sizes = [8, 128], strides = [1, 1]} : vector<64x128xf32> to vector<8x128xf32>
    %430 = vector.extract_strided_slice %420 {offsets = [8, 0], sizes = [8, 128], strides = [1, 1]} : vector<64x128xf32> to vector<8x128xf32>
    %431 = vector.extract_strided_slice %420 {offsets = [0, 0], sizes = [8, 128], strides = [1, 1]} : vector<64x128xf32> to vector<8x128xf32>
    %432 = tpu.concatenate %424, %425, %426, %427, %428, %429, %430, %431 in 0 : vector<8x128xf32>, vector<8x128xf32>, vector<8x128xf32>, vector<8x128xf32>, vector<8x128xf32>, vector<8x128xf32>, vector<8x128xf32>, vector<8x128xf32> -> vector<64x128xf32>
    %433 = arith.truncf %432 : vector<64x128xf32> to vector<64x128xbf16>
    %c0_131 = arith.constant 0 : index
    %c0_132 = arith.constant 0 : index
    %434 = vector.load %arg12[%c0_131, %c0_132] : memref<128x128xbf16, #tpu.memory_space<vmem>>, vector<128x128xbf16>
    %cst_133 = arith.constant dense<0.000000e+00> : vector<64x128xf32>
    %435 = tpu.matmul %433, %434, %cst_133 {dimension_numbers = #tpu.dot_dimension_numbers<[1], [0], [0], [1], [0, 0, 1, 1], [], []>} : vector<64x128xbf16>, vector<128x128xbf16>, vector<64x128xf32> -> vector<64x128xf32>
    %436 = arith.addf %423, %435 : vector<64x128xf32>
    %c0_134 = arith.constant 0 : index
    %c0_135 = arith.constant 0 : index
    %437 = vector.load %arg13[%c0_134, %c0_135] : memref<1x128xf32, #tpu.memory_space<vmem>>, vector<1x128xf32>
    %438 = vector.broadcast %437 : vector<1x128xf32> to vector<64x128xf32>
    %439 = arith.addf %436, %438 : vector<64x128xf32>
    %cst_136 = arith.constant 0.000000e+00 : f32
    %440 = vector.broadcast %cst_136 : f32 to vector<64x128xf32>
    %441 = arith.maximumf %439, %440 : vector<64x128xf32>
    %c0_137 = arith.constant 0 : index
    %c0_138 = arith.constant 0 : index
    %442 = vector.load %arg14[%c0_137, %c0_138] : memref<1x128xf32, #tpu.memory_space<vmem>>, vector<1x128xf32>
    %443 = vector.broadcast %442 : vector<1x128xf32> to vector<64x128xf32>
    %444 = arith.mulf %441, %443 : vector<64x128xf32>
    %cst_139 = arith.constant dense<0.000000e+00> : vector<64xf32>
    %445 = vector.multi_reduction <add>, %444, %cst_139 [1] : vector<64x128xf32> to vector<64xf32>
    %446 = vector.shape_cast %445 : vector<64xf32> to vector<64x1xf32>
    %c0_140 = arith.constant 0 : index
    %c0_141 = arith.constant 0 : index
    %447 = vector.load %arg15[%c0_140, %c0_141] : memref<1x1xf32, #tpu.memory_space<vmem>>, vector<1x1xf32>
    %448 = vector.broadcast %447 : vector<1x1xf32> to vector<64x1xf32>
    %449 = arith.addf %446, %448 : vector<64x1xf32>
    %cst_142 = arith.constant 0.000000e+00 : f32
    %450 = vector.broadcast %cst_142 : f32 to vector<64x1xf32>
    %451 = arith.maximumf %449, %450 : vector<64x1xf32>
    %452 = arith.addf %0, %451 : vector<64x1xf32>
    %c0_143 = arith.constant 0 : index
    %c0_144 = arith.constant 0 : index
    %453 = vector.load %arg17[%c0_143, %c0_144] : memref<8x64xf32, #tpu.memory_space<vmem>>, vector<8x64xf32>
    %c0_145 = arith.constant 0 : index
    %c0_146 = arith.constant 0 : index
    %454 = vector.load %arg16[%c0_145, %c0_146] : memref<64x128xf32, #tpu.memory_space<vmem>>, vector<64x128xf32>
    %455 = vector.broadcast %452 : vector<64x1xf32> to vector<64x128xf32>
    %456 = arith.mulf %455, %454 : vector<64x128xf32>
    %cst_147 = arith.constant dense<0.000000e+00> : vector<8x128xf32>
    %457 = tpu.matmul %453, %456, %cst_147 {dimension_numbers = #tpu.dot_dimension_numbers<[1], [0], [0], [1], [0, 0, 1, 1], [], []>} : vector<8x64xf32>, vector<64x128xf32>, vector<8x128xf32> -> vector<8x128xf32>
    %c0_148 = arith.constant 0 : index
    %c0_149 = arith.constant 0 : index
    %458 = vector.load %arg18[%c0_148, %c0_149] : memref<1x128xf32, #tpu.memory_space<vmem>>, vector<1x128xf32>
    %459 = vector.broadcast %458 : vector<1x128xf32> to vector<8x128xf32>
    %460 = arith.addf %457, %459 : vector<8x128xf32>
    %461 = arith.negf %460 : vector<8x128xf32>
    %462 = math.exp %461 : vector<8x128xf32>
    %cst_150 = arith.constant 1.000000e+00 : f32
    %463 = vector.broadcast %cst_150 : f32 to vector<8x128xf32>
    %464 = arith.addf %463, %462 : vector<8x128xf32>
    %465 = arith.divf %463, %464 : vector<8x128xf32>
    %c0_151 = arith.constant 0 : index
    %c0_152 = arith.constant 0 : index
    %466 = vector.load %arg19[%c0_151, %c0_152] : memref<8x128xf32, #tpu.memory_space<vmem>>, vector<8x128xf32>
    tpu.vector_store %arg19[%c0_151, %c0_152], %465 {strides = array<i32>} : memref<8x128xf32, #tpu.memory_space<vmem>>, vector<8x128xf32>,
    return
  }
}

</mosaic_0001>

<llo_original>
// kernel: tpu_custom_call.1
$region0: #{tpu_custom_call.1}
  #allocation0 [shape = 'u32[]', space=smem, size = 0x4, offset = 0x4, fixed_abs, tag = 'smem constant byte address 0x4 - core index']
  #allocation1 [shape = 'u32[144,128]{1,0:T(1,128)}', space=vmem, size = 0x12000, scoped, tag = 'internal scratch']
  #allocation2 [shape = 'f32[64,384]{1,0:T(8,128)}', space=vmem, size = 0x18000, scoped, tag = 'scratch operand']
  #allocation3 [shape = 'f32[64,128]{1,0:T(8,128)}', space=vmem, size = 0x8000, scoped, tag = 'scratch operand']
  #allocation4 [shape = 'f32[64,128]{1,0:T(8,128)}', space=vmem, size = 0x8000, scoped, tag = 'scratch operand']
  #allocation5 [shape = 'f32[1,1]{1,0:T(1,128)S(1)}', space=vmem, size = 0x200, scoped, tag = 'scoped memory for tpu_custom_call.1']
  %s0 = inlined_call_operand.vmem [shape: f32[64,2], index: 0, kind: input, shape index: {}]
  %s1 = inlined_call_operand.vmem [shape: f32[2,8,128], index: 1, kind: input, shape index: {}]
  %s2 = inlined_call_operand.hbm [shape: f32[2,384], index: 2, kind: input, shape index: {}]
  %s3 = inlined_call_operand.hbm [shape: bf16[128,384], index: 3, kind: input, shape index: {}]
  %s4 = inlined_call_operand.hbm [shape: f32[1,384], index: 4, kind: input, shape index: {}]
  %s5 = inlined_call_operand.hbm [shape: f32[1,128], index: 5, kind: input, shape index: {}]
  %s6 = inlined_call_operand.hbm [shape: bf16[128,384], index: 6, kind: input, shape index: {}]
  %s7 = inlined_call_operand.hbm [shape: bf16[128,384], index: 7, kind: input, shape index: {}]
  %s8 = inlined_call_operand.hbm [shape: bf16[128,384], index: 8, kind: input, shape index: {}]
  %s9 = inlined_call_operand.hbm [shape: f32[1,384], index: 9, kind: input, shape index: {}]
  %s10 = inlined_call_operand.hbm [shape: f32[1,128], index: 10, kind: input, shape index: {}]
  %s11 = inlined_call_operand.vmem [shape: bf16[128,128], index: 11, kind: input, shape index: {}]
  %s12 = inlined_call_operand.hbm [shape: bf16[128,128], index: 12, kind: input, shape index: {}]
  %s13 = inlined_call_operand.vmem [shape: f32[1,128], index: 13, kind: input, shape index: {}]
  %s14 = inlined_call_operand.vmem [shape: f32[1,128], index: 14, kind: input, shape index: {}]
  %s15 = inlined_call_operand.<no memory space> [shape: f32[1,1], index: 15, kind: input, shape index: {}]
  %s16 = inlined_call_operand.hbm [shape: f32[64,128], index: 16, kind: input, shape index: {}]
  %s17 = inlined_call_operand.vmem [shape: f32[8,64], index: 17, kind: input, shape index: {}]
  %s18 = inlined_call_operand.vmem [shape: f32[1,128], index: 18, kind: input, shape index: {}]
  %s19 = inlined_call_operand.hbm [shape: f32[8,128], index: 19, kind: output, shape index: {0}]
  %s20 = inlined_call_operand.hbm [shape: f32[8,128], index: 20, kind: output, shape index: {1}]
  %21 = xla_tuple %s19, %s20
  %s22 = sld [smem:[#allocation0]]
  $region138: #{tpu_custom_call.1} parent=0
    _
  %s24 = ssub.s32 1, %s22
  %s25 = scalar_select 0, %s24, %s22
  %v26 = vstv %s15
  %27 = vst [vmem:[#allocation5] sm:$0x1] %v26
  $region1: #{tpu_custom_call.1} parent=0
    #allocation6 [shape = 'u8[3072]{0}', space=vmem, size = 0xc00, scoped, tag = 'input window, operand 2, single buffered']
    #allocation7 [shape = 's32[1]{0}', space=sflag, size = 0x4, scoped, tag = 'scoped memory for tpu_custom_call.1']
    #allocation8 [shape = 's32[1]{0}', space=sflag, size = 0x4, scoped, tag = 'scoped memory for tpu_custom_call.1']
    #allocation9 [shape = 'u8[98304]{0}', space=vmem, size = 0x18000, scoped, tag = 'input window, operand 3, single buffered']
    #allocation10 [shape = 's32[1]{0}', space=sflag, size = 0x4, scoped, tag = 'scoped memory for tpu_custom_call.1']
    #allocation11 [shape = 'u8[1536]{0}', space=vmem, size = 0x800, scoped, tag = 'input window, operand 4, single buffered']
    #allocation12 [shape = 'u8[512]{0}', space=vmem, size = 0x400, scoped, tag = 'input window, operand 5, single buffered']
    #allocation13 [shape = 's32[1]{0}', space=sflag, size = 0x4, scoped, tag = 'scoped memory for tpu_custom_call.1']
    #allocation14 [shape = 'u8[98304]{0}', space=vmem, size = 0x18000, scoped, tag = 'input window, operand 6, single buffered']
    #allocation15 [shape = 'u8[98304]{0}', space=vmem, size = 0x18000, scoped, tag = 'input window, operand 7, single buffered']
    #allocation16 [shape = 's32[1]{0}', space=sflag, size = 0x4, scoped, tag = 'scoped memory for tpu_custom_call.1']
    #allocation17 [shape = 'u8[98304]{0}', space=vmem, size = 0x18000, scoped, tag = 'input window, operand 8, single buffered']
    #allocation18 [shape = 'u8[1536]{0}', space=vmem, size = 0x800, scoped, tag = 'input window, operand 9, single buffered']
    #allocation19 [shape = 's32[1]{0}', space=sflag, size = 0x4, scoped, tag = 'scoped memory for tpu_custom_call.1']
    #allocation20 [shape = 'u8[512]{0}', space=vmem, size = 0x400, scoped, tag = 'input window, operand 10, single buffered']
    #allocation21 [shape = 'u8[32768]{0}', space=vmem, size = 0x8000, scoped, tag = 'input window, operand 12, single buffered']
    #allocation22 [shape = 's32[1]{0}', space=sflag, size = 0x4, scoped, tag = 'scoped memory for tpu_custom_call.1']
    #allocation23 [shape = 'u8[32768]{0}', space=vmem, size = 0x8000, scoped, tag = 'input window, operand 16, single buffered']
    #allocation24 [shape = 'u8[4096]{0}', space=vmem, size = 0x1000, scoped, tag = 'output window, operand 0, single buffered']
    #allocation25 [shape = 'u8[4096]{0}', space=vmem, size = 0x1000, scoped, tag = 'output window, operand 1, single buffered']
    #allocation26 [shape = 's32[1]{0}', space=sflag, size = 0x4, scoped, tag = 'scoped memory for tpu_custom_call.1']
    %28 = vsyncpa [#allocation7], 0
    %29 = vsyncpa [#allocation10], 0
    %30 = vsyncpa [#allocation13], 0
    %31 = vsyncpa [#allocation16], 0
    %32 = vsyncpa [#allocation19], 0
    %33 = vsyncpa [#allocation22], 0
    %34 = vsyncpa [#allocation8], 0
    %35 = vsyncpa [#allocation26], 0
    // Predicated region
    $region2: #{tpu_custom_call.1} parent=1 // pred_check
      _
    $region3: #{tpu_custom_call.1} parent=1 // pred_check_branch
      %37 = sbr.rel (0) target = $region5
    $region4: #{tpu_custom_call.1} parent=1 // pred_region
      _
    $region5: #{tpu_custom_call.1} parent=1 // pred_fallthru
      _
    // Predicated region
    $region6: #{tpu_custom_call.1} parent=1 // pred_check
      _
    $region7: #{tpu_custom_call.1} parent=1 // pred_check_branch
      %39 = sbr.rel (0) target = $region9
    $region8: #{tpu_custom_call.1} parent=1 // pred_region
      _
    $region9: #{tpu_custom_call.1} parent=1 // pred_fallthru
      _
    // Predicated region
    $region10: #{tpu_custom_call.1} parent=1 // pred_check
      _
    $region11: #{tpu_custom_call.1} parent=1 // pred_check_branch
      %41 = sbr.rel (0) target = $region13
    $region12: #{tpu_custom_call.1} parent=1 // pred_region
      %s43 = ssub.s32 96, 96
      %44 = vsyncadd [#allocation7], %s43
      %s46 = sshll.u32 [#allocation6], 4
      %s47 = int_to_ptr.vmem [resolvable:$true] %s46
      %49 = dma.hbm_to_vmem [thread:$0]  %s2, 96, %s47, [#allocation7]
    $region13: #{tpu_custom_call.1} parent=1 // pred_fallthru
      _
    // Predicated region
    $region14: #{tpu_custom_call.1} parent=1 // pred_check
      _
    $region15: #{tpu_custom_call.1} parent=1 // pred_check_branch
      %51 = sbr.rel (0) target = $region17
    $region16: #{tpu_custom_call.1} parent=1 // pred_region
      %s53 = ssub.s32 3072, 3072
      %54 = vsyncadd [#allocation10], %s53
      %s55 = sshll.u32 [#allocation9], 4
      %s56 = int_to_ptr.vmem [resolvable:$true] %s55
      %61 = dma.hbm_to_vmem [thread:$0]  %s3, 3072, %s56, [#allocation10], 192, 192, 12
    $region17: #{tpu_custom_call.1} parent=1 // pred_fallthru
      _
    // Predicated region
    $region18: #{tpu_custom_call.1} parent=1 // pred_check
      _
    $region19: #{tpu_custom_call.1} parent=1 // pred_check_branch
      %63 = sbr.rel (0) target = $region21
    $region20: #{tpu_custom_call.1} parent=1 // pred_region
      %s65 = ssub.s32 48, 48
      %66 = vsyncadd [#allocation10], %s65
      %s68 = sshll.u32 [#allocation11], 4
      %s69 = int_to_ptr.vmem [resolvable:$true] %s68
      %71 = dma.hbm_to_vmem [thread:$0]  %s4, 48, %s69, [#allocation10]
    $region21: #{tpu_custom_call.1} parent=1 // pred_fallthru
      _
    // Predicated region
    $region22: #{tpu_custom_call.1} parent=1 // pred_check
      _
    $region23: #{tpu_custom_call.1} parent=1 // pred_check_branch
      %73 = sbr.rel (0) target = $region25
    $region24: #{tpu_custom_call.1} parent=1 // pred_region
      %s75 = ssub.s32 16, 16
      %76 = vsyncadd [#allocation13], %s75
      %s78 = sshll.u32 [#allocation12], 4
      %s79 = int_to_ptr.vmem [resolvable:$true] %s78
      %81 = dma.hbm_to_vmem [thread:$0]  %s5, 16, %s79, [#allocation13]
    $region25: #{tpu_custom_call.1} parent=1 // pred_fallthru
      _
    // Predicated region
    $region26: #{tpu_custom_call.1} parent=1 // pred_check
      _
    $region27: #{tpu_custom_call.1} parent=1 // pred_check_branch
      %83 = sbr.rel (0) target = $region29
    $region28: #{tpu_custom_call.1} parent=1 // pred_region
      %s85 = ssub.s32 3072, 3072
      %86 = vsyncadd [#allocation13], %s85
      %s87 = sshll.u32 [#allocation14], 4
      %s88 = int_to_ptr.vmem [resolvable:$true] %s87
      %93 = dma.hbm_to_vmem [thread:$0]  %s6, 3072, %s88, [#allocation13], 192, 192, 12
    $region29: #{tpu_custom_call.1} parent=1 // pred_fallthru
      _
    // Predicated region
    $region30: #{tpu_custom_call.1} parent=1 // pred_check
      _
    $region31: #{tpu_custom_call.1} parent=1 // pred_check_branch
      %95 = sbr.rel (0) target = $region33
    $region32: #{tpu_custom_call.1} parent=1 // pred_region
      %s97 = ssub.s32 3072, 3072
      %98 = vsyncadd [#allocation16], %s97
      %s99 = sshll.u32 [#allocation15], 4
      %s100 = int_to_ptr.vmem [resolvable:$true] %s99
      %105 = dma.hbm_to_vmem [thread:$0]  %s7, 3072, %s100, [#allocation16], 192, 192, 12
    $region33: #{tpu_custom_call.1} parent=1 // pred_fallthru
      _
    // Predicated region
    $region34: #{tpu_custom_call.1} parent=1 // pred_check
      _
    $region35: #{tpu_custom_call.1} parent=1 // pred_check_branch
      %107 = sbr.rel (0) target = $region37
    $region36: #{tpu_custom_call.1} parent=1 // pred_region
      %s109 = ssub.s32 3072, 3072
      %110 = vsyncadd [#allocation16], %s109
      %s111 = sshll.u32 [#allocation17], 4
      %s112 = int_to_ptr.vmem [resolvable:$true] %s111
      %117 = dma.hbm_to_vmem [thread:$0]  %s8, 3072, %s112, [#allocation16], 192, 192, 12
    $region37: #{tpu_custom_call.1} parent=1 // pred_fallthru
      _
    // Predicated region
    $region38: #{tpu_custom_call.1} parent=1 // pred_check
      _
    $region39: #{tpu_custom_call.1} parent=1 // pred_check_branch
      %119 = sbr.rel (0) target = $region41
    $region40: #{tpu_custom_call.1} parent=1 // pred_region
      %s121 = ssub.s32 48, 48
      %122 = vsyncadd [#allocation19], %s121
      %s124 = sshll.u32 [#allocation18], 4
      %s125 = int_to_ptr.vmem [resolvable:$true] %s124
      %127 = dma.hbm_to_vmem [thread:$0]  %s9, 48, %s125, [#allocation19]
    $region41: #{tpu_custom_call.1} parent=1 // pred_fallthru
      _
    // Predicated region
    $region42: #{tpu_custom_call.1} parent=1 // pred_check
      _
    $region43: #{tpu_custom_call.1} parent=1 // pred_check_branch
      %129 = sbr.rel (0) target = $region45
    $region44: #{tpu_custom_call.1} parent=1 // pred_region
      %s131 = ssub.s32 16, 16
      %132 = vsyncadd [#allocation19], %s131
      %s134 = sshll.u32 [#allocation20], 4
      %s135 = int_to_ptr.vmem [resolvable:$true] %s134
      %137 = dma.hbm_to_vmem [thread:$0]  %s10, 16, %s135, [#allocation19]
    $region45: #{tpu_custom_call.1} parent=1 // pred_fallthru
      _
    // Predicated region
    $region46: #{tpu_custom_call.1} parent=1 // pred_check
      _
    $region47: #{tpu_custom_call.1} parent=1 // pred_check_branch
      %139 = sbr.rel (0) target = $region49
    $region48: #{tpu_custom_call.1} parent=1 // pred_region
      _
    $region49: #{tpu_custom_call.1} parent=1 // pred_fallthru
      _
    // Predicated region
    $region50: #{tpu_custom_call.1} parent=1 // pred_check
      _
    $region51: #{tpu_custom_call.1} parent=1 // pred_check_branch
      %141 = sbr.rel (0) target = $region53
    $region52: #{tpu_custom_call.1} parent=1 // pred_region
      %s143 = ssub.s32 1024, 1024
      %144 = vsyncadd [#allocation22], %s143
      %s145 = sshll.u32 [#allocation21], 4
      %s146 = int_to_ptr.vmem [resolvable:$true] %s145
      %151 = dma.hbm_to_vmem [thread:$0]  %s12, 1024, %s146, [#allocation22], 64, 64, 4
    $region53: #{tpu_custom_call.1} parent=1 // pred_fallthru
      _
    // Predicated region
    $region54: #{tpu_custom_call.1} parent=1 // pred_check
      _
    $region55: #{tpu_custom_call.1} parent=1 // pred_check_branch
      %153 = sbr.rel (0) target = $region57
    $region56: #{tpu_custom_call.1} parent=1 // pred_region
      _
    $region57: #{tpu_custom_call.1} parent=1 // pred_fallthru
      _
    // Predicated region
    $region58: #{tpu_custom_call.1} parent=1 // pred_check
      _
    $region59: #{tpu_custom_call.1} parent=1 // pred_check_branch
      %155 = sbr.rel (0) target = $region61
    $region60: #{tpu_custom_call.1} parent=1 // pred_region
      _
    $region61: #{tpu_custom_call.1} parent=1 // pred_fallthru
      _
    // Predicated region
    $region62: #{tpu_custom_call.1} parent=1 // pred_check
      _
    $region63: #{tpu_custom_call.1} parent=1 // pred_check_branch
      %157 = sbr.rel (0) target = $region65
    $region64: #{tpu_custom_call.1} parent=1 // pred_region
      _
    $region65: #{tpu_custom_call.1} parent=1 // pred_fallthru
      _
    // Predicated region
    $region66: #{tpu_custom_call.1} parent=1 // pred_check
      _
    $region67: #{tpu_custom_call.1} parent=1 // pred_check_branch
      %159 = sbr.rel (0) target = $region69
    $region68: #{tpu_custom_call.1} parent=1 // pred_region
      %s161 = ssub.s32 1024, 1024
      %162 = vsyncadd [#allocation22], %s161
      %s163 = sshll.u32 [#allocation23], 4
      %s164 = int_to_ptr.vmem [resolvable:$true] %s163
      %169 = dma.hbm_to_vmem [thread:$0]  %s16, 1024, %s164, [#allocation22], 128, 128, 8
    $region69: #{tpu_custom_call.1} parent=1 // pred_fallthru
      _
    // Predicated region
    $region70: #{tpu_custom_call.1} parent=1 // pred_check
      _
    $region71: #{tpu_custom_call.1} parent=1 // pred_check_branch
      %171 = sbr.rel (0) target = $region73
    $region72: #{tpu_custom_call.1} parent=1 // pred_region
      _
    $region73: #{tpu_custom_call.1} parent=1 // pred_fallthru
      _
    // Predicated region
    $region74: #{tpu_custom_call.1} parent=1 // pred_check
      _
    $region75: #{tpu_custom_call.1} parent=1 // pred_check_branch
      %173 = sbr.rel (0) target = $region77
    $region76: #{tpu_custom_call.1} parent=1 // pred_region
      _
    $region77: #{tpu_custom_call.1} parent=1 // pred_fallthru
      _
    // Predicated region
    $region78: #{tpu_custom_call.1} parent=1 // pred_check
      _
    $region79: #{tpu_custom_call.1} parent=1 // pred_check_branch
      %175 = sbr.rel (0) target = $region81
    $region80: #{tpu_custom_call.1} parent=1 // pred_region
      %176 = dma.done [#allocation7], 96
    $region81: #{tpu_custom_call.1} parent=1 // pred_fallthru
      _
    // Predicated region
    $region82: #{tpu_custom_call.1} parent=1 // pred_check
      _
    $region83: #{tpu_custom_call.1} parent=1 // pred_check_branch
      %178 = sbr.rel (0) target = $region85
    $region84: #{tpu_custom_call.1} parent=1 // pred_region
      %179 = dma.done [#allocation10], 3072
    $region85: #{tpu_custom_call.1} parent=1 // pred_fallthru
      _
    // Predicated region
    $region86: #{tpu_custom_call.1} parent=1 // pred_check
      _
    $region87: #{tpu_custom_call.1} parent=1 // pred_check_branch
      %181 = sbr.rel (0) target = $region89
    $region88: #{tpu_custom_call.1} parent=1 // pred_region
      %182 = dma.done [#allocation10], 48
    $region89: #{tpu_custom_call.1} parent=1 // pred_fallthru
      _
    // Predicated region
    $region90: #{tpu_custom_call.1} parent=1 // pred_check
      _
    $region91: #{tpu_custom_call.1} parent=1 // pred_check_branch
      %184 = sbr.rel (0) target = $region93
    $region92: #{tpu_custom_call.1} parent=1 // pred_region
      %185 = dma.done [#allocation13], 16
    $region93: #{tpu_custom_call.1} parent=1 // pred_fallthru
      _
    // Predicated region
    $region94: #{tpu_custom_call.1} parent=1 // pred_check
      _
    $region95: #{tpu_custom_call.1} parent=1 // pred_check_branch
      %187 = sbr.rel (0) target = $region97
    $region96: #{tpu_custom_call.1} parent=1 // pred_region
      %188 = dma.done [#allocation13], 3072
    $region97: #{tpu_custom_call.1} parent=1 // pred_fallthru
      _
    // Predicated region
    $region98: #{tpu_custom_call.1} parent=1 // pred_check
      _
    $region99: #{tpu_custom_call.1} parent=1 // pred_check_branch
      %190 = sbr.rel (0) target = $region101
    $region100: #{tpu_custom_call.1} parent=1 // pred_region
      %191 = dma.done [#allocation16], 3072
    $region101: #{tpu_custom_call.1} parent=1 // pred_fallthru
      _
    // Predicated region
    $region102: #{tpu_custom_call.1} parent=1 // pred_check
      _
    $region103: #{tpu_custom_call.1} parent=1 // pred_check_branch
      %193 = sbr.rel (0) target = $region105
    $region104: #{tpu_custom_call.1} parent=1 // pred_region
      %194 = dma.done [#allocation16], 3072
    $region105: #{tpu_custom_call.1} parent=1 // pred_fallthru
      _
    // Predicated region
    $region106: #{tpu_custom_call.1} parent=1 // pred_check
      _
    $region107: #{tpu_custom_call.1} parent=1 // pred_check_branch
      %196 = sbr.rel (0) target = $region109
    $region108: #{tpu_custom_call.1} parent=1 // pred_region
      %197 = dma.done [#allocation19], 48
    $region109: #{tpu_custom_call.1} parent=1 // pred_fallthru
      _
    // Predicated region
    $region110: #{tpu_custom_call.1} parent=1 // pred_check
      _
    $region111: #{tpu_custom_call.1} parent=1 // pred_check_branch
      %199 = sbr.rel (0) target = $region113
    $region112: #{tpu_custom_call.1} parent=1 // pred_region
      %200 = dma.done [#allocation19], 16
    $region113: #{tpu_custom_call.1} parent=1 // pred_fallthru
      _
    // Predicated region
    $region114: #{tpu_custom_call.1} parent=1 // pred_check
      _
    $region115: #{tpu_custom_call.1} parent=1 // pred_check_branch
      %202 = sbr.rel (0) target = $region117
    $region116: #{tpu_custom_call.1} parent=1 // pred_region
      %203 = dma.done [#allocation22], 1024
    $region117: #{tpu_custom_call.1} parent=1 // pred_fallthru
      _
    // Predicated region
    $region118: #{tpu_custom_call.1} parent=1 // pred_check
      _
    $region119: #{tpu_custom_call.1} parent=1 // pred_check_branch
      %205 = sbr.rel (0) target = $region121
    $region120: #{tpu_custom_call.1} parent=1 // pred_region
      %206 = dma.done [#allocation22], 1024
    $region121: #{tpu_custom_call.1} parent=1 // pred_fallthru
      _
    %v208 = vld [vmem:[%s0] sm:$0xff]
    %v209 = vld [vmem:[%s0 + $0x8] sm:$0xff]
    %v210 = vld [vmem:[%s0 + $0x10] sm:$0xff]
    %v211 = vld [vmem:[%s0 + $0x18] sm:$0xff]
    %v212 = vld [vmem:[%s0 + $0x20] sm:$0xff]
    %v213 = vld [vmem:[%s0 + $0x28] sm:$0xff]
    %v214 = vld [vmem:[%s0 + $0x30] sm:$0xff]
    %v215 = vld [vmem:[%s0 + $0x38] sm:$0xff]
    %v216 = vld [vmem:[#allocation6] ss:$2 sm:$0x7]
    %218 = vset.pattern.permute.xlu0 0
    %219 = vperm.xlu0 %218, %v208
    %v220 = vpop.permute.xlu0 %219
    %223 = vset.pattern.permute.xlu0 0
    %224 = vperm.xlu0 %223, %v209
    %v225 = vpop.permute.xlu0 %224
    %228 = vset.pattern.permute.xlu0 0
    %229 = vperm.xlu0 %228, %v210
    %v230 = vpop.permute.xlu0 %229
    %233 = vset.pattern.permute.xlu0 0
    %234 = vperm.xlu0 %233, %v211
    %v235 = vpop.permute.xlu0 %234
    %238 = vset.pattern.permute.xlu0 0
    %239 = vperm.xlu0 %238, %v212
    %v240 = vpop.permute.xlu0 %239
    %243 = vset.pattern.permute.xlu0 0
    %244 = vperm.xlu0 %243, %v213
    %v245 = vpop.permute.xlu0 %244
    %248 = vset.pattern.permute.xlu0 0
    %249 = vperm.xlu0 %248, %v214
    %v250 = vpop.permute.xlu0 %249
    %253 = vset.pattern.permute.xlu0 0
    %254 = vperm.xlu0 %253, %v215
    %v255 = vpop.permute.xlu0 %254
    %v258 = vlaneseq
    %v259 = vshrl.u32 %v258, 7
    %v260 = vsub.s32 0, %v259
    %v261 = vrot.slane %v216, %v260
    %v262 = vlaneseq
    %v263 = vshrl.u32 %v262, 7
    %v264 = vsub.s32 1, %v263
    %v265 = vrot.slane %v216, %v264
    %v266 = vlaneseq
    %v267 = vshrl.u32 %v266, 7
    %v268 = vsub.s32 2, %v267
    %v269 = vrot.slane %v216, %v268
    %v273 = vmul.f32 %v220, %v261
    %v274 = vmul.f32 %v220, %v265
    %v275 = vmul.f32 %v220, %v269
    %v276 = vmul.f32 %v225, %v261
    %v277 = vmul.f32 %v225, %v265
    %v278 = vmul.f32 %v225, %v269
    %v279 = vmul.f32 %v230, %v261
    %v280 = vmul.f32 %v230, %v265
    %v281 = vmul.f32 %v230, %v269
    %v282 = vmul.f32 %v235, %v261
    %v283 = vmul.f32 %v235, %v265
    %v284 = vmul.f32 %v235, %v269
    %v285 = vmul.f32 %v240, %v261
    %v286 = vmul.f32 %v240, %v265
    %v287 = vmul.f32 %v240, %v269
    %v288 = vmul.f32 %v245, %v261
    %v289 = vmul.f32 %v245, %v265
    %v290 = vmul.f32 %v245, %v269
    %v291 = vmul.f32 %v250, %v261
    %v292 = vmul.f32 %v250, %v265
    %v293 = vmul.f32 %v250, %v269
    %v294 = vmul.f32 %v255, %v261
    %v295 = vmul.f32 %v255, %v265
    %v296 = vmul.f32 %v255, %v269
    %s297 = scalar_lea.vmem [#allocation6], 1
    %v298 = vld [vmem:[%s297] ss:$2 sm:$0x7]
    %299 = vset.pattern.permute.xlu0 1
    %300 = vperm.xlu0 %299, %v208
    %v301 = vpop.permute.xlu0 %300
    %303 = vset.pattern.permute.xlu0 1
    %304 = vperm.xlu0 %303, %v209
    %v305 = vpop.permute.xlu0 %304
    %307 = vset.pattern.permute.xlu0 1
    %308 = vperm.xlu0 %307, %v210
    %v309 = vpop.permute.xlu0 %308
    %311 = vset.pattern.permute.xlu0 1
    %312 = vperm.xlu0 %311, %v211
    %v313 = vpop.permute.xlu0 %312
    %315 = vset.pattern.permute.xlu0 1
    %316 = vperm.xlu0 %315, %v212
    %v317 = vpop.permute.xlu0 %316
    %319 = vset.pattern.permute.xlu0 1
    %320 = vperm.xlu0 %319, %v213
    %v321 = vpop.permute.xlu0 %320
    %323 = vset.pattern.permute.xlu0 1
    %324 = vperm.xlu0 %323, %v214
    %v325 = vpop.permute.xlu0 %324
    %327 = vset.pattern.permute.xlu0 1
    %328 = vperm.xlu0 %327, %v215
    %v329 = vpop.permute.xlu0 %328
    %v332 = vlaneseq
    %v333 = vshrl.u32 %v332, 7
    %v334 = vsub.s32 0, %v333
    %v335 = vrot.slane %v298, %v334
    %v336 = vlaneseq
    %v337 = vshrl.u32 %v336, 7
    %v338 = vsub.s32 1, %v337
    %v339 = vrot.slane %v298, %v338
    %v340 = vlaneseq
    %v341 = vshrl.u32 %v340, 7
    %v342 = vsub.s32 2, %v341
    %v343 = vrot.slane %v298, %v342
    %v347 = vmul.f32 %v301, %v335
    %v348 = vmul.f32 %v301, %v339
    %v349 = vmul.f32 %v301, %v343
    %v350 = vmul.f32 %v305, %v335
    %v351 = vmul.f32 %v305, %v339
    %v352 = vmul.f32 %v305, %v343
    %v353 = vmul.f32 %v309, %v335
    %v354 = vmul.f32 %v309, %v339
    %v355 = vmul.f32 %v309, %v343
    %v356 = vmul.f32 %v313, %v335
    %v357 = vmul.f32 %v313, %v339
    %v358 = vmul.f32 %v313, %v343
    %v359 = vmul.f32 %v317, %v335
    %v360 = vmul.f32 %v317, %v339
    %v361 = vmul.f32 %v317, %v343
    %v362 = vmul.f32 %v321, %v335
    %v363 = vmul.f32 %v321, %v339
    %v364 = vmul.f32 %v321, %v343
    %v365 = vmul.f32 %v325, %v335
    %v366 = vmul.f32 %v325, %v339
    %v367 = vmul.f32 %v325, %v343
    %v368 = vmul.f32 %v329, %v335
    %v369 = vmul.f32 %v329, %v339
    %v370 = vmul.f32 %v329, %v343
    %v371 = vadd.f32 %v273, %v347
    %v372 = vadd.f32 %v274, %v348
    %v373 = vadd.f32 %v275, %v349
    %v374 = vadd.f32 %v276, %v350
    %v375 = vadd.f32 %v277, %v351
    %v376 = vadd.f32 %v278, %v352
    %v377 = vadd.f32 %v279, %v353
    %v378 = vadd.f32 %v280, %v354
    %v379 = vadd.f32 %v281, %v355
    %v380 = vadd.f32 %v282, %v356
    %v381 = vadd.f32 %v283, %v357
    %v382 = vadd.f32 %v284, %v358
    %v383 = vadd.f32 %v285, %v359
    %v384 = vadd.f32 %v286, %v360
    %v385 = vadd.f32 %v287, %v361
    %v386 = vadd.f32 %v288, %v362
    %v387 = vadd.f32 %v289, %v363
    %v388 = vadd.f32 %v290, %v364
    %v389 = vadd.f32 %v291, %v365
    %v390 = vadd.f32 %v292, %v366
    %v391 = vadd.f32 %v293, %v367
    %v392 = vadd.f32 %v294, %v368
    %v393 = vadd.f32 %v295, %v369
    %v394 = vadd.f32 %v296, %v370
    %v395 = vld [vmem:[#allocation11] sm:$0x7]
    %v397 = vlaneseq
    %v398 = vshrl.u32 %v397, 7
    %v399 = vsub.s32 0, %v398
    %v400 = vrot.slane %v395, %v399
    %v401 = vlaneseq
    %v402 = vshrl.u32 %v401, 7
    %v403 = vsub.s32 1, %v402
    %v404 = vrot.slane %v395, %v403
    %v405 = vlaneseq
    %v406 = vshrl.u32 %v405, 7
    %v407 = vsub.s32 2, %v406
    %v408 = vrot.slane %v395, %v407
    %v412 = vadd.f32 %v371, %v400
    %v413 = vadd.f32 %v372, %v404
    %v414 = vadd.f32 %v373, %v408
    %v415 = vadd.f32 %v374, %v400
    %v416 = vadd.f32 %v375, %v404
    %v417 = vadd.f32 %v376, %v408
    %v418 = vadd.f32 %v377, %v400
    %v419 = vadd.f32 %v378, %v404
    %v420 = vadd.f32 %v379, %v408
    %v421 = vadd.f32 %v380, %v400
    %v422 = vadd.f32 %v381, %v404
    %v423 = vadd.f32 %v382, %v408
    %v424 = vadd.f32 %v383, %v400
    %v425 = vadd.f32 %v384, %v404
    %v426 = vadd.f32 %v385, %v408
    %v427 = vadd.f32 %v386, %v400
    %v428 = vadd.f32 %v387, %v404
    %v429 = vadd.f32 %v388, %v408
    %v430 = vadd.f32 %v389, %v400
    %v431 = vadd.f32 %v390, %v404
    %v432 = vadd.f32 %v391, %v408
    %v433 = vadd.f32 %v392, %v400
    %v434 = vadd.f32 %v393, %v404
    %v435 = vadd.f32 %v394, %v408
    %436 = vst [vmem:[#allocation2] sm:$0xff] %v412
    %437 = vst [vmem:[#allocation2 + $0x8] sm:$0xff] %v413
    %438 = vst [vmem:[#allocation2 + $0x10] sm:$0xff] %v414
    %439 = vst [vmem:[#allocation2 + $0x18] sm:$0xff] %v415
    %440 = vst [vmem:[#allocation2 + $0x20] sm:$0xff] %v416
    %441 = vst [vmem:[#allocation2 + $0x28] sm:$0xff] %v417
    %442 = vst [vmem:[#allocation2 + $0x30] sm:$0xff] %v418
    %443 = vst [vmem:[#allocation2 + $0x38] sm:$0xff] %v419
    %444 = vst [vmem:[#allocation2 + $0x40] sm:$0xff] %v420
    %445 = vst [vmem:[#allocation2 + $0x48] sm:$0xff] %v421
    %446 = vst [vmem:[#allocation2 + $0x50] sm:$0xff] %v422
    %447 = vst [vmem:[#allocation2 + $0x58] sm:$0xff] %v423
    %448 = vst [vmem:[#allocation2 + $0x60] sm:$0xff] %v424
    %449 = vst [vmem:[#allocation2 + $0x68] sm:$0xff] %v425
    %450 = vst [vmem:[#allocation2 + $0x70] sm:$0xff] %v426
    %451 = vst [vmem:[#allocation2 + $0x78] sm:$0xff] %v427
    %452 = vst [vmem:[#allocation2 + $0x80] sm:$0xff] %v428
    %453 = vst [vmem:[#allocation2 + $0x88] sm:$0xff] %v429
    %454 = vst [vmem:[#allocation2 + $0x90] sm:$0xff] %v430
    %455 = vst [vmem:[#allocation2 + $0x98] sm:$0xff] %v431
    %456 = vst [vmem:[#allocation2 + $0xa0] sm:$0xff] %v432
    %457 = vst [vmem:[#allocation2 + $0xa8] sm:$0xff] %v433
    %458 = vst [vmem:[#allocation2 + $0xb0] sm:$0xff] %v434
    %459 = vst [vmem:[#allocation2 + $0xb8] sm:$0xff] %v435
    %v460 = vld [vmem:[%s1] sm:$0xff]
    %v461 = vld [vmem:[#allocation9] sm:$0xff]
    %v462 = vld [vmem:[#allocation9 + $0x8] sm:$0xf]
    %v463 = vld [vmem:[#allocation9 + $0xc] sm:$0xff]
    %v464 = vld [vmem:[#allocation9 + $0x14] sm:$0xf]
    %v465 = vld [vmem:[#allocation9 + $0x18] sm:$0xff]
    %v466 = vld [vmem:[#allocation9 + $0x20] sm:$0xf]
    %v467 = vld [vmem:[#allocation9 + $0x24] sm:$0xff]
    %v468 = vld [vmem:[#allocation9 + $0x2c] sm:$0xf]
    %v469 = vld [vmem:[#allocation9 + $0x30] sm:$0xff]
    %v470 = vld [vmem:[#allocation9 + $0x38] sm:$0xf]
    %v471 = vld [vmem:[#allocation9 + $0x3c] sm:$0xff]
    %v472 = vld [vmem:[#allocation9 + $0x44] sm:$0xf]
    %v473 = vld [vmem:[#allocation9 + $0x48] sm:$0xff]
    %v474 = vld [vmem:[#allocation9 + $0x50] sm:$0xf]
    %v475 = vld [vmem:[#allocation9 + $0x54] sm:$0xff]
    %v476 = vld [vmem:[#allocation9 + $0x5c] sm:$0xf]
    %v477 = vld [vmem:[#allocation9 + $0x60] sm:$0xff]
    %v478 = vld [vmem:[#allocation9 + $0x68] sm:$0xf]
    %v479 = vld [vmem:[#allocation9 + $0x6c] sm:$0xff]
    %v480 = vld [vmem:[#allocation9 + $0x74] sm:$0xf]
    %v481 = vld [vmem:[#allocation9 + $0x78] sm:$0xff]
    %v482 = vld [vmem:[#allocation9 + $0x80] sm:$0xf]
    %v483 = vld [vmem:[#allocation9 + $0x84] sm:$0xff]
    %v484 = vld [vmem:[#allocation9 + $0x8c] sm:$0xf]
    %v485 = vld [vmem:[#allocation9 + $0x90] sm:$0xff]
    %v486 = vld [vmem:[#allocation9 + $0x98] sm:$0xf]
    %v487 = vld [vmem:[#allocation9 + $0x9c] sm:$0xff]
    %v488 = vld [vmem:[#allocation9 + $0xa4] sm:$0xf]
    %v489 = vld [vmem:[#allocation9 + $0xa8] sm:$0xff]
    %v490 = vld [vmem:[#allocation9 + $0xb0] sm:$0xf]
    %v491 = vld [vmem:[#allocation9 + $0xb4] sm:$0xff]
    %v492 = vld [vmem:[#allocation9 + $0xbc] sm:$0xf]
    %v493 = vld [vmem:[#allocation12] sm:$0x1]
    %v495 = vlaneseq
    %v496 = vshrl.u32 %v495, 7
    %v497 = vsub.s32 0, %v496
    %v498 = vrot.slane %v493, %v497
    %v500 = vld [vmem:[#allocation2] sm:$0xff]
    %v501 = vld [vmem:[#allocation2 + $0x8] sm:$0xff]
    %v502 = vld [vmem:[#allocation2 + $0x10] sm:$0xff]
    %v503 = vpack.c.bf16 %v460, %v460
    %v536 = vunpack.c.l.b16 %v461
    %v537 = vunpack.c.h.b16 %v461
    %v538 = vunpack.c.l.b16 %v462
    %v539 = vunpack.c.l.b16 %v463
    %v540 = vunpack.c.h.b16 %v463
    %v541 = vunpack.c.l.b16 %v464
    %v542 = vunpack.c.l.b16 %v465
    %v543 = vunpack.c.h.b16 %v465
    %v544 = vunpack.c.l.b16 %v466
    %v545 = vunpack.c.l.b16 %v467
    %v546 = vunpack.c.h.b16 %v467
    %v547 = vunpack.c.l.b16 %v468
    %v548 = vunpack.c.l.b16 %v469
    %v549 = vunpack.c.h.b16 %v469
    %v550 = vunpack.c.l.b16 %v470
    %v551 = vunpack.c.l.b16 %v471
    %v552 = vunpack.c.h.b16 %v471
    %v553 = vunpack.c.l.b16 %v472
    %v554 = vunpack.c.l.b16 %v473
    %v555 = vunpack.c.h.b16 %v473
    %v556 = vunpack.c.l.b16 %v474
    %v557 = vunpack.c.l.b16 %v475
    %v558 = vunpack.c.h.b16 %v475
    %v559 = vunpack.c.l.b16 %v476
    %v560 = vunpack.c.l.b16 %v477
    %v561 = vunpack.c.h.b16 %v477
    %v562 = vunpack.c.l.b16 %v478
    %v563 = vunpack.c.l.b16 %v479
    %v564 = vunpack.c.h.b16 %v479
    %v565 = vunpack.c.l.b16 %v480
    %v566 = vunpack.c.l.b16 %v481
    %v567 = vunpack.c.h.b16 %v481
    %v568 = vunpack.c.l.b16 %v482
    %v569 = vunpack.c.l.b16 %v483
    %v570 = vunpack.c.h.b16 %v483
    %v571 = vunpack.c.l.b16 %v484
    %v572 = vunpack.c.l.b16 %v485
    %v573 = vunpack.c.h.b16 %v485
    %v574 = vunpack.c.l.b16 %v486
    %v575 = vunpack.c.l.b16 %v487
    %v576 = vunpack.c.h.b16 %v487
    %v577 = vunpack.c.l.b16 %v488
    %v578 = vunpack.c.l.b16 %v489
    %v579 = vunpack.c.h.b16 %v489
    %v580 = vunpack.c.l.b16 %v490
    %v581 = vunpack.c.l.b16 %v491
    %v582 = vunpack.c.h.b16 %v491
    %v583 = vunpack.c.l.b16 %v492
    %v584 = vpack.c.b16 %v539, %v536
    %v585 = vpack.c.b16 %v540, %v537
    %v586 = vpack.c.b16 %v541, %v538
    %v587 = vpack.c.b16 %v545, %v542
    %v588 = vpack.c.b16 %v546, %v543
    %v589 = vpack.c.b16 %v547, %v544
    %v590 = vpack.c.b16 %v551, %v548
    %v591 = vpack.c.b16 %v552, %v549
    %v592 = vpack.c.b16 %v553, %v550
    %v593 = vpack.c.b16 %v557, %v554
    %v594 = vpack.c.b16 %v558, %v555
    %v595 = vpack.c.b16 %v559, %v556
    %v596 = vpack.c.b16 %v563, %v560
    %v597 = vpack.c.b16 %v564, %v561
    %v598 = vpack.c.b16 %v565, %v562
    %v599 = vpack.c.b16 %v569, %v566
    %v600 = vpack.c.b16 %v570, %v567
    %v601 = vpack.c.b16 %v571, %v568
    %v602 = vpack.c.b16 %v575, %v572
    %v603 = vpack.c.b16 %v576, %v573
    %v604 = vpack.c.b16 %v577, %v574
    %v605 = vpack.c.b16 %v581, %v578
    %v606 = vpack.c.b16 %v582, %v579
    %v607 = vpack.c.b16 %v583, %v580
    %632 = vmatprep.subr.bf16.mxu0 %v606
    %633 = vmatpush1.bf16.msra.mxu0 %v605
    %634 = vmatprep.subr.bf16.mxu0 %v603
    %635 = vmatpush1.bf16.msra.mxu0 %v602
    %636 = vmatprep.subr.bf16.mxu0 %v600
    %637 = vmatpush1.bf16.msra.mxu0 %v599
    %638 = vmatprep.subr.bf16.mxu0 %v597
    %639 = vmatpush1.bf16.msra.mxu0 %v596
    %640 = vmatprep.subr.bf16.mxu0 %v594
    %641 = vmatpush1.bf16.msra.mxu0 %v593
    %642 = vmatprep.subr.bf16.mxu0 %v591
    %643 = vmatpush1.bf16.msra.mxu0 %v590
    %644 = vmatprep.subr.bf16.mxu0 %v588
    %645 = vmatpush1.bf16.msra.mxu0 %v587
    %646 = vmatprep.subr.bf16.mxu0 %v585
    %647 = vmatpush1.bf16.msra.mxu0 %v584
    %648 = vmatprep.subr.bf16.mxu0 0
    %649 = vmatpush2.bf16.msra.mxu0 0
    %650 = vmatprep.subr.bf16.mxu0 0
    %651 = vmatpush2.bf16.msra.mxu0 0
    %652 = vmatprep.subr.bf16.mxu0 0
    %653 = vmatpush2.bf16.msra.mxu0 0
    %654 = vmatprep.subr.bf16.mxu0 0
    %655 = vmatpush2.bf16.msra.mxu0 0
    %656 = vmatprep.subr.bf16.mxu0 0
    %657 = vmatpush2.bf16.msra.mxu0 0
    %658 = vmatprep.subr.bf16.mxu0 0
    %659 = vmatpush2.bf16.msra.mxu0 0
    %660 = vmatprep.subr.bf16.mxu0 0
    %661 = vmatpush2.bf16.msra.mxu0 0
    %662 = vmatprep.subr.bf16.mxu0 0
    %663 = vmatpush2.bf16.msra.mxu0 0
    %664 = vmatprep.mubr.bf16.mxu0 0
    %665 = vmatmul.mubr.bf16.gmra.mxu0 %v503
    %v666 = vpop.f32.mrf.mxu0
    %v667 = vadd.f32 0.0, %v666
    %v668 = vpop.f32.mrf.mxu0
    %v669 = vadd.f32 0.0, %v668
    %v670 = vpop.f32.mrf.mxu0
    %v671 = vpop.f32.mrf.mxu0
    %672 = vdwg.mxu0
    %673 = vmatprep.subr.bf16.mxu0 0
    %674 = vmatpush1.bf16.msra.mxu0 %v607
    %675 = vmatprep.subr.bf16.mxu0 0
    %676 = vmatpush1.bf16.msra.mxu0 %v604
    %677 = vmatprep.subr.bf16.mxu0 0
    %678 = vmatpush1.bf16.msra.mxu0 %v601
    %679 = vmatprep.subr.bf16.mxu0 0
    %680 = vmatpush1.bf16.msra.mxu0 %v598
    %681 = vmatprep.subr.bf16.mxu0 0
    %682 = vmatpush1.bf16.msra.mxu0 %v595
    %683 = vmatprep.subr.bf16.mxu0 0
    %684 = vmatpush1.bf16.msra.mxu0 %v592
    %685 = vmatprep.subr.bf16.mxu0 0
    %686 = vmatpush1.bf16.msra.mxu0 %v589
    %687 = vmatprep.subr.bf16.mxu0 0
    %688 = vmatpush1.bf16.msra.mxu0 %v586
    %689 = vmatprep.subr.bf16.mxu0 0
    %690 = vmatpush2.bf16.msra.mxu0 0
    %691 = vmatprep.subr.bf16.mxu0 0
    %692 = vmatpush2.bf16.msra.mxu0 0
    %693 = vmatprep.subr.bf16.mxu0 0
    %694 = vmatpush2.bf16.msra.mxu0 0
    %695 = vmatprep.subr.bf16.mxu0 0
    %696 = vmatpush2.bf16.msra.mxu0 0
    %697 = vmatprep.subr.bf16.mxu0 0
    %698 = vmatpush2.bf16.msra.mxu0 0
    %699 = vmatprep.subr.bf16.mxu0 0
    %700 = vmatpush2.bf16.msra.mxu0 0
    %701 = vmatprep.subr.bf16.mxu0 0
    %702 = vmatpush2.bf16.msra.mxu0 0
    %703 = vmatprep.subr.bf16.mxu0 0
    %704 = vmatpush2.bf16.msra.mxu0 0
    %705 = vmatprep.mubr.bf16.mxu0 0
    %706 = vmatmul.mubr.bf16.gmra.mxu0 %v503
    %v707 = vpop.f32.mrf.mxu0
    %v708 = vadd.f32 0.0, %v707
    %v709 = vpop.f32.mrf.mxu0
    %v710 = vpop.f32.mrf.mxu0
    %v711 = vpop.f32.mrf.mxu0
    %712 = vdwg.mxu0
    %v713 = vadd.f32 %v500, %v667
    %v714 = vadd.f32 %v501, %v669
    %v715 = vxor.u32 %v713, 2147483648
    %v716 = vxor.u32 %v714, 2147483648
    %v717 = vmul.f32 %v715, 1.442695
    %v718 = vpow.pop %v717
    %v719 = vmul.f32 %v716, 1.442695
    %v720 = vpow.pop %v719
    %v721 = vadd.f32 %v718, 1.0
    %v722 = vadd.f32 %v720, 1.0
    %v723 = vrcp.pop %v721
    %v724 = vmul.f32 1.0, %v723
    %v725 = vrcp.pop %v722
    %v726 = vmul.f32 1.0, %v725
    %v727 = vadd.f32 %v708, %v498
    %v728 = vmul.f32 %v724, %v727
    %v729 = vadd.f32 %v502, %v728
    %v730 = vtanh.pop %v729
    %v731 = vsub.f32 %v460, %v730
    %v732 = vmul.f32 %v726, %v731
    %v733 = vadd.f32 %v730, %v732
    %734 = vst [vmem:[#allocation3] sm:$0xff] %v733
    %v735 = vld [vmem:[#allocation2 + $0x18] sm:$0xff]
    %v736 = vld [vmem:[#allocation2 + $0x20] sm:$0xff]
    %v737 = vld [vmem:[#allocation2 + $0x28] sm:$0xff]
    %v738 = vpack.c.bf16 %v733, %v733
    %739 = vmatprep.subr.bf16.mxu0 %v606
    %740 = vmatpush1.bf16.msra.mxu0 %v605
    %741 = vmatprep.subr.bf16.mxu0 %v603
    %742 = vmatpush1.bf16.msra.mxu0 %v602
    %743 = vmatprep.subr.bf16.mxu0 %v600
    %744 = vmatpush1.bf16.msra.mxu0 %v599
    %745 = vmatprep.subr.bf16.mxu0 %v597
    %746 = vmatpush1.bf16.msra.mxu0 %v596
    %747 = vmatprep.subr.bf16.mxu0 %v594
    %748 = vmatpush1.bf16.msra.mxu0 %v593
    %749 = vmatprep.subr.bf16.mxu0 %v591
    %750 = vmatpush1.bf16.msra.mxu0 %v590
    %751 = vmatprep.subr.bf16.mxu0 %v588
    %752 = vmatpush1.bf16.msra.mxu0 %v587
    %753 = vmatprep.subr.bf16.mxu0 %v585
    %754 = vmatpush1.bf16.msra.mxu0 %v584
    %755 = vmatprep.subr.bf16.mxu0 0
    %756 = vmatpush2.bf16.msra.mxu0 0
    %757 = vmatprep.subr.bf16.mxu0 0
    %758 = vmatpush2.bf16.msra.mxu0 0
    %759 = vmatprep.subr.bf16.mxu0 0
    %760 = vmatpush2.bf16.msra.mxu0 0
    %761 = vmatprep.subr.bf16.mxu0 0
    %762 = vmatpush2.bf16.msra.mxu0 0
    %763 = vmatprep.subr.bf16.mxu0 0
    %764 = vmatpush2.bf16.msra.mxu0 0
    %765 = vmatprep.subr.bf16.mxu0 0
    %766 = vmatpush2.bf16.msra.mxu0 0
    %767 = vmatprep.subr.bf16.mxu0 0
    %768 = vmatpush2.bf16.msra.mxu0 0
    %769 = vmatprep.subr.bf16.mxu0 0
    %770 = vmatpush2.bf16.msra.mxu0 0
    %771 = vmatprep.mubr.bf16.mxu0 0
    %772 = vmatmul.mubr.bf16.gmra.mxu0 %v738
    %v773 = vpop.f32.mrf.mxu0
    %v774 = vadd.f32 0.0, %v773
    %v775 = vpop.f32.mrf.mxu0
    %v776 = vadd.f32 0.0, %v775
    %v777 = vpop.f32.mrf.mxu0
    %v778 = vpop.f32.mrf.mxu0
    %779 = vdwg.mxu0
    %780 = vmatprep.subr.bf16.mxu0 0
    %781 = vmatpush1.bf16.msra.mxu0 %v607
    %782 = vmatprep.subr.bf16.mxu0 0
    %783 = vmatpush1.bf16.msra.mxu0 %v604
    %784 = vmatprep.subr.bf16.mxu0 0
    %785 = vmatpush1.bf16.msra.mxu0 %v601
    %786 = vmatprep.subr.bf16.mxu0 0
    %787 = vmatpush1.bf16.msra.mxu0 %v598
    %788 = vmatprep.subr.bf16.mxu0 0
    %789 = vmatpush1.bf16.msra.mxu0 %v595
    %790 = vmatprep.subr.bf16.mxu0 0
    %791 = vmatpush1.bf16.msra.mxu0 %v592
    %792 = vmatprep.subr.bf16.mxu0 0
    %793 = vmatpush1.bf16.msra.mxu0 %v589
    %794 = vmatprep.subr.bf16.mxu0 0
    %795 = vmatpush1.bf16.msra.mxu0 %v586
    %796 = vmatprep.subr.bf16.mxu0 0
    %797 = vmatpush2.bf16.msra.mxu0 0
    %798 = vmatprep.subr.bf16.mxu0 0
    %799 = vmatpush2.bf16.msra.mxu0 0
    %800 = vmatprep.subr.bf16.mxu0 0
    %801 = vmatpush2.bf16.msra.mxu0 0
    %802 = vmatprep.subr.bf16.mxu0 0
    %803 = vmatpush2.bf16.msra.mxu0 0
    %804 = vmatprep.subr.bf16.mxu0 0
    %805 = vmatpush2.bf16.msra.mxu0 0
    %806 = vmatprep.subr.bf16.mxu0 0
    %807 = vmatpush2.bf16.msra.mxu0 0
    %808 = vmatprep.subr.bf16.mxu0 0
    %809 = vmatpush2.bf16.msra.mxu0 0
    %810 = vmatprep.subr.bf16.mxu0 0
    %811 = vmatpush2.bf16.msra.mxu0 0
    %812 = vmatprep.mubr.bf16.mxu0 0
    %813 = vmatmul.mubr.bf16.gmra.mxu0 %v738
    %v814 = vpop.f32.mrf.mxu0
    %v815 = vadd.f32 0.0, %v814
    %v816 = vpop.f32.mrf.mxu0
    %v817 = vpop.f32.mrf.mxu0
    %v818 = vpop.f32.mrf.mxu0
    %819 = vdwg.mxu0
    %v820 = vadd.f32 %v735, %v774
    %v821 = vadd.f32 %v736, %v776
    %v822 = vxor.u32 %v820, 2147483648
    %v823 = vxor.u32 %v821, 2147483648
    %v824 = vmul.f32 %v822, 1.442695
    %v825 = vpow.pop %v824
    %v826 = vmul.f32 %v823, 1.442695
    %v827 = vpow.pop %v826
    %v828 = vadd.f32 %v825, 1.0
    %v829 = vadd.f32 %v827, 1.0
    %v830 = vrcp.pop %v828
    %v831 = vmul.f32 1.0, %v830
    %v832 = vrcp.pop %v829
    %v833 = vmul.f32 1.0, %v832
    %v834 = vadd.f32 %v815, %v498
    %v835 = vmul.f32 %v831, %v834
    %v836 = vadd.f32 %v737, %v835
    %v837 = vtanh.pop %v836
    %v838 = vsub.f32 %v733, %v837
    %v839 = vmul.f32 %v833, %v838
    %v840 = vadd.f32 %v837, %v839
    %841 = vst [vmem:[#allocation3 + $0x8] sm:$0xff] %v840
    %v842 = vld [vmem:[#allocation2 + $0x30] sm:$0xff]
    %v843 = vld [vmem:[#allocation2 + $0x38] sm:$0xff]
    %v844 = vld [vmem:[#allocation2 + $0x40] sm:$0xff]
    %v845 = vpack.c.bf16 %v840, %v840
    %846 = vmatprep.subr.bf16.mxu0 %v606
    %847 = vmatpush1.bf16.msra.mxu0 %v605
    %848 = vmatprep.subr.bf16.mxu0 %v603
    %849 = vmatpush1.bf16.msra.mxu0 %v602
    %850 = vmatprep.subr.bf16.mxu0 %v600
    %851 = vmatpush1.bf16.msra.mxu0 %v599
    %852 = vmatprep.subr.bf16.mxu0 %v597
    %853 = vmatpush1.bf16.msra.mxu0 %v596
    %854 = vmatprep.subr.bf16.mxu0 %v594
    %855 = vmatpush1.bf16.msra.mxu0 %v593
    %856 = vmatprep.subr.bf16.mxu0 %v591
    %857 = vmatpush1.bf16.msra.mxu0 %v590
    %858 = vmatprep.subr.bf16.mxu0 %v588
    %859 = vmatpush1.bf16.msra.mxu0 %v587
    %860 = vmatprep.subr.bf16.mxu0 %v585
    %861 = vmatpush1.bf16.msra.mxu0 %v584
    %862 = vmatprep.subr.bf16.mxu0 0
    %863 = vmatpush2.bf16.msra.mxu0 0
    %864 = vmatprep.subr.bf16.mxu0 0
    %865 = vmatpush2.bf16.msra.mxu0 0
    %866 = vmatprep.subr.bf16.mxu0 0
    %867 = vmatpush2.bf16.msra.mxu0 0
    %868 = vmatprep.subr.bf16.mxu0 0
    %869 = vmatpush2.bf16.msra.mxu0 0
    %870 = vmatprep.subr.bf16.mxu0 0
    %871 = vmatpush2.bf16.msra.mxu0 0
    %872 = vmatprep.subr.bf16.mxu0 0
    %873 = vmatpush2.bf16.msra.mxu0 0
    %874 = vmatprep.subr.bf16.mxu0 0
    %875 = vmatpush2.bf16.msra.mxu0 0
    %876 = vmatprep.subr.bf16.mxu0 0
    %877 = vmatpush2.bf16.msra.mxu0 0
    %878 = vmatprep.mubr.bf16.mxu0 0
    %879 = vmatmul.mubr.bf16.gmra.mxu0 %v845
    %v880 = vpop.f32.mrf.mxu0
    %v881 = vadd.f32 0.0, %v880
    %v882 = vpop.f32.mrf.mxu0
    %v883 = vadd.f32 0.0, %v882
    %v884 = vpop.f32.mrf.mxu0
    %v885 = vpop.f32.mrf.mxu0
    %886 = vdwg.mxu0
    %887 = vmatprep.subr.bf16.mxu0 0
    %888 = vmatpush1.bf16.msra.mxu0 %v607
    %889 = vmatprep.subr.bf16.mxu0 0
    %890 = vmatpush1.bf16.msra.mxu0 %v604
    %891 = vmatprep.subr.bf16.mxu0 0
    %892 = vmatpush1.bf16.msra.mxu0 %v601
    %893 = vmatprep.subr.bf16.mxu0 0
    %894 = vmatpush1.bf16.msra.mxu0 %v598
    %895 = vmatprep.subr.bf16.mxu0 0
    %896 = vmatpush1.bf16.msra.mxu0 %v595
    %897 = vmatprep.subr.bf16.mxu0 0
    %898 = vmatpush1.bf16.msra.mxu0 %v592
    %899 = vmatprep.subr.bf16.mxu0 0
    %900 = vmatpush1.bf16.msra.mxu0 %v589
    %901 = vmatprep.subr.bf16.mxu0 0
    %902 = vmatpush1.bf16.msra.mxu0 %v586
    %903 = vmatprep.subr.bf16.mxu0 0
    %904 = vmatpush2.bf16.msra.mxu0 0
    %905 = vmatprep.subr.bf16.mxu0 0
    %906 = vmatpush2.bf16.msra.mxu0 0
    %907 = vmatprep.subr.bf16.mxu0 0
    %908 = vmatpush2.bf16.msra.mxu0 0
    %909 = vmatprep.subr.bf16.mxu0 0
    %910 = vmatpush2.bf16.msra.mxu0 0
    %911 = vmatprep.subr.bf16.mxu0 0
    %912 = vmatpush2.bf16.msra.mxu0 0
    %913 = vmatprep.subr.bf16.mxu0 0
    %914 = vmatpush2.bf16.msra.mxu0 0
    %915 = vmatprep.subr.bf16.mxu0 0
    %916 = vmatpush2.bf16.msra.mxu0 0
    %917 = vmatprep.subr.bf16.mxu0 0
    %918 = vmatpush2.bf16.msra.mxu0 0
    %919 = vmatprep.mubr.bf16.mxu0 0
    %920 = vmatmul.mubr.bf16.gmra.mxu0 %v845
    %v921 = vpop.f32.mrf.mxu0
    %v922 = vadd.f32 0.0, %v921
    %v923 = vpop.f32.mrf.mxu0
    %v924 = vpop.f32.mrf.mxu0
    %v925 = vpop.f32.mrf.mxu0
    %926 = vdwg.mxu0
    %v927 = vadd.f32 %v842, %v881
    %v928 = vadd.f32 %v843, %v883
    %v929 = vxor.u32 %v927, 2147483648
    %v930 = vxor.u32 %v928, 2147483648
    %v931 = vmul.f32 %v929, 1.442695
    %v932 = vpow.pop %v931
    %v933 = vmul.f32 %v930, 1.442695
    %v934 = vpow.pop %v933
    %v935 = vadd.f32 %v932, 1.0
    %v936 = vadd.f32 %v934, 1.0
    %v937 = vrcp.pop %v935
    %v938 = vmul.f32 1.0, %v937
    %v939 = vrcp.pop %v936
    %v940 = vmul.f32 1.0, %v939
    %v941 = vadd.f32 %v922, %v498
    %v942 = vmul.f32 %v938, %v941
    %v943 = vadd.f32 %v844, %v942
    %v944 = vtanh.pop %v943
    %v945 = vsub.f32 %v840, %v944
    %v946 = vmul.f32 %v940, %v945
    %v947 = vadd.f32 %v944, %v946
    %948 = vst [vmem:[#allocation3 + $0x10] sm:$0xff] %v947
    %v949 = vld [vmem:[#allocation2 + $0x48] sm:$0xff]
    %v950 = vld [vmem:[#allocation2 + $0x50] sm:$0xff]
    %v951 = vld [vmem:[#allocation2 + $0x58] sm:$0xff]
    %v952 = vpack.c.bf16 %v947, %v947
    %953 = vmatprep.subr.bf16.mxu0 %v606
    %954 = vmatpush1.bf16.msra.mxu0 %v605
    %955 = vmatprep.subr.bf16.mxu0 %v603
    %956 = vmatpush1.bf16.msra.mxu0 %v602
    %957 = vmatprep.subr.bf16.mxu0 %v600
    %958 = vmatpush1.bf16.msra.mxu0 %v599
    %959 = vmatprep.subr.bf16.mxu0 %v597
    %960 = vmatpush1.bf16.msra.mxu0 %v596
    %961 = vmatprep.subr.bf16.mxu0 %v594
    %962 = vmatpush1.bf16.msra.mxu0 %v593
    %963 = vmatprep.subr.bf16.mxu0 %v591
    %964 = vmatpush1.bf16.msra.mxu0 %v590
    %965 = vmatprep.subr.bf16.mxu0 %v588
    %966 = vmatpush1.bf16.msra.mxu0 %v587
    %967 = vmatprep.subr.bf16.mxu0 %v585
    %968 = vmatpush1.bf16.msra.mxu0 %v584
    %969 = vmatprep.subr.bf16.mxu0 0
    %970 = vmatpush2.bf16.msra.mxu0 0
    %971 = vmatprep.subr.bf16.mxu0 0
    %972 = vmatpush2.bf16.msra.mxu0 0
    %973 = vmatprep.subr.bf16.mxu0 0
    %974 = vmatpush2.bf16.msra.mxu0 0
    %975 = vmatprep.subr.bf16.mxu0 0
    %976 = vmatpush2.bf16.msra.mxu0 0
    %977 = vmatprep.subr.bf16.mxu0 0
    %978 = vmatpush2.bf16.msra.mxu0 0
    %979 = vmatprep.subr.bf16.mxu0 0
    %980 = vmatpush2.bf16.msra.mxu0 0
    %981 = vmatprep.subr.bf16.mxu0 0
    %982 = vmatpush2.bf16.msra.mxu0 0
    %983 = vmatprep.subr.bf16.mxu0 0
    %984 = vmatpush2.bf16.msra.mxu0 0
    %985 = vmatprep.mubr.bf16.mxu0 0
    %986 = vmatmul.mubr.bf16.gmra.mxu0 %v952
    %v987 = vpop.f32.mrf.mxu0
    %v988 = vadd.f32 0.0, %v987
    %v989 = vpop.f32.mrf.mxu0
    %v990 = vadd.f32 0.0, %v989
    %v991 = vpop.f32.mrf.mxu0
    %v992 = vpop.f32.mrf.mxu0
    %993 = vdwg.mxu0
    %994 = vmatprep.subr.bf16.mxu0 0
    %995 = vmatpush1.bf16.msra.mxu0 %v607
    %996 = vmatprep.subr.bf16.mxu0 0
    %997 = vmatpush1.bf16.msra.mxu0 %v604
    %998 = vmatprep.subr.bf16.mxu0 0
    %999 = vmatpush1.bf16.msra.mxu0 %v601
    %1000 = vmatprep.subr.bf16.mxu0 0
    %1001 = vmatpush1.bf16.msra.mxu0 %v598
    %1002 = vmatprep.subr.bf16.mxu0 0
    %1003 = vmatpush1.bf16.msra.mxu0 %v595
    %1004 = vmatprep.subr.bf16.mxu0 0
    %1005 = vmatpush1.bf16.msra.mxu0 %v592
    %1006 = vmatprep.subr.bf16.mxu0 0
    %1007 = vmatpush1.bf16.msra.mxu0 %v589
    %1008 = vmatprep.subr.bf16.mxu0 0
    %1009 = vmatpush1.bf16.msra.mxu0 %v586
    %1010 = vmatprep.subr.bf16.mxu0 0
    %1011 = vmatpush2.bf16.msra.mxu0 0
    %1012 = vmatprep.subr.bf16.mxu0 0
    %1013 = vmatpush2.bf16.msra.mxu0 0
    %1014 = vmatprep.subr.bf16.mxu0 0
    %1015 = vmatpush2.bf16.msra.mxu0 0
    %1016 = vmatprep.subr.bf16.mxu0 0
    %1017 = vmatpush2.bf16.msra.mxu0 0
    %1018 = vmatprep.subr.bf16.mxu0 0
    %1019 = vmatpush2.bf16.msra.mxu0 0
    %1020 = vmatprep.subr.bf16.mxu0 0
    %1021 = vmatpush2.bf16.msra.mxu0 0
    %1022 = vmatprep.subr.bf16.mxu0 0
    %1023 = vmatpush2.bf16.msra.mxu0 0
    %1024 = vmatprep.subr.bf16.mxu0 0
    %1025 = vmatpush2.bf16.msra.mxu0 0
    %1026 = vmatprep.mubr.bf16.mxu0 0
    %1027 = vmatmul.mubr.bf16.gmra.mxu0 %v952
    %v1028 = vpop.f32.mrf.mxu0
    %v1029 = vadd.f32 0.0, %v1028
    %v1030 = vpop.f32.mrf.mxu0
    %v1031 = vpop.f32.mrf.mxu0
    %v1032 = vpop.f32.mrf.mxu0
    %1033 = vdwg.mxu0
    %v1034 = vadd.f32 %v949, %v988
    %v1035 = vadd.f32 %v950, %v990
    %v1036 = vxor.u32 %v1034, 2147483648
    %v1037 = vxor.u32 %v1035, 2147483648
    %v1038 = vmul.f32 %v1036, 1.442695
    %v1039 = vpow.pop %v1038
    %v1040 = vmul.f32 %v1037, 1.442695
    %v1041 = vpow.pop %v1040
    %v1042 = vadd.f32 %v1039, 1.0
    %v1043 = vadd.f32 %v1041, 1.0
    %v1044 = vrcp.pop %v1042
    %v1045 = vmul.f32 1.0, %v1044
    %v1046 = vrcp.pop %v1043
    %v1047 = vmul.f32 1.0, %v1046
    %v1048 = vadd.f32 %v1029, %v498
    %v1049 = vmul.f32 %v1045, %v1048
    %v1050 = vadd.f32 %v951, %v1049
    %v1051 = vtanh.pop %v1050
    %v1052 = vsub.f32 %v947, %v1051
    %v1053 = vmul.f32 %v1047, %v1052
    %v1054 = vadd.f32 %v1051, %v1053
    %1055 = vst [vmem:[#allocation3 + $0x18] sm:$0xff] %v1054
    %v1056 = vld [vmem:[#allocation2 + $0x60] sm:$0xff]
    %v1057 = vld [vmem:[#allocation2 + $0x68] sm:$0xff]
    %v1058 = vld [vmem:[#allocation2 + $0x70] sm:$0xff]
    %v1059 = vpack.c.bf16 %v1054, %v1054
    %1060 = vmatprep.subr.bf16.mxu0 %v606
    %1061 = vmatpush1.bf16.msra.mxu0 %v605
    %1062 = vmatprep.subr.bf16.mxu0 %v603
    %1063 = vmatpush1.bf16.msra.mxu0 %v602
    %1064 = vmatprep.subr.bf16.mxu0 %v600
    %1065 = vmatpush1.bf16.msra.mxu0 %v599
    %1066 = vmatprep.subr.bf16.mxu0 %v597
    %1067 = vmatpush1.bf16.msra.mxu0 %v596
    %1068 = vmatprep.subr.bf16.mxu0 %v594
    %1069 = vmatpush1.bf16.msra.mxu0 %v593
    %1070 = vmatprep.subr.bf16.mxu0 %v591
    %1071 = vmatpush1.bf16.msra.mxu0 %v590
    %1072 = vmatprep.subr.bf16.mxu0 %v588
    %1073 = vmatpush1.bf16.msra.mxu0 %v587
    %1074 = vmatprep.subr.bf16.mxu0 %v585
    %1075 = vmatpush1.bf16.msra.mxu0 %v584
    %1076 = vmatprep.subr.bf16.mxu0 0
    %1077 = vmatpush2.bf16.msra.mxu0 0
    %1078 = vmatprep.subr.bf16.mxu0 0
    %1079 = vmatpush2.bf16.msra.mxu0 0
    %1080 = vmatprep.subr.bf16.mxu0 0
    %1081 = vmatpush2.bf16.msra.mxu0 0
    %1082 = vmatprep.subr.bf16.mxu0 0
    %1083 = vmatpush2.bf16.msra.mxu0 0
    %1084 = vmatprep.subr.bf16.mxu0 0
    %1085 = vmatpush2.bf16.msra.mxu0 0
    %1086 = vmatprep.subr.bf16.mxu0 0
    %1087 = vmatpush2.bf16.msra.mxu0 0
    %1088 = vmatprep.subr.bf16.mxu0 0
    %1089 = vmatpush2.bf16.msra.mxu0 0
    %1090 = vmatprep.subr.bf16.mxu0 0
    %1091 = vmatpush2.bf16.msra.mxu0 0
    %1092 = vmatprep.mubr.bf16.mxu0 0
    %1093 = vmatmul.mubr.bf16.gmra.mxu0 %v1059
    %v1094 = vpop.f32.mrf.mxu0
    %v1095 = vadd.f32 0.0, %v1094
    %v1096 = vpop.f32.mrf.mxu0
    %v1097 = vadd.f32 0.0, %v1096
    %v1098 = vpop.f32.mrf.mxu0
    %v1099 = vpop.f32.mrf.mxu0
    %1100 = vdwg.mxu0
    %1101 = vmatprep.subr.bf16.mxu0 0
    %1102 = vmatpush1.bf16.msra.mxu0 %v607
    %1103 = vmatprep.subr.bf16.mxu0 0
    %1104 = vmatpush1.bf16.msra.mxu0 %v604
    %1105 = vmatprep.subr.bf16.mxu0 0
    %1106 = vmatpush1.bf16.msra.mxu0 %v601
    %1107 = vmatprep.subr.bf16.mxu0 0
    %1108 = vmatpush1.bf16.msra.mxu0 %v598
    %1109 = vmatprep.subr.bf16.mxu0 0
    %1110 = vmatpush1.bf16.msra.mxu0 %v595
    %1111 = vmatprep.subr.bf16.mxu0 0
    %1112 = vmatpush1.bf16.msra.mxu0 %v592
    %1113 = vmatprep.subr.bf16.mxu0 0
    %1114 = vmatpush1.bf16.msra.mxu0 %v589
    %1115 = vmatprep.subr.bf16.mxu0 0
    %1116 = vmatpush1.bf16.msra.mxu0 %v586
    %1117 = vmatprep.subr.bf16.mxu0 0
    %1118 = vmatpush2.bf16.msra.mxu0 0
    %1119 = vmatprep.subr.bf16.mxu0 0
    %1120 = vmatpush2.bf16.msra.mxu0 0
    %1121 = vmatprep.subr.bf16.mxu0 0
    %1122 = vmatpush2.bf16.msra.mxu0 0
    %1123 = vmatprep.subr.bf16.mxu0 0
    %1124 = vmatpush2.bf16.msra.mxu0 0
    %1125 = vmatprep.subr.bf16.mxu0 0
    %1126 = vmatpush2.bf16.msra.mxu0 0
    %1127 = vmatprep.subr.bf16.mxu0 0
    %1128 = vmatpush2.bf16.msra.mxu0 0
    %1129 = vmatprep.subr.bf16.mxu0 0
    %1130 = vmatpush2.bf16.msra.mxu0 0
    %1131 = vmatprep.subr.bf16.mxu0 0
    %1132 = vmatpush2.bf16.msra.mxu0 0
    %1133 = vmatprep.mubr.bf16.mxu0 0
    %1134 = vmatmul.mubr.bf16.gmra.mxu0 %v1059
    %v1135 = vpop.f32.mrf.mxu0
    %v1136 = vadd.f32 0.0, %v1135
    %v1137 = vpop.f32.mrf.mxu0
    %v1138 = vpop.f32.mrf.mxu0
    %v1139 = vpop.f32.mrf.mxu0
    %1140 = vdwg.mxu0
    %v1141 = vadd.f32 %v1056, %v1095
    %v1142 = vadd.f32 %v1057, %v1097
    %v1143 = vxor.u32 %v1141, 2147483648
    %v1144 = vxor.u32 %v1142, 2147483648
    %v1145 = vmul.f32 %v1143, 1.442695
    %v1146 = vpow.pop %v1145
    %v1147 = vmul.f32 %v1144, 1.442695
    %v1148 = vpow.pop %v1147
    %v1149 = vadd.f32 %v1146, 1.0
    %v1150 = vadd.f32 %v1148, 1.0
    %v1151 = vrcp.pop %v1149
    %v1152 = vmul.f32 1.0, %v1151
    %v1153 = vrcp.pop %v1150
    %v1154 = vmul.f32 1.0, %v1153
    %v1155 = vadd.f32 %v1136, %v498
    %v1156 = vmul.f32 %v1152, %v1155
    %v1157 = vadd.f32 %v1058, %v1156
    %v1158 = vtanh.pop %v1157
    %v1159 = vsub.f32 %v1054, %v1158
    %v1160 = vmul.f32 %v1154, %v1159
    %v1161 = vadd.f32 %v1158, %v1160
    %1162 = vst [vmem:[#allocation3 + $0x20] sm:$0xff] %v1161
    %v1163 = vld [vmem:[#allocation2 + $0x78] sm:$0xff]
    %v1164 = vld [vmem:[#allocation2 + $0x80] sm:$0xff]
    %v1165 = vld [vmem:[#allocation2 + $0x88] sm:$0xff]
    %v1166 = vpack.c.bf16 %v1161, %v1161
    %1167 = vmatprep.subr.bf16.mxu0 %v606
    %1168 = vmatpush1.bf16.msra.mxu0 %v605
    %1169 = vmatprep.subr.bf16.mxu0 %v603
    %1170 = vmatpush1.bf16.msra.mxu0 %v602
    %1171 = vmatprep.subr.bf16.mxu0 %v600
    %1172 = vmatpush1.bf16.msra.mxu0 %v599
    %1173 = vmatprep.subr.bf16.mxu0 %v597
    %1174 = vmatpush1.bf16.msra.mxu0 %v596
    %1175 = vmatprep.subr.bf16.mxu0 %v594
    %1176 = vmatpush1.bf16.msra.mxu0 %v593
    %1177 = vmatprep.subr.bf16.mxu0 %v591
    %1178 = vmatpush1.bf16.msra.mxu0 %v590
    %1179 = vmatprep.subr.bf16.mxu0 %v588
    %1180 = vmatpush1.bf16.msra.mxu0 %v587
    %1181 = vmatprep.subr.bf16.mxu0 %v585
    %1182 = vmatpush1.bf16.msra.mxu0 %v584
    %1183 = vmatprep.subr.bf16.mxu0 0
    %1184 = vmatpush2.bf16.msra.mxu0 0
    %1185 = vmatprep.subr.bf16.mxu0 0
    %1186 = vmatpush2.bf16.msra.mxu0 0
    %1187 = vmatprep.subr.bf16.mxu0 0
    %1188 = vmatpush2.bf16.msra.mxu0 0
    %1189 = vmatprep.subr.bf16.mxu0 0
    %1190 = vmatpush2.bf16.msra.mxu0 0
    %1191 = vmatprep.subr.bf16.mxu0 0
    %1192 = vmatpush2.bf16.msra.mxu0 0
    %1193 = vmatprep.subr.bf16.mxu0 0
    %1194 = vmatpush2.bf16.msra.mxu0 0
    %1195 = vmatprep.subr.bf16.mxu0 0
    %1196 = vmatpush2.bf16.msra.mxu0 0
    %1197 = vmatprep.subr.bf16.mxu0 0
    %1198 = vmatpush2.bf16.msra.mxu0 0
    %1199 = vmatprep.mubr.bf16.mxu0 0
    %1200 = vmatmul.mubr.bf16.gmra.mxu0 %v1166
    %v1201 = vpop.f32.mrf.mxu0
    %v1202 = vadd.f32 0.0, %v1201
    %v1203 = vpop.f32.mrf.mxu0
    %v1204 = vadd.f32 0.0, %v1203
    %v1205 = vpop.f32.mrf.mxu0
    %v1206 = vpop.f32.mrf.mxu0
    %1207 = vdwg.mxu0
    %1208 = vmatprep.subr.bf16.mxu0 0
    %1209 = vmatpush1.bf16.msra.mxu0 %v607
    %1210 = vmatprep.subr.bf16.mxu0 0
    %1211 = vmatpush1.bf16.msra.mxu0 %v604
    %1212 = vmatprep.subr.bf16.mxu0 0
    %1213 = vmatpush1.bf16.msra.mxu0 %v601
    %1214 = vmatprep.subr.bf16.mxu0 0
    %1215 = vmatpush1.bf16.msra.mxu0 %v598
    %1216 = vmatprep.subr.bf16.mxu0 0
    %1217 = vmatpush1.bf16.msra.mxu0 %v595
    %1218 = vmatprep.subr.bf16.mxu0 0
    %1219 = vmatpush1.bf16.msra.mxu0 %v592
    %1220 = vmatprep.subr.bf16.mxu0 0
    %1221 = vmatpush1.bf16.msra.mxu0 %v589
    %1222 = vmatprep.subr.bf16.mxu0 0
    %1223 = vmatpush1.bf16.msra.mxu0 %v586
    %1224 = vmatprep.subr.bf16.mxu0 0
    %1225 = vmatpush2.bf16.msra.mxu0 0
    %1226 = vmatprep.subr.bf16.mxu0 0
    %1227 = vmatpush2.bf16.msra.mxu0 0
    %1228 = vmatprep.subr.bf16.mxu0 0
    %1229 = vmatpush2.bf16.msra.mxu0 0
    %1230 = vmatprep.subr.bf16.mxu0 0
    %1231 = vmatpush2.bf16.msra.mxu0 0
    %1232 = vmatprep.subr.bf16.mxu0 0
    %1233 = vmatpush2.bf16.msra.mxu0 0
    %1234 = vmatprep.subr.bf16.mxu0 0
    %1235 = vmatpush2.bf16.msra.mxu0 0
    %1236 = vmatprep.subr.bf16.mxu0 0
    %1237 = vmatpush2.bf16.msra.mxu0 0
    %1238 = vmatprep.subr.bf16.mxu0 0
    %1239 = vmatpush2.bf16.msra.mxu0 0
    %1240 = vmatprep.mubr.bf16.mxu0 0
    %1241 = vmatmul.mubr.bf16.gmra.mxu0 %v1166
    %v1242 = vpop.f32.mrf.mxu0
    %v1243 = vadd.f32 0.0, %v1242
    %v1244 = vpop.f32.mrf.mxu0
    %v1245 = vpop.f32.mrf.mxu0
    %v1246 = vpop.f32.mrf.mxu0
    %1247 = vdwg.mxu0
    %v1248 = vadd.f32 %v1163, %v1202
    %v1249 = vadd.f32 %v1164, %v1204
    %v1250 = vxor.u32 %v1248, 2147483648
    %v1251 = vxor.u32 %v1249, 2147483648
    %v1252 = vmul.f32 %v1250, 1.442695
    %v1253 = vpow.pop %v1252
    %v1254 = vmul.f32 %v1251, 1.442695
    %v1255 = vpow.pop %v1254
    %v1256 = vadd.f32 %v1253, 1.0
    %v1257 = vadd.f32 %v1255, 1.0
    %v1258 = vrcp.pop %v1256
    %v1259 = vmul.f32 1.0, %v1258
    %v1260 = vrcp.pop %v1257
    %v1261 = vmul.f32 1.0, %v1260
    %v1262 = vadd.f32 %v1243, %v498
    %v1263 = vmul.f32 %v1259, %v1262
    %v1264 = vadd.f32 %v1165, %v1263
    %v1265 = vtanh.pop %v1264
    %v1266 = vsub.f32 %v1161, %v1265
    %v1267 = vmul.f32 %v1261, %v1266
    %v1268 = vadd.f32 %v1265, %v1267
    %1269 = vst [vmem:[#allocation3 + $0x28] sm:$0xff] %v1268
    %v1270 = vld [vmem:[#allocation2 + $0x90] sm:$0xff]
    %v1271 = vld [vmem:[#allocation2 + $0x98] sm:$0xff]
    %v1272 = vld [vmem:[#allocation2 + $0xa0] sm:$0xff]
    %v1273 = vpack.c.bf16 %v1268, %v1268
    %1274 = vmatprep.subr.bf16.mxu0 %v606
    %1275 = vmatpush1.bf16.msra.mxu0 %v605
    %1276 = vmatprep.subr.bf16.mxu0 %v603
    %1277 = vmatpush1.bf16.msra.mxu0 %v602
    %1278 = vmatprep.subr.bf16.mxu0 %v600
    %1279 = vmatpush1.bf16.msra.mxu0 %v599
    %1280 = vmatprep.subr.bf16.mxu0 %v597
    %1281 = vmatpush1.bf16.msra.mxu0 %v596
    %1282 = vmatprep.subr.bf16.mxu0 %v594
    %1283 = vmatpush1.bf16.msra.mxu0 %v593
    %1284 = vmatprep.subr.bf16.mxu0 %v591
    %1285 = vmatpush1.bf16.msra.mxu0 %v590
    %1286 = vmatprep.subr.bf16.mxu0 %v588
    %1287 = vmatpush1.bf16.msra.mxu0 %v587
    %1288 = vmatprep.subr.bf16.mxu0 %v585
    %1289 = vmatpush1.bf16.msra.mxu0 %v584
    %1290 = vmatprep.subr.bf16.mxu0 0
    %1291 = vmatpush2.bf16.msra.mxu0 0
    %1292 = vmatprep.subr.bf16.mxu0 0
    %1293 = vmatpush2.bf16.msra.mxu0 0
    %1294 = vmatprep.subr.bf16.mxu0 0
    %1295 = vmatpush2.bf16.msra.mxu0 0
    %1296 = vmatprep.subr.bf16.mxu0 0
    %1297 = vmatpush2.bf16.msra.mxu0 0
    %1298 = vmatprep.subr.bf16.mxu0 0
    %1299 = vmatpush2.bf16.msra.mxu0 0
    %1300 = vmatprep.subr.bf16.mxu0 0
    %1301 = vmatpush2.bf16.msra.mxu0 0
    %1302 = vmatprep.subr.bf16.mxu0 0
    %1303 = vmatpush2.bf16.msra.mxu0 0
    %1304 = vmatprep.subr.bf16.mxu0 0
    %1305 = vmatpush2.bf16.msra.mxu0 0
    %1306 = vmatprep.mubr.bf16.mxu0 0
    %1307 = vmatmul.mubr.bf16.gmra.mxu0 %v1273
    %v1308 = vpop.f32.mrf.mxu0
    %v1309 = vadd.f32 0.0, %v1308
    %v1310 = vpop.f32.mrf.mxu0
    %v1311 = vadd.f32 0.0, %v1310
    %v1312 = vpop.f32.mrf.mxu0
    %v1313 = vpop.f32.mrf.mxu0
    %1314 = vdwg.mxu0
    %1315 = vmatprep.subr.bf16.mxu0 0
    %1316 = vmatpush1.bf16.msra.mxu0 %v607
    %1317 = vmatprep.subr.bf16.mxu0 0
    %1318 = vmatpush1.bf16.msra.mxu0 %v604
    %1319 = vmatprep.subr.bf16.mxu0 0
    %1320 = vmatpush1.bf16.msra.mxu0 %v601
    %1321 = vmatprep.subr.bf16.mxu0 0
    %1322 = vmatpush1.bf16.msra.mxu0 %v598
    %1323 = vmatprep.subr.bf16.mxu0 0
    %1324 = vmatpush1.bf16.msra.mxu0 %v595
    %1325 = vmatprep.subr.bf16.mxu0 0
    %1326 = vmatpush1.bf16.msra.mxu0 %v592
    %1327 = vmatprep.subr.bf16.mxu0 0
    %1328 = vmatpush1.bf16.msra.mxu0 %v589
    %1329 = vmatprep.subr.bf16.mxu0 0
    %1330 = vmatpush1.bf16.msra.mxu0 %v586
    %1331 = vmatprep.subr.bf16.mxu0 0
    %1332 = vmatpush2.bf16.msra.mxu0 0
    %1333 = vmatprep.subr.bf16.mxu0 0
    %1334 = vmatpush2.bf16.msra.mxu0 0
    %1335 = vmatprep.subr.bf16.mxu0 0
    %1336 = vmatpush2.bf16.msra.mxu0 0
    %1337 = vmatprep.subr.bf16.mxu0 0
    %1338 = vmatpush2.bf16.msra.mxu0 0
    %1339 = vmatprep.subr.bf16.mxu0 0
    %1340 = vmatpush2.bf16.msra.mxu0 0
    %1341 = vmatprep.subr.bf16.mxu0 0
    %1342 = vmatpush2.bf16.msra.mxu0 0
    %1343 = vmatprep.subr.bf16.mxu0 0
    %1344 = vmatpush2.bf16.msra.mxu0 0
    %1345 = vmatprep.subr.bf16.mxu0 0
    %1346 = vmatpush2.bf16.msra.mxu0 0
    %1347 = vmatprep.mubr.bf16.mxu0 0
    %1348 = vmatmul.mubr.bf16.gmra.mxu0 %v1273
    %v1349 = vpop.f32.mrf.mxu0
    %v1350 = vadd.f32 0.0, %v1349
    %v1351 = vpop.f32.mrf.mxu0
    %v1352 = vpop.f32.mrf.mxu0
    %v1353 = vpop.f32.mrf.mxu0
    %1354 = vdwg.mxu0
    %v1355 = vadd.f32 %v1270, %v1309
    %v1356 = vadd.f32 %v1271, %v1311
    %v1357 = vxor.u32 %v1355, 2147483648
    %v1358 = vxor.u32 %v1356, 2147483648
    %v1359 = vmul.f32 %v1357, 1.442695
    %v1360 = vpow.pop %v1359
    %v1361 = vmul.f32 %v1358, 1.442695
    %v1362 = vpow.pop %v1361
    %v1363 = vadd.f32 %v1360, 1.0
    %v1364 = vadd.f32 %v1362, 1.0
    %v1365 = vrcp.pop %v1363
    %v1366 = vmul.f32 1.0, %v1365
    %v1367 = vrcp.pop %v1364
    %v1368 = vmul.f32 1.0, %v1367
    %v1369 = vadd.f32 %v1350, %v498
    %v1370 = vmul.f32 %v1366, %v1369
    %v1371 = vadd.f32 %v1272, %v1370
    %v1372 = vtanh.pop %v1371
    %v1373 = vsub.f32 %v1268, %v1372
    %v1374 = vmul.f32 %v1368, %v1373
    %v1375 = vadd.f32 %v1372, %v1374
    %1376 = vst [vmem:[#allocation3 + $0x30] sm:$0xff] %v1375
    %v1377 = vld [vmem:[#allocation2 + $0xa8] sm:$0xff]
    %v1378 = vld [vmem:[#allocation2 + $0xb0] sm:$0xff]
    %v1379 = vld [vmem:[#allocation2 + $0xb8] sm:$0xff]
    %v1380 = vpack.c.bf16 %v1375, %v1375
    %1381 = vmatprep.subr.bf16.mxu0 %v606
    %1382 = vmatpush1.bf16.msra.mxu0 %v605
    %1383 = vmatprep.subr.bf16.mxu0 %v603
    %1384 = vmatpush1.bf16.msra.mxu0 %v602
    %1385 = vmatprep.subr.bf16.mxu0 %v600
    %1386 = vmatpush1.bf16.msra.mxu0 %v599
    %1387 = vmatprep.subr.bf16.mxu0 %v597
    %1388 = vmatpush1.bf16.msra.mxu0 %v596
    %1389 = vmatprep.subr.bf16.mxu0 %v594
    %1390 = vmatpush1.bf16.msra.mxu0 %v593
    %1391 = vmatprep.subr.bf16.mxu0 %v591
    %1392 = vmatpush1.bf16.msra.mxu0 %v590
    %1393 = vmatprep.subr.bf16.mxu0 %v588
    %1394 = vmatpush1.bf16.msra.mxu0 %v587
    %1395 = vmatprep.subr.bf16.mxu0 %v585
    %1396 = vmatpush1.bf16.msra.mxu0 %v584
    %1397 = vmatprep.subr.bf16.mxu0 0
    %1398 = vmatpush2.bf16.msra.mxu0 0
    %1399 = vmatprep.subr.bf16.mxu0 0
    %1400 = vmatpush2.bf16.msra.mxu0 0
    %1401 = vmatprep.subr.bf16.mxu0 0
    %1402 = vmatpush2.bf16.msra.mxu0 0
    %1403 = vmatprep.subr.bf16.mxu0 0
    %1404 = vmatpush2.bf16.msra.mxu0 0
    %1405 = vmatprep.subr.bf16.mxu0 0
    %1406 = vmatpush2.bf16.msra.mxu0 0
    %1407 = vmatprep.subr.bf16.mxu0 0
    %1408 = vmatpush2.bf16.msra.mxu0 0
    %1409 = vmatprep.subr.bf16.mxu0 0
    %1410 = vmatpush2.bf16.msra.mxu0 0
    %1411 = vmatprep.subr.bf16.mxu0 0
    %1412 = vmatpush2.bf16.msra.mxu0 0
    %1413 = vmatprep.mubr.bf16.mxu0 0
    %1414 = vmatmul.mubr.bf16.gmra.mxu0 %v1380
    %v1415 = vpop.f32.mrf.mxu0
    %v1416 = vadd.f32 0.0, %v1415
    %v1417 = vpop.f32.mrf.mxu0
    %v1418 = vadd.f32 0.0, %v1417
    %v1419 = vpop.f32.mrf.mxu0
    %v1420 = vpop.f32.mrf.mxu0
    %1421 = vdwg.mxu0
    %1422 = vmatprep.subr.bf16.mxu0 0
    %1423 = vmatpush1.bf16.msra.mxu0 %v607
    %1424 = vmatprep.subr.bf16.mxu0 0
    %1425 = vmatpush1.bf16.msra.mxu0 %v604
    %1426 = vmatprep.subr.bf16.mxu0 0
    %1427 = vmatpush1.bf16.msra.mxu0 %v601
    %1428 = vmatprep.subr.bf16.mxu0 0
    %1429 = vmatpush1.bf16.msra.mxu0 %v598
    %1430 = vmatprep.subr.bf16.mxu0 0
    %1431 = vmatpush1.bf16.msra.mxu0 %v595
    %1432 = vmatprep.subr.bf16.mxu0 0
    %1433 = vmatpush1.bf16.msra.mxu0 %v592
    %1434 = vmatprep.subr.bf16.mxu0 0
    %1435 = vmatpush1.bf16.msra.mxu0 %v589
    %1436 = vmatprep.subr.bf16.mxu0 0
    %1437 = vmatpush1.bf16.msra.mxu0 %v586
    %1438 = vmatprep.subr.bf16.mxu0 0
    %1439 = vmatpush2.bf16.msra.mxu0 0
    %1440 = vmatprep.subr.bf16.mxu0 0
    %1441 = vmatpush2.bf16.msra.mxu0 0
    %1442 = vmatprep.subr.bf16.mxu0 0
    %1443 = vmatpush2.bf16.msra.mxu0 0
    %1444 = vmatprep.subr.bf16.mxu0 0
    %1445 = vmatpush2.bf16.msra.mxu0 0
    %1446 = vmatprep.subr.bf16.mxu0 0
    %1447 = vmatpush2.bf16.msra.mxu0 0
    %1448 = vmatprep.subr.bf16.mxu0 0
    %1449 = vmatpush2.bf16.msra.mxu0 0
    %1450 = vmatprep.subr.bf16.mxu0 0
    %1451 = vmatpush2.bf16.msra.mxu0 0
    %1452 = vmatprep.subr.bf16.mxu0 0
    %1453 = vmatpush2.bf16.msra.mxu0 0
    %1454 = vmatprep.mubr.bf16.mxu0 0
    %1455 = vmatmul.mubr.bf16.gmra.mxu0 %v1380
    %v1456 = vpop.f32.mrf.mxu0
    %v1457 = vadd.f32 0.0, %v1456
    %v1458 = vpop.f32.mrf.mxu0
    %v1459 = vpop.f32.mrf.mxu0
    %v1460 = vpop.f32.mrf.mxu0
    %1461 = vdwg.mxu0
    %v1462 = vadd.f32 %v1377, %v1416
    %v1463 = vadd.f32 %v1378, %v1418
    %v1464 = vxor.u32 %v1462, 2147483648
    %v1465 = vxor.u32 %v1463, 2147483648
    %v1466 = vmul.f32 %v1464, 1.442695
    %v1467 = vpow.pop %v1466
    %v1468 = vmul.f32 %v1465, 1.442695
    %v1469 = vpow.pop %v1468
    %v1470 = vadd.f32 %v1467, 1.0
    %v1471 = vadd.f32 %v1469, 1.0
    %v1472 = vrcp.pop %v1470
    %v1473 = vmul.f32 1.0, %v1472
    %v1474 = vrcp.pop %v1471
    %v1475 = vmul.f32 1.0, %v1474
    %v1476 = vadd.f32 %v1457, %v498
    %v1477 = vmul.f32 %v1473, %v1476
    %v1478 = vadd.f32 %v1379, %v1477
    %v1479 = vtanh.pop %v1478
    %v1480 = vsub.f32 %v1375, %v1479
    %v1481 = vmul.f32 %v1475, %v1480
    %v1482 = vadd.f32 %v1479, %v1481
    %1483 = vst [vmem:[#allocation3 + $0x38] sm:$0xff] %v1482
    %v1484 = vld [vmem:[#allocation3] sm:$0xff]
    %v1485 = vld [vmem:[#allocation3 + $0x8] sm:$0xff]
    %v1486 = vld [vmem:[#allocation3 + $0x10] sm:$0xff]
    %v1487 = vld [vmem:[#allocation3 + $0x18] sm:$0xff]
    %v1488 = vld [vmem:[#allocation3 + $0x20] sm:$0xff]
    %v1489 = vld [vmem:[#allocation3 + $0x28] sm:$0xff]
    %v1490 = vld [vmem:[#allocation3 + $0x30] sm:$0xff]
    %v1491 = vld [vmem:[#allocation3 + $0x38] sm:$0xff]
    %v1492 = vpack.c.bf16 %v1485, %v1484
    %v1493 = vpack.c.bf16 %v1487, %v1486
    %v1494 = vpack.c.bf16 %v1489, %v1488
    %v1495 = vpack.c.bf16 %v1491, %v1490
    %v1496 = vld [vmem:[#allocation14] sm:$0xff]
    %v1497 = vld [vmem:[#allocation14 + $0x8] sm:$0xf]
    %v1498 = vld [vmem:[#allocation14 + $0xc] sm:$0xff]
    %v1499 = vld [vmem:[#allocation14 + $0x14] sm:$0xf]
    %v1500 = vld [vmem:[#allocation14 + $0x18] sm:$0xff]
    %v1501 = vld [vmem:[#allocation14 + $0x20] sm:$0xf]
    %v1502 = vld [vmem:[#allocation14 + $0x24] sm:$0xff]
    %v1503 = vld [vmem:[#allocation14 + $0x2c] sm:$0xf]
    %v1504 = vld [vmem:[#allocation14 + $0x30] sm:$0xff]
    %v1505 = vld [vmem:[#allocation14 + $0x38] sm:$0xf]
    %v1506 = vld [vmem:[#allocation14 + $0x3c] sm:$0xff]
    %v1507 = vld [vmem:[#allocation14 + $0x44] sm:$0xf]
    %v1508 = vld [vmem:[#allocation14 + $0x48] sm:$0xff]
    %v1509 = vld [vmem:[#allocation14 + $0x50] sm:$0xf]
    %v1510 = vld [vmem:[#allocation14 + $0x54] sm:$0xff]
    %v1511 = vld [vmem:[#allocation14 + $0x5c] sm:$0xf]
    %v1512 = vld [vmem:[#allocation14 + $0x60] sm:$0xff]
    %v1513 = vld [vmem:[#allocation14 + $0x68] sm:$0xf]
    %v1514 = vld [vmem:[#allocation14 + $0x6c] sm:$0xff]
    %v1515 = vld [vmem:[#allocation14 + $0x74] sm:$0xf]
    %v1516 = vld [vmem:[#allocation14 + $0x78] sm:$0xff]
    %v1517 = vld [vmem:[#allocation14 + $0x80] sm:$0xf]
    %v1518 = vld [vmem:[#allocation14 + $0x84] sm:$0xff]
    %v1519 = vld [vmem:[#allocation14 + $0x8c] sm:$0xf]
    %v1520 = vld [vmem:[#allocation14 + $0x90] sm:$0xff]
    %v1521 = vld [vmem:[#allocation14 + $0x98] sm:$0xf]
    %v1522 = vld [vmem:[#allocation14 + $0x9c] sm:$0xff]
    %v1523 = vld [vmem:[#allocation14 + $0xa4] sm:$0xf]
    %v1524 = vld [vmem:[#allocation14 + $0xa8] sm:$0xff]
    %v1525 = vld [vmem:[#allocation14 + $0xb0] sm:$0xf]
    %v1526 = vld [vmem:[#allocation14 + $0xb4] sm:$0xff]
    %v1527 = vld [vmem:[#allocation14 + $0xbc] sm:$0xf]
    %v1528 = vpack.c.bf16 %v1490, %v1491
    %v1529 = vpack.c.bf16 %v1488, %v1489
    %v1530 = vpack.c.bf16 %v1486, %v1487
    %v1531 = vpack.c.bf16 %v1484, %v1485
    %v1532 = vld [vmem:[#allocation15] sm:$0xff]
    %v1533 = vld [vmem:[#allocation15 + $0x8] sm:$0xf]
    %v1534 = vld [vmem:[#allocation15 + $0xc] sm:$0xff]
    %v1535 = vld [vmem:[#allocation15 + $0x14] sm:$0xf]
    %v1536 = vld [vmem:[#allocation15 + $0x18] sm:$0xff]
    %v1537 = vld [vmem:[#allocation15 + $0x20] sm:$0xf]
    %v1538 = vld [vmem:[#allocation15 + $0x24] sm:$0xff]
    %v1539 = vld [vmem:[#allocation15 + $0x2c] sm:$0xf]
    %v1540 = vld [vmem:[#allocation15 + $0x30] sm:$0xff]
    %v1541 = vld [vmem:[#allocation15 + $0x38] sm:$0xf]
    %v1542 = vld [vmem:[#allocation15 + $0x3c] sm:$0xff]
    %v1543 = vld [vmem:[#allocation15 + $0x44] sm:$0xf]
    %v1544 = vld [vmem:[#allocation15 + $0x48] sm:$0xff]
    %v1545 = vld [vmem:[#allocation15 + $0x50] sm:$0xf]
    %v1546 = vld [vmem:[#allocation15 + $0x54] sm:$0xff]
    %v1547 = vld [vmem:[#allocation15 + $0x5c] sm:$0xf]
    %v1548 = vld [vmem:[#allocation15 + $0x60] sm:$0xff]
    %v1549 = vld [vmem:[#allocation15 + $0x68] sm:$0xf]
    %v1550 = vld [vmem:[#allocation15 + $0x6c] sm:$0xff]
    %v1551 = vld [vmem:[#allocation15 + $0x74] sm:$0xf]
    %v1552 = vld [vmem:[#allocation15 + $0x78] sm:$0xff]
    %v1553 = vld [vmem:[#allocation15 + $0x80] sm:$0xf]
    %v1554 = vld [vmem:[#allocation15 + $0x84] sm:$0xff]
    %v1555 = vld [vmem:[#allocation15 + $0x8c] sm:$0xf]
    %v1556 = vld [vmem:[#allocation15 + $0x90] sm:$0xff]
    %v1557 = vld [vmem:[#allocation15 + $0x98] sm:$0xf]
    %v1558 = vld [vmem:[#allocation15 + $0x9c] sm:$0xff]
    %v1559 = vld [vmem:[#allocation15 + $0xa4] sm:$0xf]
    %v1560 = vld [vmem:[#allocation15 + $0xa8] sm:$0xff]
    %v1561 = vld [vmem:[#allocation15 + $0xb0] sm:$0xf]
    %v1562 = vld [vmem:[#allocation15 + $0xb4] sm:$0xff]
    %v1563 = vld [vmem:[#allocation15 + $0xbc] sm:$0xf]
    %v1596 = vunpack.c.l.b16 %v1532
    %v1597 = vunpack.c.h.b16 %v1532
    %v1598 = vunpack.c.l.b16 %v1533
    %v1599 = vunpack.c.l.b16 %v1534
    %v1600 = vunpack.c.h.b16 %v1534
    %v1601 = vunpack.c.l.b16 %v1535
    %v1602 = vunpack.c.l.b16 %v1536
    %v1603 = vunpack.c.h.b16 %v1536
    %v1604 = vunpack.c.l.b16 %v1537
    %v1605 = vunpack.c.l.b16 %v1538
    %v1606 = vunpack.c.h.b16 %v1538
    %v1607 = vunpack.c.l.b16 %v1539
    %v1608 = vunpack.c.l.b16 %v1540
    %v1609 = vunpack.c.h.b16 %v1540
    %v1610 = vunpack.c.l.b16 %v1541
    %v1611 = vunpack.c.l.b16 %v1542
    %v1612 = vunpack.c.h.b16 %v1542
    %v1613 = vunpack.c.l.b16 %v1543
    %v1614 = vunpack.c.l.b16 %v1544
    %v1615 = vunpack.c.h.b16 %v1544
    %v1616 = vunpack.c.l.b16 %v1545
    %v1617 = vunpack.c.l.b16 %v1546
    %v1618 = vunpack.c.h.b16 %v1546
    %v1619 = vunpack.c.l.b16 %v1547
    %v1620 = vunpack.c.l.b16 %v1548
    %v1621 = vunpack.c.h.b16 %v1548
    %v1622 = vunpack.c.l.b16 %v1549
    %v1623 = vunpack.c.l.b16 %v1550
    %v1624 = vunpack.c.h.b16 %v1550
    %v1625 = vunpack.c.l.b16 %v1551
    %v1626 = vunpack.c.l.b16 %v1552
    %v1627 = vunpack.c.h.b16 %v1552
    %v1628 = vunpack.c.l.b16 %v1553
    %v1629 = vunpack.c.l.b16 %v1554
    %v1630 = vunpack.c.h.b16 %v1554
    %v1631 = vunpack.c.l.b16 %v1555
    %v1632 = vunpack.c.l.b16 %v1556
    %v1633 = vunpack.c.h.b16 %v1556
    %v1634 = vunpack.c.l.b16 %v1557
    %v1635 = vunpack.c.l.b16 %v1558
    %v1636 = vunpack.c.h.b16 %v1558
    %v1637 = vunpack.c.l.b16 %v1559
    %v1638 = vunpack.c.l.b16 %v1560
    %v1639 = vunpack.c.h.b16 %v1560
    %v1640 = vunpack.c.l.b16 %v1561
    %v1641 = vunpack.c.l.b16 %v1562
    %v1642 = vunpack.c.h.b16 %v1562
    %v1643 = vunpack.c.l.b16 %v1563
    %v1644 = vpack.c.b16 %v1599, %v1596
    %v1645 = vpack.c.b16 %v1600, %v1597
    %v1646 = vpack.c.b16 %v1601, %v1598
    %v1647 = vpack.c.b16 %v1605, %v1602
    %v1648 = vpack.c.b16 %v1606, %v1603
    %v1649 = vpack.c.b16 %v1607, %v1604
    %v1650 = vpack.c.b16 %v1611, %v1608
    %v1651 = vpack.c.b16 %v1612, %v1609
    %v1652 = vpack.c.b16 %v1613, %v1610
    %v1653 = vpack.c.b16 %v1617, %v1614
    %v1654 = vpack.c.b16 %v1618, %v1615
    %v1655 = vpack.c.b16 %v1619, %v1616
    %v1656 = vpack.c.b16 %v1623, %v1620
    %v1657 = vpack.c.b16 %v1624, %v1621
    %v1658 = vpack.c.b16 %v1625, %v1622
    %v1659 = vpack.c.b16 %v1629, %v1626
    %v1660 = vpack.c.b16 %v1630, %v1627
    %v1661 = vpack.c.b16 %v1631, %v1628
    %v1662 = vpack.c.b16 %v1635, %v1632
    %v1663 = vpack.c.b16 %v1636, %v1633
    %v1664 = vpack.c.b16 %v1637, %v1634
    %v1665 = vpack.c.b16 %v1641, %v1638
    %v1666 = vpack.c.b16 %v1642, %v1639
    %v1667 = vpack.c.b16 %v1643, %v1640
    %1692 = vmatprep.subr.bf16.mxu0 %v1666
    %1693 = vmatpush1.bf16.msra.mxu0 %v1665
    %1694 = vmatprep.subr.bf16.mxu0 %v1663
    %1695 = vmatpush1.bf16.msra.mxu0 %v1662
    %1696 = vmatprep.subr.bf16.mxu0 %v1660
    %1697 = vmatpush1.bf16.msra.mxu0 %v1659
    %1698 = vmatprep.subr.bf16.mxu0 %v1657
    %1699 = vmatpush1.bf16.msra.mxu0 %v1656
    %1700 = vmatprep.subr.bf16.mxu0 %v1654
    %1701 = vmatpush1.bf16.msra.mxu0 %v1653
    %1702 = vmatprep.subr.bf16.mxu0 %v1651
    %1703 = vmatpush1.bf16.msra.mxu0 %v1650
    %1704 = vmatprep.subr.bf16.mxu0 %v1648
    %1705 = vmatpush1.bf16.msra.mxu0 %v1647
    %1706 = vmatprep.subr.bf16.mxu0 %v1645
    %1707 = vmatpush1.bf16.msra.mxu0 %v1644
    %1708 = vmatprep.subr.bf16.mxu0 0
    %1709 = vmatpush2.bf16.msra.mxu0 0
    %1710 = vmatprep.subr.bf16.mxu0 0
    %1711 = vmatpush2.bf16.msra.mxu0 0
    %1712 = vmatprep.subr.bf16.mxu0 0
    %1713 = vmatpush2.bf16.msra.mxu0 0
    %1714 = vmatprep.subr.bf16.mxu0 0
    %1715 = vmatpush2.bf16.msra.mxu0 0
    %1716 = vmatprep.subr.bf16.mxu0 0
    %1717 = vmatpush2.bf16.msra.mxu0 0
    %1718 = vmatprep.subr.bf16.mxu0 0
    %1719 = vmatpush2.bf16.msra.mxu0 0
    %1720 = vmatprep.subr.bf16.mxu0 0
    %1721 = vmatpush2.bf16.msra.mxu0 0
    %1722 = vmatprep.subr.bf16.mxu0 0
    %1723 = vmatpush2.bf16.msra.mxu0 0
    %1724 = vmatprep.mubr.bf16.mxu0 0
    %1725 = vmatmul.mubr.bf16.gmra.mxu0 %v1528
    %v1726 = vpop.f32.mrf.mxu0
    %v1727 = vadd.f32 0.0, %v1726
    %v1728 = vpop.f32.mrf.mxu0
    %v1729 = vadd.f32 0.0, %v1728
    %v1730 = vpop.f32.mrf.mxu0
    %v1731 = vadd.f32 0.0, %v1730
    %v1732 = vpop.f32.mrf.mxu0
    %v1733 = vadd.f32 0.0, %v1732
    %1734 = vmatprep.mubr.bf16.mxu0 0
    %1735 = vmatmul.mubr.bf16.gmra.mxu0 %v1529
    %v1736 = vpop.f32.mrf.mxu0
    %v1737 = vadd.f32 0.0, %v1736
    %v1738 = vpop.f32.mrf.mxu0
    %v1739 = vadd.f32 0.0, %v1738
    %v1740 = vpop.f32.mrf.mxu0
    %v1741 = vadd.f32 0.0, %v1740
    %v1742 = vpop.f32.mrf.mxu0
    %v1743 = vadd.f32 0.0, %v1742
    %1744 = vmatprep.mubr.bf16.mxu0 0
    %1745 = vmatmul.mubr.bf16.gmra.mxu0 %v1530
    %v1746 = vpop.f32.mrf.mxu0
    %v1747 = vadd.f32 0.0, %v1746
    %v1748 = vpop.f32.mrf.mxu0
    %v1749 = vadd.f32 0.0, %v1748
    %v1750 = vpop.f32.mrf.mxu0
    %v1751 = vadd.f32 0.0, %v1750
    %v1752 = vpop.f32.mrf.mxu0
    %v1753 = vadd.f32 0.0, %v1752
    %1754 = vmatprep.mubr.bf16.mxu0 0
    %1755 = vmatmul.mubr.bf16.gmra.mxu0 %v1531
    %v1756 = vpop.f32.mrf.mxu0
    %v1757 = vadd.f32 0.0, %v1756
    %v1758 = vpop.f32.mrf.mxu0
    %v1759 = vadd.f32 0.0, %v1758
    %v1760 = vpop.f32.mrf.mxu0
    %v1761 = vadd.f32 0.0, %v1760
    %v1762 = vpop.f32.mrf.mxu0
    %v1763 = vadd.f32 0.0, %v1762
    %1764 = vdwg.mxu0
    %1765 = vmatprep.subr.bf16.mxu0 0
    %1766 = vmatpush1.bf16.msra.mxu0 %v1667
    %1767 = vmatprep.subr.bf16.mxu0 0
    %1768 = vmatpush1.bf16.msra.mxu0 %v1664
    %1769 = vmatprep.subr.bf16.mxu0 0
    %1770 = vmatpush1.bf16.msra.mxu0 %v1661
    %1771 = vmatprep.subr.bf16.mxu0 0
    %1772 = vmatpush1.bf16.msra.mxu0 %v1658
    %1773 = vmatprep.subr.bf16.mxu0 0
    %1774 = vmatpush1.bf16.msra.mxu0 %v1655
    %1775 = vmatprep.subr.bf16.mxu0 0
    %1776 = vmatpush1.bf16.msra.mxu0 %v1652
    %1777 = vmatprep.subr.bf16.mxu0 0
    %1778 = vmatpush1.bf16.msra.mxu0 %v1649
    %1779 = vmatprep.subr.bf16.mxu0 0
    %1780 = vmatpush1.bf16.msra.mxu0 %v1646
    %1781 = vmatprep.subr.bf16.mxu0 0
    %1782 = vmatpush2.bf16.msra.mxu0 0
    %1783 = vmatprep.subr.bf16.mxu0 0
    %1784 = vmatpush2.bf16.msra.mxu0 0
    %1785 = vmatprep.subr.bf16.mxu0 0
    %1786 = vmatpush2.bf16.msra.mxu0 0
    %1787 = vmatprep.subr.bf16.mxu0 0
    %1788 = vmatpush2.bf16.msra.mxu0 0
    %1789 = vmatprep.subr.bf16.mxu0 0
    %1790 = vmatpush2.bf16.msra.mxu0 0
    %1791 = vmatprep.subr.bf16.mxu0 0
    %1792 = vmatpush2.bf16.msra.mxu0 0
    %1793 = vmatprep.subr.bf16.mxu0 0
    %1794 = vmatpush2.bf16.msra.mxu0 0
    %1795 = vmatprep.subr.bf16.mxu0 0
    %1796 = vmatpush2.bf16.msra.mxu0 0
    %1797 = vmatprep.mubr.bf16.mxu0 0
    %1798 = vmatmul.mubr.bf16.gmra.mxu0 %v1528
    %v1799 = vpop.f32.mrf.mxu0
    %v1800 = vadd.f32 0.0, %v1799
    %v1801 = vpop.f32.mrf.mxu0
    %v1802 = vpop.f32.mrf.mxu0
    %v1803 = vadd.f32 0.0, %v1802
    %v1804 = vpop.f32.mrf.mxu0
    %1805 = vmatprep.mubr.bf16.mxu0 0
    %1806 = vmatmul.mubr.bf16.gmra.mxu0 %v1529
    %v1807 = vpop.f32.mrf.mxu0
    %v1808 = vadd.f32 0.0, %v1807
    %v1809 = vpop.f32.mrf.mxu0
    %v1810 = vpop.f32.mrf.mxu0
    %v1811 = vadd.f32 0.0, %v1810
    %v1812 = vpop.f32.mrf.mxu0
    %1813 = vmatprep.mubr.bf16.mxu0 0
    %1814 = vmatmul.mubr.bf16.gmra.mxu0 %v1530
    %v1815 = vpop.f32.mrf.mxu0
    %v1816 = vadd.f32 0.0, %v1815
    %v1817 = vpop.f32.mrf.mxu0
    %v1818 = vpop.f32.mrf.mxu0
    %v1819 = vadd.f32 0.0, %v1818
    %v1820 = vpop.f32.mrf.mxu0
    %1821 = vmatprep.mubr.bf16.mxu0 0
    %1822 = vmatmul.mubr.bf16.gmra.mxu0 %v1531
    %v1823 = vpop.f32.mrf.mxu0
    %v1824 = vadd.f32 0.0, %v1823
    %v1825 = vpop.f32.mrf.mxu0
    %v1826 = vpop.f32.mrf.mxu0
    %v1827 = vadd.f32 0.0, %v1826
    %v1828 = vpop.f32.mrf.mxu0
    %1829 = vdwg.mxu0
    %v1862 = vunpack.c.l.b16 %v1496
    %v1863 = vunpack.c.h.b16 %v1496
    %v1864 = vunpack.c.l.b16 %v1497
    %v1865 = vunpack.c.l.b16 %v1498
    %v1866 = vunpack.c.h.b16 %v1498
    %v1867 = vunpack.c.l.b16 %v1499
    %v1868 = vunpack.c.l.b16 %v1500
    %v1869 = vunpack.c.h.b16 %v1500
    %v1870 = vunpack.c.l.b16 %v1501
    %v1871 = vunpack.c.l.b16 %v1502
    %v1872 = vunpack.c.h.b16 %v1502
    %v1873 = vunpack.c.l.b16 %v1503
    %v1874 = vunpack.c.l.b16 %v1504
    %v1875 = vunpack.c.h.b16 %v1504
    %v1876 = vunpack.c.l.b16 %v1505
    %v1877 = vunpack.c.l.b16 %v1506
    %v1878 = vunpack.c.h.b16 %v1506
    %v1879 = vunpack.c.l.b16 %v1507
    %v1880 = vunpack.c.l.b16 %v1508
    %v1881 = vunpack.c.h.b16 %v1508
    %v1882 = vunpack.c.l.b16 %v1509
    %v1883 = vunpack.c.l.b16 %v1510
    %v1884 = vunpack.c.h.b16 %v1510
    %v1885 = vunpack.c.l.b16 %v1511
    %v1886 = vunpack.c.l.b16 %v1512
    %v1887 = vunpack.c.h.b16 %v1512
    %v1888 = vunpack.c.l.b16 %v1513
    %v1889 = vunpack.c.l.b16 %v1514
    %v1890 = vunpack.c.h.b16 %v1514
    %v1891 = vunpack.c.l.b16 %v1515
    %v1892 = vunpack.c.l.b16 %v1516
    %v1893 = vunpack.c.h.b16 %v1516
    %v1894 = vunpack.c.l.b16 %v1517
    %v1895 = vunpack.c.l.b16 %v1518
    %v1896 = vunpack.c.h.b16 %v1518
    %v1897 = vunpack.c.l.b16 %v1519
    %v1898 = vunpack.c.l.b16 %v1520
    %v1899 = vunpack.c.h.b16 %v1520
    %v1900 = vunpack.c.l.b16 %v1521
    %v1901 = vunpack.c.l.b16 %v1522
    %v1902 = vunpack.c.h.b16 %v1522
    %v1903 = vunpack.c.l.b16 %v1523
    %v1904 = vunpack.c.l.b16 %v1524
    %v1905 = vunpack.c.h.b16 %v1524
    %v1906 = vunpack.c.l.b16 %v1525
    %v1907 = vunpack.c.l.b16 %v1526
    %v1908 = vunpack.c.h.b16 %v1526
    %v1909 = vunpack.c.l.b16 %v1527
    %v1910 = vpack.c.b16 %v1865, %v1862
    %v1911 = vpack.c.b16 %v1866, %v1863
    %v1912 = vpack.c.b16 %v1867, %v1864
    %v1913 = vpack.c.b16 %v1871, %v1868
    %v1914 = vpack.c.b16 %v1872, %v1869
    %v1915 = vpack.c.b16 %v1873, %v1870
    %v1916 = vpack.c.b16 %v1877, %v1874
    %v1917 = vpack.c.b16 %v1878, %v1875
    %v1918 = vpack.c.b16 %v1879, %v1876
    %v1919 = vpack.c.b16 %v1883, %v1880
    %v1920 = vpack.c.b16 %v1884, %v1881
    %v1921 = vpack.c.b16 %v1885, %v1882
    %v1922 = vpack.c.b16 %v1889, %v1886
    %v1923 = vpack.c.b16 %v1890, %v1887
    %v1924 = vpack.c.b16 %v1891, %v1888
    %v1925 = vpack.c.b16 %v1895, %v1892
    %v1926 = vpack.c.b16 %v1896, %v1893
    %v1927 = vpack.c.b16 %v1897, %v1894
    %v1928 = vpack.c.b16 %v1901, %v1898
    %v1929 = vpack.c.b16 %v1902, %v1899
    %v1930 = vpack.c.b16 %v1903, %v1900
    %v1931 = vpack.c.b16 %v1907, %v1904
    %v1932 = vpack.c.b16 %v1908, %v1905
    %v1933 = vpack.c.b16 %v1909, %v1906
    %1958 = vmatprep.subr.bf16.mxu0 %v1932
    %1959 = vmatpush1.bf16.msra.mxu0 %v1931
    %1960 = vmatprep.subr.bf16.mxu0 %v1929
    %1961 = vmatpush1.bf16.msra.mxu0 %v1928
    %1962 = vmatprep.subr.bf16.mxu0 %v1926
    %1963 = vmatpush1.bf16.msra.mxu0 %v1925
    %1964 = vmatprep.subr.bf16.mxu0 %v1923
    %1965 = vmatpush1.bf16.msra.mxu0 %v1922
    %1966 = vmatprep.subr.bf16.mxu0 %v1920
    %1967 = vmatpush1.bf16.msra.mxu0 %v1919
    %1968 = vmatprep.subr.bf16.mxu0 %v1917
    %1969 = vmatpush1.bf16.msra.mxu0 %v1916
    %1970 = vmatprep.subr.bf16.mxu0 %v1914
    %1971 = vmatpush1.bf16.msra.mxu0 %v1913
    %1972 = vmatprep.subr.bf16.mxu0 %v1911
    %1973 = vmatpush1.bf16.msra.mxu0 %v1910
    %1974 = vmatprep.subr.bf16.mxu0 0
    %1975 = vmatpush2.bf16.msra.mxu0 0
    %1976 = vmatprep.subr.bf16.mxu0 0
    %1977 = vmatpush2.bf16.msra.mxu0 0
    %1978 = vmatprep.subr.bf16.mxu0 0
    %1979 = vmatpush2.bf16.msra.mxu0 0
    %1980 = vmatprep.subr.bf16.mxu0 0
    %1981 = vmatpush2.bf16.msra.mxu0 0
    %1982 = vmatprep.subr.bf16.mxu0 0
    %1983 = vmatpush2.bf16.msra.mxu0 0
    %1984 = vmatprep.subr.bf16.mxu0 0
    %1985 = vmatpush2.bf16.msra.mxu0 0
    %1986 = vmatprep.subr.bf16.mxu0 0
    %1987 = vmatpush2.bf16.msra.mxu0 0
    %1988 = vmatprep.subr.bf16.mxu0 0
    %1989 = vmatpush2.bf16.msra.mxu0 0
    %1990 = vmatprep.mubr.bf16.mxu0 0
    %1991 = vmatmul.mubr.bf16.gmra.mxu0 %v1492
    %v1992 = vpop.f32.mrf.mxu0
    %v1993 = vadd.f32 %v1727, %v1992
    %v1994 = vpop.f32.mrf.mxu0
    %v1995 = vadd.f32 %v1729, %v1994
    %v1996 = vpop.f32.mrf.mxu0
    %v1997 = vadd.f32 %v1731, %v1996
    %v1998 = vpop.f32.mrf.mxu0
    %v1999 = vadd.f32 %v1733, %v1998
    %2000 = vmatprep.mubr.bf16.mxu0 0
    %2001 = vmatmul.mubr.bf16.gmra.mxu0 %v1493
    %v2002 = vpop.f32.mrf.mxu0
    %v2003 = vadd.f32 %v1737, %v2002
    %v2004 = vpop.f32.mrf.mxu0
    %v2005 = vadd.f32 %v1739, %v2004
    %v2006 = vpop.f32.mrf.mxu0
    %v2007 = vadd.f32 %v1741, %v2006
    %v2008 = vpop.f32.mrf.mxu0
    %v2009 = vadd.f32 %v1743, %v2008
    %2010 = vmatprep.mubr.bf16.mxu0 0
    %2011 = vmatmul.mubr.bf16.gmra.mxu0 %v1494
    %v2012 = vpop.f32.mrf.mxu0
    %v2013 = vadd.f32 %v1747, %v2012
    %v2014 = vpop.f32.mrf.mxu0
    %v2015 = vadd.f32 %v1749, %v2014
    %v2016 = vpop.f32.mrf.mxu0
    %v2017 = vadd.f32 %v1751, %v2016
    %v2018 = vpop.f32.mrf.mxu0
    %v2019 = vadd.f32 %v1753, %v2018
    %2020 = vmatprep.mubr.bf16.mxu0 0
    %2021 = vmatmul.mubr.bf16.gmra.mxu0 %v1495
    %v2022 = vpop.f32.mrf.mxu0
    %v2023 = vadd.f32 %v1757, %v2022
    %v2024 = vpop.f32.mrf.mxu0
    %v2025 = vadd.f32 %v1759, %v2024
    %v2026 = vpop.f32.mrf.mxu0
    %v2027 = vadd.f32 %v1761, %v2026
    %v2028 = vpop.f32.mrf.mxu0
    %v2029 = vadd.f32 %v1763, %v2028
    %2030 = vdwg.mxu0
    %2031 = vmatprep.subr.bf16.mxu0 0
    %2032 = vmatpush1.bf16.msra.mxu0 %v1933
    %2033 = vmatprep.subr.bf16.mxu0 0
    %2034 = vmatpush1.bf16.msra.mxu0 %v1930
    %2035 = vmatprep.subr.bf16.mxu0 0
    %2036 = vmatpush1.bf16.msra.mxu0 %v1927
    %2037 = vmatprep.subr.bf16.mxu0 0
    %2038 = vmatpush1.bf16.msra.mxu0 %v1924
    %2039 = vmatprep.subr.bf16.mxu0 0
    %2040 = vmatpush1.bf16.msra.mxu0 %v1921
    %2041 = vmatprep.subr.bf16.mxu0 0
    %2042 = vmatpush1.bf16.msra.mxu0 %v1918
    %2043 = vmatprep.subr.bf16.mxu0 0
    %2044 = vmatpush1.bf16.msra.mxu0 %v1915
    %2045 = vmatprep.subr.bf16.mxu0 0
    %2046 = vmatpush1.bf16.msra.mxu0 %v1912
    %2047 = vmatprep.subr.bf16.mxu0 0
    %2048 = vmatpush2.bf16.msra.mxu0 0
    %2049 = vmatprep.subr.bf16.mxu0 0
    %2050 = vmatpush2.bf16.msra.mxu0 0
    %2051 = vmatprep.subr.bf16.mxu0 0
    %2052 = vmatpush2.bf16.msra.mxu0 0
    %2053 = vmatprep.subr.bf16.mxu0 0
    %2054 = vmatpush2.bf16.msra.mxu0 0
    %2055 = vmatprep.subr.bf16.mxu0 0
    %2056 = vmatpush2.bf16.msra.mxu0 0
    %2057 = vmatprep.subr.bf16.mxu0 0
    %2058 = vmatpush2.bf16.msra.mxu0 0
    %2059 = vmatprep.subr.bf16.mxu0 0
    %2060 = vmatpush2.bf16.msra.mxu0 0
    %2061 = vmatprep.subr.bf16.mxu0 0
    %2062 = vmatpush2.bf16.msra.mxu0 0
    %2063 = vmatprep.mubr.bf16.mxu0 0
    %2064 = vmatmul.mubr.bf16.gmra.mxu0 %v1492
    %v2065 = vpop.f32.mrf.mxu0
    %v2066 = vadd.f32 %v1800, %v2065
    %v2067 = vpop.f32.mrf.mxu0
    %v2068 = vpop.f32.mrf.mxu0
    %v2069 = vadd.f32 %v1803, %v2068
    %v2070 = vpop.f32.mrf.mxu0
    %2071 = vmatprep.mubr.bf16.mxu0 0
    %2072 = vmatmul.mubr.bf16.gmra.mxu0 %v1493
    %v2073 = vpop.f32.mrf.mxu0
    %v2074 = vadd.f32 %v1808, %v2073
    %v2075 = vpop.f32.mrf.mxu0
    %v2076 = vpop.f32.mrf.mxu0
    %v2077 = vadd.f32 %v1811, %v2076
    %v2078 = vpop.f32.mrf.mxu0
    %2079 = vmatprep.mubr.bf16.mxu0 0
    %2080 = vmatmul.mubr.bf16.gmra.mxu0 %v1494
    %v2081 = vpop.f32.mrf.mxu0
    %v2082 = vadd.f32 %v1816, %v2081
    %v2083 = vpop.f32.mrf.mxu0
    %v2084 = vpop.f32.mrf.mxu0
    %v2085 = vadd.f32 %v1819, %v2084
    %v2086 = vpop.f32.mrf.mxu0
    %2087 = vmatprep.mubr.bf16.mxu0 0
    %2088 = vmatmul.mubr.bf16.gmra.mxu0 %v1495
    %v2089 = vpop.f32.mrf.mxu0
    %v2090 = vadd.f32 %v1824, %v2089
    %v2091 = vpop.f32.mrf.mxu0
    %v2092 = vpop.f32.mrf.mxu0
    %v2093 = vadd.f32 %v1827, %v2092
    %v2094 = vpop.f32.mrf.mxu0
    %2095 = vdwg.mxu0
    %v2096 = vld [vmem:[#allocation18] sm:$0x7]
    %v2098 = vlaneseq
    %v2099 = vshrl.u32 %v2098, 7
    %v2100 = vsub.s32 0, %v2099
    %v2101 = vrot.slane %v2096, %v2100
    %v2102 = vlaneseq
    %v2103 = vshrl.u32 %v2102, 7
    %v2104 = vsub.s32 1, %v2103
    %v2105 = vrot.slane %v2096, %v2104
    %v2106 = vlaneseq
    %v2107 = vshrl.u32 %v2106, 7
    %v2108 = vsub.s32 2, %v2107
    %v2109 = vrot.slane %v2096, %v2108
    %v2113 = vadd.f32 %v1993, %v2101
    %v2114 = vadd.f32 %v1995, %v2105
    %v2115 = vadd.f32 %v2066, %v2109
    %v2116 = vadd.f32 %v1997, %v2101
    %v2117 = vadd.f32 %v1999, %v2105
    %v2118 = vadd.f32 %v2069, %v2109
    %v2119 = vadd.f32 %v2003, %v2101
    %v2120 = vadd.f32 %v2005, %v2105
    %v2121 = vadd.f32 %v2074, %v2109
    %v2122 = vadd.f32 %v2007, %v2101
    %v2123 = vadd.f32 %v2009, %v2105
    %v2124 = vadd.f32 %v2077, %v2109
    %v2125 = vadd.f32 %v2013, %v2101
    %v2126 = vadd.f32 %v2015, %v2105
    %v2127 = vadd.f32 %v2082, %v2109
    %v2128 = vadd.f32 %v2017, %v2101
    %v2129 = vadd.f32 %v2019, %v2105
    %v2130 = vadd.f32 %v2085, %v2109
    %v2131 = vadd.f32 %v2023, %v2101
    %v2132 = vadd.f32 %v2025, %v2105
    %v2133 = vadd.f32 %v2090, %v2109
    %v2134 = vadd.f32 %v2027, %v2101
    %v2135 = vadd.f32 %v2029, %v2105
    %v2136 = vadd.f32 %v2093, %v2109
    %2137 = vst [vmem:[#allocation2] sm:$0xff] %v2113
    %2138 = vst [vmem:[#allocation2 + $0x8] sm:$0xff] %v2114
    %2139 = vst [vmem:[#allocation2 + $0x10] sm:$0xff] %v2115
    %2140 = vst [vmem:[#allocation2 + $0x18] sm:$0xff] %v2116
    %2141 = vst [vmem:[#allocation2 + $0x20] sm:$0xff] %v2117
    %2142 = vst [vmem:[#allocation2 + $0x28] sm:$0xff] %v2118
    %2143 = vst [vmem:[#allocation2 + $0x30] sm:$0xff] %v2119
    %2144 = vst [vmem:[#allocation2 + $0x38] sm:$0xff] %v2120
    %2145 = vst [vmem:[#allocation2 + $0x40] sm:$0xff] %v2121
    %2146 = vst [vmem:[#allocation2 + $0x48] sm:$0xff] %v2122
    %2147 = vst [vmem:[#allocation2 + $0x50] sm:$0xff] %v2123
    %2148 = vst [vmem:[#allocation2 + $0x58] sm:$0xff] %v2124
    %2149 = vst [vmem:[#allocation2 + $0x60] sm:$0xff] %v2125
    %2150 = vst [vmem:[#allocation2 + $0x68] sm:$0xff] %v2126
    %2151 = vst [vmem:[#allocation2 + $0x70] sm:$0xff] %v2127
    %2152 = vst [vmem:[#allocation2 + $0x78] sm:$0xff] %v2128
    %2153 = vst [vmem:[#allocation2 + $0x80] sm:$0xff] %v2129
    %2154 = vst [vmem:[#allocation2 + $0x88] sm:$0xff] %v2130
    %2155 = vst [vmem:[#allocation2 + $0x90] sm:$0xff] %v2131
    %2156 = vst [vmem:[#allocation2 + $0x98] sm:$0xff] %v2132
    %2157 = vst [vmem:[#allocation2 + $0xa0] sm:$0xff] %v2133
    %2158 = vst [vmem:[#allocation2 + $0xa8] sm:$0xff] %v2134
    %2159 = vst [vmem:[#allocation2 + $0xb0] sm:$0xff] %v2135
    %2160 = vst [vmem:[#allocation2 + $0xb8] sm:$0xff] %v2136
    %s2161 = scalar_lea.vmem %s1, 8
    %v2162 = vld [vmem:[%s2161] sm:$0xff]
    %v2163 = vld [vmem:[#allocation17] sm:$0xff]
    %v2164 = vld [vmem:[#allocation17 + $0x8] sm:$0xf]
    %v2165 = vld [vmem:[#allocation17 + $0xc] sm:$0xff]
    %v2166 = vld [vmem:[#allocation17 + $0x14] sm:$0xf]
    %v2167 = vld [vmem:[#allocation17 + $0x18] sm:$0xff]
    %v2168 = vld [vmem:[#allocation17 + $0x20] sm:$0xf]
    %v2169 = vld [vmem:[#allocation17 + $0x24] sm:$0xff]
    %v2170 = vld [vmem:[#allocation17 + $0x2c] sm:$0xf]
    %v2171 = vld [vmem:[#allocation17 + $0x30] sm:$0xff]
    %v2172 = vld [vmem:[#allocation17 + $0x38] sm:$0xf]
    %v2173 = vld [vmem:[#allocation17 + $0x3c] sm:$0xff]
    %v2174 = vld [vmem:[#allocation17 + $0x44] sm:$0xf]
    %v2175 = vld [vmem:[#allocation17 + $0x48] sm:$0xff]
    %v2176 = vld [vmem:[#allocation17 + $0x50] sm:$0xf]
    %v2177 = vld [vmem:[#allocation17 + $0x54] sm:$0xff]
    %v2178 = vld [vmem:[#allocation17 + $0x5c] sm:$0xf]
    %v2179 = vld [vmem:[#allocation17 + $0x60] sm:$0xff]
    %v2180 = vld [vmem:[#allocation17 + $0x68] sm:$0xf]
    %v2181 = vld [vmem:[#allocation17 + $0x6c] sm:$0xff]
    %v2182 = vld [vmem:[#allocation17 + $0x74] sm:$0xf]
    %v2183 = vld [vmem:[#allocation17 + $0x78] sm:$0xff]
    %v2184 = vld [vmem:[#allocation17 + $0x80] sm:$0xf]
    %v2185 = vld [vmem:[#allocation17 + $0x84] sm:$0xff]
    %v2186 = vld [vmem:[#allocation17 + $0x8c] sm:$0xf]
    %v2187 = vld [vmem:[#allocation17 + $0x90] sm:$0xff]
    %v2188 = vld [vmem:[#allocation17 + $0x98] sm:$0xf]
    %v2189 = vld [vmem:[#allocation17 + $0x9c] sm:$0xff]
    %v2190 = vld [vmem:[#allocation17 + $0xa4] sm:$0xf]
    %v2191 = vld [vmem:[#allocation17 + $0xa8] sm:$0xff]
    %v2192 = vld [vmem:[#allocation17 + $0xb0] sm:$0xf]
    %v2193 = vld [vmem:[#allocation17 + $0xb4] sm:$0xff]
    %v2194 = vld [vmem:[#allocation17 + $0xbc] sm:$0xf]
    %v2195 = vld [vmem:[#allocation20] sm:$0x1]
    %v2197 = vlaneseq
    %v2198 = vshrl.u32 %v2197, 7
    %v2199 = vsub.s32 0, %v2198
    %v2200 = vrot.slane %v2195, %v2199
    %v2202 = vld [vmem:[#allocation2] sm:$0xff]
    %v2203 = vld [vmem:[#allocation2 + $0x8] sm:$0xff]
    %v2204 = vld [vmem:[#allocation2 + $0x10] sm:$0xff]
    %v2205 = vpack.c.bf16 %v2162, %v2162
    %v2238 = vunpack.c.l.b16 %v2163
    %v2239 = vunpack.c.h.b16 %v2163
    %v2240 = vunpack.c.l.b16 %v2164
    %v2241 = vunpack.c.l.b16 %v2165
    %v2242 = vunpack.c.h.b16 %v2165
    %v2243 = vunpack.c.l.b16 %v2166
    %v2244 = vunpack.c.l.b16 %v2167
    %v2245 = vunpack.c.h.b16 %v2167
    %v2246 = vunpack.c.l.b16 %v2168
    %v2247 = vunpack.c.l.b16 %v2169
    %v2248 = vunpack.c.h.b16 %v2169
    %v2249 = vunpack.c.l.b16 %v2170
    %v2250 = vunpack.c.l.b16 %v2171
    %v2251 = vunpack.c.h.b16 %v2171
    %v2252 = vunpack.c.l.b16 %v2172
    %v2253 = vunpack.c.l.b16 %v2173
    %v2254 = vunpack.c.h.b16 %v2173
    %v2255 = vunpack.c.l.b16 %v2174
    %v2256 = vunpack.c.l.b16 %v2175
    %v2257 = vunpack.c.h.b16 %v2175
    %v2258 = vunpack.c.l.b16 %v2176
    %v2259 = vunpack.c.l.b16 %v2177
    %v2260 = vunpack.c.h.b16 %v2177
    %v2261 = vunpack.c.l.b16 %v2178
    %v2262 = vunpack.c.l.b16 %v2179
    %v2263 = vunpack.c.h.b16 %v2179
    %v2264 = vunpack.c.l.b16 %v2180
    %v2265 = vunpack.c.l.b16 %v2181
    %v2266 = vunpack.c.h.b16 %v2181
    %v2267 = vunpack.c.l.b16 %v2182
    %v2268 = vunpack.c.l.b16 %v2183
    %v2269 = vunpack.c.h.b16 %v2183
    %v2270 = vunpack.c.l.b16 %v2184
    %v2271 = vunpack.c.l.b16 %v2185
    %v2272 = vunpack.c.h.b16 %v2185
    %v2273 = vunpack.c.l.b16 %v2186
    %v2274 = vunpack.c.l.b16 %v2187
    %v2275 = vunpack.c.h.b16 %v2187
    %v2276 = vunpack.c.l.b16 %v2188
    %v2277 = vunpack.c.l.b16 %v2189
    %v2278 = vunpack.c.h.b16 %v2189
    %v2279 = vunpack.c.l.b16 %v2190
    %v2280 = vunpack.c.l.b16 %v2191
    %v2281 = vunpack.c.h.b16 %v2191
    %v2282 = vunpack.c.l.b16 %v2192
    %v2283 = vunpack.c.l.b16 %v2193
    %v2284 = vunpack.c.h.b16 %v2193
    %v2285 = vunpack.c.l.b16 %v2194
    %v2286 = vpack.c.b16 %v2241, %v2238
    %v2287 = vpack.c.b16 %v2242, %v2239
    %v2288 = vpack.c.b16 %v2243, %v2240
    %v2289 = vpack.c.b16 %v2247, %v2244
    %v2290 = vpack.c.b16 %v2248, %v2245
    %v2291 = vpack.c.b16 %v2249, %v2246
    %v2292 = vpack.c.b16 %v2253, %v2250
    %v2293 = vpack.c.b16 %v2254, %v2251
    %v2294 = vpack.c.b16 %v2255, %v2252
    %v2295 = vpack.c.b16 %v2259, %v2256
    %v2296 = vpack.c.b16 %v2260, %v2257
    %v2297 = vpack.c.b16 %v2261, %v2258
    %v2298 = vpack.c.b16 %v2265, %v2262
    %v2299 = vpack.c.b16 %v2266, %v2263
    %v2300 = vpack.c.b16 %v2267, %v2264
    %v2301 = vpack.c.b16 %v2271, %v2268
    %v2302 = vpack.c.b16 %v2272, %v2269
    %v2303 = vpack.c.b16 %v2273, %v2270
    %v2304 = vpack.c.b16 %v2277, %v2274
    %v2305 = vpack.c.b16 %v2278, %v2275
    %v2306 = vpack.c.b16 %v2279, %v2276
    %v2307 = vpack.c.b16 %v2283, %v2280
    %v2308 = vpack.c.b16 %v2284, %v2281
    %v2309 = vpack.c.b16 %v2285, %v2282
    %2334 = vmatprep.subr.bf16.mxu0 %v2308
    %2335 = vmatpush1.bf16.msra.mxu0 %v2307
    %2336 = vmatprep.subr.bf16.mxu0 %v2305
    %2337 = vmatpush1.bf16.msra.mxu0 %v2304
    %2338 = vmatprep.subr.bf16.mxu0 %v2302
    %2339 = vmatpush1.bf16.msra.mxu0 %v2301
    %2340 = vmatprep.subr.bf16.mxu0 %v2299
    %2341 = vmatpush1.bf16.msra.mxu0 %v2298
    %2342 = vmatprep.subr.bf16.mxu0 %v2296
    %2343 = vmatpush1.bf16.msra.mxu0 %v2295
    %2344 = vmatprep.subr.bf16.mxu0 %v2293
    %2345 = vmatpush1.bf16.msra.mxu0 %v2292
    %2346 = vmatprep.subr.bf16.mxu0 %v2290
    %2347 = vmatpush1.bf16.msra.mxu0 %v2289
    %2348 = vmatprep.subr.bf16.mxu0 %v2287
    %2349 = vmatpush1.bf16.msra.mxu0 %v2286
    %2350 = vmatprep.subr.bf16.mxu0 0
    %2351 = vmatpush2.bf16.msra.mxu0 0
    %2352 = vmatprep.subr.bf16.mxu0 0
    %2353 = vmatpush2.bf16.msra.mxu0 0
    %2354 = vmatprep.subr.bf16.mxu0 0
    %2355 = vmatpush2.bf16.msra.mxu0 0
    %2356 = vmatprep.subr.bf16.mxu0 0
    %2357 = vmatpush2.bf16.msra.mxu0 0
    %2358 = vmatprep.subr.bf16.mxu0 0
    %2359 = vmatpush2.bf16.msra.mxu0 0
    %2360 = vmatprep.subr.bf16.mxu0 0
    %2361 = vmatpush2.bf16.msra.mxu0 0
    %2362 = vmatprep.subr.bf16.mxu0 0
    %2363 = vmatpush2.bf16.msra.mxu0 0
    %2364 = vmatprep.subr.bf16.mxu0 0
    %2365 = vmatpush2.bf16.msra.mxu0 0
    %2366 = vmatprep.mubr.bf16.mxu0 0
    %2367 = vmatmul.mubr.bf16.gmra.mxu0 %v2205
    %v2368 = vpop.f32.mrf.mxu0
    %v2369 = vadd.f32 0.0, %v2368
    %v2370 = vpop.f32.mrf.mxu0
    %v2371 = vadd.f32 0.0, %v2370
    %v2372 = vpop.f32.mrf.mxu0
    %v2373 = vpop.f32.mrf.mxu0
    %2374 = vdwg.mxu0
    %2375 = vmatprep.subr.bf16.mxu0 0
    %2376 = vmatpush1.bf16.msra.mxu0 %v2309
    %2377 = vmatprep.subr.bf16.mxu0 0
    %2378 = vmatpush1.bf16.msra.mxu0 %v2306
    %2379 = vmatprep.subr.bf16.mxu0 0
    %2380 = vmatpush1.bf16.msra.mxu0 %v2303
    %2381 = vmatprep.subr.bf16.mxu0 0
    %2382 = vmatpush1.bf16.msra.mxu0 %v2300
    %2383 = vmatprep.subr.bf16.mxu0 0
    %2384 = vmatpush1.bf16.msra.mxu0 %v2297
    %2385 = vmatprep.subr.bf16.mxu0 0
    %2386 = vmatpush1.bf16.msra.mxu0 %v2294
    %2387 = vmatprep.subr.bf16.mxu0 0
    %2388 = vmatpush1.bf16.msra.mxu0 %v2291
    %2389 = vmatprep.subr.bf16.mxu0 0
    %2390 = vmatpush1.bf16.msra.mxu0 %v2288
    %2391 = vmatprep.subr.bf16.mxu0 0
    %2392 = vmatpush2.bf16.msra.mxu0 0
    %2393 = vmatprep.subr.bf16.mxu0 0
    %2394 = vmatpush2.bf16.msra.mxu0 0
    %2395 = vmatprep.subr.bf16.mxu0 0
    %2396 = vmatpush2.bf16.msra.mxu0 0
    %2397 = vmatprep.subr.bf16.mxu0 0
    %2398 = vmatpush2.bf16.msra.mxu0 0
    %2399 = vmatprep.subr.bf16.mxu0 0
    %2400 = vmatpush2.bf16.msra.mxu0 0
    %2401 = vmatprep.subr.bf16.mxu0 0
    %2402 = vmatpush2.bf16.msra.mxu0 0
    %2403 = vmatprep.subr.bf16.mxu0 0
    %2404 = vmatpush2.bf16.msra.mxu0 0
    %2405 = vmatprep.subr.bf16.mxu0 0
    %2406 = vmatpush2.bf16.msra.mxu0 0
    %2407 = vmatprep.mubr.bf16.mxu0 0
    %2408 = vmatmul.mubr.bf16.gmra.mxu0 %v2205
    %v2409 = vpop.f32.mrf.mxu0
    %v2410 = vadd.f32 0.0, %v2409
    %v2411 = vpop.f32.mrf.mxu0
    %v2412 = vpop.f32.mrf.mxu0
    %v2413 = vpop.f32.mrf.mxu0
    %2414 = vdwg.mxu0
    %v2415 = vadd.f32 %v2202, %v2369
    %v2416 = vadd.f32 %v2203, %v2371
    %v2417 = vxor.u32 %v2415, 2147483648
    %v2418 = vxor.u32 %v2416, 2147483648
    %v2419 = vmul.f32 %v2417, 1.442695
    %v2420 = vpow.pop %v2419
    %v2421 = vmul.f32 %v2418, 1.442695
    %v2422 = vpow.pop %v2421
    %v2423 = vadd.f32 %v2420, 1.0
    %v2424 = vadd.f32 %v2422, 1.0
    %v2425 = vrcp.pop %v2423
    %v2426 = vmul.f32 1.0, %v2425
    %v2427 = vrcp.pop %v2424
    %v2428 = vmul.f32 1.0, %v2427
    %v2429 = vadd.f32 %v2410, %v2200
    %v2430 = vmul.f32 %v2426, %v2429
    %v2431 = vadd.f32 %v2204, %v2430
    %v2432 = vtanh.pop %v2431
    %v2433 = vsub.f32 %v2162, %v2432
    %v2434 = vmul.f32 %v2428, %v2433
    %v2435 = vadd.f32 %v2432, %v2434
    %2436 = vst [vmem:[#allocation4] sm:$0xff] %v2435
    %v2437 = vld [vmem:[#allocation2 + $0x18] sm:$0xff]
    %v2438 = vld [vmem:[#allocation2 + $0x20] sm:$0xff]
    %v2439 = vld [vmem:[#allocation2 + $0x28] sm:$0xff]
    %v2440 = vpack.c.bf16 %v2435, %v2435
    %2441 = vmatprep.subr.bf16.mxu0 %v2308
    %2442 = vmatpush1.bf16.msra.mxu0 %v2307
    %2443 = vmatprep.subr.bf16.mxu0 %v2305
    %2444 = vmatpush1.bf16.msra.mxu0 %v2304
    %2445 = vmatprep.subr.bf16.mxu0 %v2302
    %2446 = vmatpush1.bf16.msra.mxu0 %v2301
    %2447 = vmatprep.subr.bf16.mxu0 %v2299
    %2448 = vmatpush1.bf16.msra.mxu0 %v2298
    %2449 = vmatprep.subr.bf16.mxu0 %v2296
    %2450 = vmatpush1.bf16.msra.mxu0 %v2295
    %2451 = vmatprep.subr.bf16.mxu0 %v2293
    %2452 = vmatpush1.bf16.msra.mxu0 %v2292
    %2453 = vmatprep.subr.bf16.mxu0 %v2290
    %2454 = vmatpush1.bf16.msra.mxu0 %v2289
    %2455 = vmatprep.subr.bf16.mxu0 %v2287
    %2456 = vmatpush1.bf16.msra.mxu0 %v2286
    %2457 = vmatprep.subr.bf16.mxu0 0
    %2458 = vmatpush2.bf16.msra.mxu0 0
    %2459 = vmatprep.subr.bf16.mxu0 0
    %2460 = vmatpush2.bf16.msra.mxu0 0
    %2461 = vmatprep.subr.bf16.mxu0 0
    %2462 = vmatpush2.bf16.msra.mxu0 0
    %2463 = vmatprep.subr.bf16.mxu0 0
    %2464 = vmatpush2.bf16.msra.mxu0 0
    %2465 = vmatprep.subr.bf16.mxu0 0
    %2466 = vmatpush2.bf16.msra.mxu0 0
    %2467 = vmatprep.subr.bf16.mxu0 0
    %2468 = vmatpush2.bf16.msra.mxu0 0
    %2469 = vmatprep.subr.bf16.mxu0 0
    %2470 = vmatpush2.bf16.msra.mxu0 0
    %2471 = vmatprep.subr.bf16.mxu0 0
    %2472 = vmatpush2.bf16.msra.mxu0 0
    %2473 = vmatprep.mubr.bf16.mxu0 0
    %2474 = vmatmul.mubr.bf16.gmra.mxu0 %v2440
    %v2475 = vpop.f32.mrf.mxu0
    %v2476 = vadd.f32 0.0, %v2475
    %v2477 = vpop.f32.mrf.mxu0
    %v2478 = vadd.f32 0.0, %v2477
    %v2479 = vpop.f32.mrf.mxu0
    %v2480 = vpop.f32.mrf.mxu0
    %2481 = vdwg.mxu0
    %2482 = vmatprep.subr.bf16.mxu0 0
    %2483 = vmatpush1.bf16.msra.mxu0 %v2309
    %2484 = vmatprep.subr.bf16.mxu0 0
    %2485 = vmatpush1.bf16.msra.mxu0 %v2306
    %2486 = vmatprep.subr.bf16.mxu0 0
    %2487 = vmatpush1.bf16.msra.mxu0 %v2303
    %2488 = vmatprep.subr.bf16.mxu0 0
    %2489 = vmatpush1.bf16.msra.mxu0 %v2300
    %2490 = vmatprep.subr.bf16.mxu0 0
    %2491 = vmatpush1.bf16.msra.mxu0 %v2297
    %2492 = vmatprep.subr.bf16.mxu0 0
    %2493 = vmatpush1.bf16.msra.mxu0 %v2294
    %2494 = vmatprep.subr.bf16.mxu0 0
    %2495 = vmatpush1.bf16.msra.mxu0 %v2291
    %2496 = vmatprep.subr.bf16.mxu0 0
    %2497 = vmatpush1.bf16.msra.mxu0 %v2288
    %2498 = vmatprep.subr.bf16.mxu0 0
    %2499 = vmatpush2.bf16.msra.mxu0 0
    %2500 = vmatprep.subr.bf16.mxu0 0
    %2501 = vmatpush2.bf16.msra.mxu0 0
    %2502 = vmatprep.subr.bf16.mxu0 0
    %2503 = vmatpush2.bf16.msra.mxu0 0
    %2504 = vmatprep.subr.bf16.mxu0 0
    %2505 = vmatpush2.bf16.msra.mxu0 0
    %2506 = vmatprep.subr.bf16.mxu0 0
    %2507 = vmatpush2.bf16.msra.mxu0 0
    %2508 = vmatprep.subr.bf16.mxu0 0
    %2509 = vmatpush2.bf16.msra.mxu0 0
    %2510 = vmatprep.subr.bf16.mxu0 0
    %2511 = vmatpush2.bf16.msra.mxu0 0
    %2512 = vmatprep.subr.bf16.mxu0 0
    %2513 = vmatpush2.bf16.msra.mxu0 0
    %2514 = vmatprep.mubr.bf16.mxu0 0
    %2515 = vmatmul.mubr.bf16.gmra.mxu0 %v2440
    %v2516 = vpop.f32.mrf.mxu0
    %v2517 = vadd.f32 0.0, %v2516
    %v2518 = vpop.f32.mrf.mxu0
    %v2519 = vpop.f32.mrf.mxu0
    %v2520 = vpop.f32.mrf.mxu0
    %2521 = vdwg.mxu0
    %v2522 = vadd.f32 %v2437, %v2476
    %v2523 = vadd.f32 %v2438, %v2478
    %v2524 = vxor.u32 %v2522, 2147483648
    %v2525 = vxor.u32 %v2523, 2147483648
    %v2526 = vmul.f32 %v2524, 1.442695
    %v2527 = vpow.pop %v2526
    %v2528 = vmul.f32 %v2525, 1.442695
    %v2529 = vpow.pop %v2528
    %v2530 = vadd.f32 %v2527, 1.0
    %v2531 = vadd.f32 %v2529, 1.0
    %v2532 = vrcp.pop %v2530
    %v2533 = vmul.f32 1.0, %v2532
    %v2534 = vrcp.pop %v2531
    %v2535 = vmul.f32 1.0, %v2534
    %v2536 = vadd.f32 %v2517, %v2200
    %v2537 = vmul.f32 %v2533, %v2536
    %v2538 = vadd.f32 %v2439, %v2537
    %v2539 = vtanh.pop %v2538
    %v2540 = vsub.f32 %v2435, %v2539
    %v2541 = vmul.f32 %v2535, %v2540
    %v2542 = vadd.f32 %v2539, %v2541
    %2543 = vst [vmem:[#allocation4 + $0x8] sm:$0xff] %v2542
    %v2544 = vld [vmem:[#allocation2 + $0x30] sm:$0xff]
    %v2545 = vld [vmem:[#allocation2 + $0x38] sm:$0xff]
    %v2546 = vld [vmem:[#allocation2 + $0x40] sm:$0xff]
    %v2547 = vpack.c.bf16 %v2542, %v2542
    %2548 = vmatprep.subr.bf16.mxu0 %v2308
    %2549 = vmatpush1.bf16.msra.mxu0 %v2307
    %2550 = vmatprep.subr.bf16.mxu0 %v2305
    %2551 = vmatpush1.bf16.msra.mxu0 %v2304
    %2552 = vmatprep.subr.bf16.mxu0 %v2302
    %2553 = vmatpush1.bf16.msra.mxu0 %v2301
    %2554 = vmatprep.subr.bf16.mxu0 %v2299
    %2555 = vmatpush1.bf16.msra.mxu0 %v2298
    %2556 = vmatprep.subr.bf16.mxu0 %v2296
    %2557 = vmatpush1.bf16.msra.mxu0 %v2295
    %2558 = vmatprep.subr.bf16.mxu0 %v2293
    %2559 = vmatpush1.bf16.msra.mxu0 %v2292
    %2560 = vmatprep.subr.bf16.mxu0 %v2290
    %2561 = vmatpush1.bf16.msra.mxu0 %v2289
    %2562 = vmatprep.subr.bf16.mxu0 %v2287
    %2563 = vmatpush1.bf16.msra.mxu0 %v2286
    %2564 = vmatprep.subr.bf16.mxu0 0
    %2565 = vmatpush2.bf16.msra.mxu0 0
    %2566 = vmatprep.subr.bf16.mxu0 0
    %2567 = vmatpush2.bf16.msra.mxu0 0
    %2568 = vmatprep.subr.bf16.mxu0 0
    %2569 = vmatpush2.bf16.msra.mxu0 0
    %2570 = vmatprep.subr.bf16.mxu0 0
    %2571 = vmatpush2.bf16.msra.mxu0 0
    %2572 = vmatprep.subr.bf16.mxu0 0
    %2573 = vmatpush2.bf16.msra.mxu0 0
    %2574 = vmatprep.subr.bf16.mxu0 0
    %2575 = vmatpush2.bf16.msra.mxu0 0
    %2576 = vmatprep.subr.bf16.mxu0 0
    %2577 = vmatpush2.bf16.msra.mxu0 0
    %2578 = vmatprep.subr.bf16.mxu0 0
    %2579 = vmatpush2.bf16.msra.mxu0 0
    %2580 = vmatprep.mubr.bf16.mxu0 0
    %2581 = vmatmul.mubr.bf16.gmra.mxu0 %v2547
    %v2582 = vpop.f32.mrf.mxu0
    %v2583 = vadd.f32 0.0, %v2582
    %v2584 = vpop.f32.mrf.mxu0
    %v2585 = vadd.f32 0.0, %v2584
    %v2586 = vpop.f32.mrf.mxu0
    %v2587 = vpop.f32.mrf.mxu0
    %2588 = vdwg.mxu0
    %2589 = vmatprep.subr.bf16.mxu0 0
    %2590 = vmatpush1.bf16.msra.mxu0 %v2309
    %2591 = vmatprep.subr.bf16.mxu0 0
    %2592 = vmatpush1.bf16.msra.mxu0 %v2306
    %2593 = vmatprep.subr.bf16.mxu0 0
    %2594 = vmatpush1.bf16.msra.mxu0 %v2303
    %2595 = vmatprep.subr.bf16.mxu0 0
    %2596 = vmatpush1.bf16.msra.mxu0 %v2300
    %2597 = vmatprep.subr.bf16.mxu0 0
    %2598 = vmatpush1.bf16.msra.mxu0 %v2297
    %2599 = vmatprep.subr.bf16.mxu0 0
    %2600 = vmatpush1.bf16.msra.mxu0 %v2294
    %2601 = vmatprep.subr.bf16.mxu0 0
    %2602 = vmatpush1.bf16.msra.mxu0 %v2291
    %2603 = vmatprep.subr.bf16.mxu0 0
    %2604 = vmatpush1.bf16.msra.mxu0 %v2288
    %2605 = vmatprep.subr.bf16.mxu0 0
    %2606 = vmatpush2.bf16.msra.mxu0 0
    %2607 = vmatprep.subr.bf16.mxu0 0
    %2608 = vmatpush2.bf16.msra.mxu0 0
    %2609 = vmatprep.subr.bf16.mxu0 0
    %2610 = vmatpush2.bf16.msra.mxu0 0
    %2611 = vmatprep.subr.bf16.mxu0 0
    %2612 = vmatpush2.bf16.msra.mxu0 0
    %2613 = vmatprep.subr.bf16.mxu0 0
    %2614 = vmatpush2.bf16.msra.mxu0 0
    %2615 = vmatprep.subr.bf16.mxu0 0
    %2616 = vmatpush2.bf16.msra.mxu0 0
    %2617 = vmatprep.subr.bf16.mxu0 0
    %2618 = vmatpush2.bf16.msra.mxu0 0
    %2619 = vmatprep.subr.bf16.mxu0 0
    %2620 = vmatpush2.bf16.msra.mxu0 0
    %2621 = vmatprep.mubr.bf16.mxu0 0
    %2622 = vmatmul.mubr.bf16.gmra.mxu0 %v2547
    %v2623 = vpop.f32.mrf.mxu0
    %v2624 = vadd.f32 0.0, %v2623
    %v2625 = vpop.f32.mrf.mxu0
    %v2626 = vpop.f32.mrf.mxu0
    %v2627 = vpop.f32.mrf.mxu0
    %2628 = vdwg.mxu0
    %v2629 = vadd.f32 %v2544, %v2583
    %v2630 = vadd.f32 %v2545, %v2585
    %v2631 = vxor.u32 %v2629, 2147483648
    %v2632 = vxor.u32 %v2630, 2147483648
    %v2633 = vmul.f32 %v2631, 1.442695
    %v2634 = vpow.pop %v2633
    %v2635 = vmul.f32 %v2632, 1.442695
    %v2636 = vpow.pop %v2635
    %v2637 = vadd.f32 %v2634, 1.0
    %v2638 = vadd.f32 %v2636, 1.0
    %v2639 = vrcp.pop %v2637
    %v2640 = vmul.f32 1.0, %v2639
    %v2641 = vrcp.pop %v2638
    %v2642 = vmul.f32 1.0, %v2641
    %v2643 = vadd.f32 %v2624, %v2200
    %v2644 = vmul.f32 %v2640, %v2643
    %v2645 = vadd.f32 %v2546, %v2644
    %v2646 = vtanh.pop %v2645
    %v2647 = vsub.f32 %v2542, %v2646
    %v2648 = vmul.f32 %v2642, %v2647
    %v2649 = vadd.f32 %v2646, %v2648
    %2650 = vst [vmem:[#allocation4 + $0x10] sm:$0xff] %v2649
    %v2651 = vld [vmem:[#allocation2 + $0x48] sm:$0xff]
    %v2652 = vld [vmem:[#allocation2 + $0x50] sm:$0xff]
    %v2653 = vld [vmem:[#allocation2 + $0x58] sm:$0xff]
    %v2654 = vpack.c.bf16 %v2649, %v2649
    %2655 = vmatprep.subr.bf16.mxu0 %v2308
    %2656 = vmatpush1.bf16.msra.mxu0 %v2307
    %2657 = vmatprep.subr.bf16.mxu0 %v2305
    %2658 = vmatpush1.bf16.msra.mxu0 %v2304
    %2659 = vmatprep.subr.bf16.mxu0 %v2302
    %2660 = vmatpush1.bf16.msra.mxu0 %v2301
    %2661 = vmatprep.subr.bf16.mxu0 %v2299
    %2662 = vmatpush1.bf16.msra.mxu0 %v2298
    %2663 = vmatprep.subr.bf16.mxu0 %v2296
    %2664 = vmatpush1.bf16.msra.mxu0 %v2295
    %2665 = vmatprep.subr.bf16.mxu0 %v2293
    %2666 = vmatpush1.bf16.msra.mxu0 %v2292
    %2667 = vmatprep.subr.bf16.mxu0 %v2290
    %2668 = vmatpush1.bf16.msra.mxu0 %v2289
    %2669 = vmatprep.subr.bf16.mxu0 %v2287
    %2670 = vmatpush1.bf16.msra.mxu0 %v2286
    %2671 = vmatprep.subr.bf16.mxu0 0
    %2672 = vmatpush2.bf16.msra.mxu0 0
    %2673 = vmatprep.subr.bf16.mxu0 0
    %2674 = vmatpush2.bf16.msra.mxu0 0
    %2675 = vmatprep.subr.bf16.mxu0 0
    %2676 = vmatpush2.bf16.msra.mxu0 0
    %2677 = vmatprep.subr.bf16.mxu0 0
    %2678 = vmatpush2.bf16.msra.mxu0 0
    %2679 = vmatprep.subr.bf16.mxu0 0
    %2680 = vmatpush2.bf16.msra.mxu0 0
    %2681 = vmatprep.subr.bf16.mxu0 0
    %2682 = vmatpush2.bf16.msra.mxu0 0
    %2683 = vmatprep.subr.bf16.mxu0 0
    %2684 = vmatpush2.bf16.msra.mxu0 0
    %2685 = vmatprep.subr.bf16.mxu0 0
    %2686 = vmatpush2.bf16.msra.mxu0 0
    %2687 = vmatprep.mubr.bf16.mxu0 0
    %2688 = vmatmul.mubr.bf16.gmra.mxu0 %v2654
    %v2689 = vpop.f32.mrf.mxu0
    %v2690 = vadd.f32 0.0, %v2689
    %v2691 = vpop.f32.mrf.mxu0
    %v2692 = vadd.f32 0.0, %v2691
    %v2693 = vpop.f32.mrf.mxu0
    %v2694 = vpop.f32.mrf.mxu0
    %2695 = vdwg.mxu0
    %2696 = vmatprep.subr.bf16.mxu0 0
    %2697 = vmatpush1.bf16.msra.mxu0 %v2309
    %2698 = vmatprep.subr.bf16.mxu0 0
    %2699 = vmatpush1.bf16.msra.mxu0 %v2306
    %2700 = vmatprep.subr.bf16.mxu0 0
    %2701 = vmatpush1.bf16.msra.mxu0 %v2303
    %2702 = vmatprep.subr.bf16.mxu0 0
    %2703 = vmatpush1.bf16.msra.mxu0 %v2300
    %2704 = vmatprep.subr.bf16.mxu0 0
    %2705 = vmatpush1.bf16.msra.mxu0 %v2297
    %2706 = vmatprep.subr.bf16.mxu0 0
    %2707 = vmatpush1.bf16.msra.mxu0 %v2294
    %2708 = vmatprep.subr.bf16.mxu0 0
    %2709 = vmatpush1.bf16.msra.mxu0 %v2291
    %2710 = vmatprep.subr.bf16.mxu0 0
    %2711 = vmatpush1.bf16.msra.mxu0 %v2288
    %2712 = vmatprep.subr.bf16.mxu0 0
    %2713 = vmatpush2.bf16.msra.mxu0 0
    %2714 = vmatprep.subr.bf16.mxu0 0
    %2715 = vmatpush2.bf16.msra.mxu0 0
    %2716 = vmatprep.subr.bf16.mxu0 0
    %2717 = vmatpush2.bf16.msra.mxu0 0
    %2718 = vmatprep.subr.bf16.mxu0 0
    %2719 = vmatpush2.bf16.msra.mxu0 0
    %2720 = vmatprep.subr.bf16.mxu0 0
    %2721 = vmatpush2.bf16.msra.mxu0 0
    %2722 = vmatprep.subr.bf16.mxu0 0
    %2723 = vmatpush2.bf16.msra.mxu0 0
    %2724 = vmatprep.subr.bf16.mxu0 0
    %2725 = vmatpush2.bf16.msra.mxu0 0
    %2726 = vmatprep.subr.bf16.mxu0 0
    %2727 = vmatpush2.bf16.msra.mxu0 0
    %2728 = vmatprep.mubr.bf16.mxu0 0
    %2729 = vmatmul.mubr.bf16.gmra.mxu0 %v2654
    %v2730 = vpop.f32.mrf.mxu0
    %v2731 = vadd.f32 0.0, %v2730
    %v2732 = vpop.f32.mrf.mxu0
    %v2733 = vpop.f32.mrf.mxu0
    %v2734 = vpop.f32.mrf.mxu0
    %2735 = vdwg.mxu0
    %v2736 = vadd.f32 %v2651, %v2690
    %v2737 = vadd.f32 %v2652, %v2692
    %v2738 = vxor.u32 %v2736, 2147483648
    %v2739 = vxor.u32 %v2737, 2147483648
    %v2740 = vmul.f32 %v2738, 1.442695
    %v2741 = vpow.pop %v2740
    %v2742 = vmul.f32 %v2739, 1.442695
    %v2743 = vpow.pop %v2742
    %v2744 = vadd.f32 %v2741, 1.0
    %v2745 = vadd.f32 %v2743, 1.0
    %v2746 = vrcp.pop %v2744
    %v2747 = vmul.f32 1.0, %v2746
    %v2748 = vrcp.pop %v2745
    %v2749 = vmul.f32 1.0, %v2748
    %v2750 = vadd.f32 %v2731, %v2200
    %v2751 = vmul.f32 %v2747, %v2750
    %v2752 = vadd.f32 %v2653, %v2751
    %v2753 = vtanh.pop %v2752
    %v2754 = vsub.f32 %v2649, %v2753
    %v2755 = vmul.f32 %v2749, %v2754
    %v2756 = vadd.f32 %v2753, %v2755
    %2757 = vst [vmem:[#allocation4 + $0x18] sm:$0xff] %v2756
    %v2758 = vld [vmem:[#allocation2 + $0x60] sm:$0xff]
    %v2759 = vld [vmem:[#allocation2 + $0x68] sm:$0xff]
    %v2760 = vld [vmem:[#allocation2 + $0x70] sm:$0xff]
    %v2761 = vpack.c.bf16 %v2756, %v2756
    %2762 = vmatprep.subr.bf16.mxu0 %v2308
    %2763 = vmatpush1.bf16.msra.mxu0 %v2307
    %2764 = vmatprep.subr.bf16.mxu0 %v2305
    %2765 = vmatpush1.bf16.msra.mxu0 %v2304
    %2766 = vmatprep.subr.bf16.mxu0 %v2302
    %2767 = vmatpush1.bf16.msra.mxu0 %v2301
    %2768 = vmatprep.subr.bf16.mxu0 %v2299
    %2769 = vmatpush1.bf16.msra.mxu0 %v2298
    %2770 = vmatprep.subr.bf16.mxu0 %v2296
    %2771 = vmatpush1.bf16.msra.mxu0 %v2295
    %2772 = vmatprep.subr.bf16.mxu0 %v2293
    %2773 = vmatpush1.bf16.msra.mxu0 %v2292
    %2774 = vmatprep.subr.bf16.mxu0 %v2290
    %2775 = vmatpush1.bf16.msra.mxu0 %v2289
    %2776 = vmatprep.subr.bf16.mxu0 %v2287
    %2777 = vmatpush1.bf16.msra.mxu0 %v2286
    %2778 = vmatprep.subr.bf16.mxu0 0
    %2779 = vmatpush2.bf16.msra.mxu0 0
    %2780 = vmatprep.subr.bf16.mxu0 0
    %2781 = vmatpush2.bf16.msra.mxu0 0
    %2782 = vmatprep.subr.bf16.mxu0 0
    %2783 = vmatpush2.bf16.msra.mxu0 0
    %2784 = vmatprep.subr.bf16.mxu0 0
    %2785 = vmatpush2.bf16.msra.mxu0 0
    %2786 = vmatprep.subr.bf16.mxu0 0
    %2787 = vmatpush2.bf16.msra.mxu0 0
    %2788 = vmatprep.subr.bf16.mxu0 0
    %2789 = vmatpush2.bf16.msra.mxu0 0
    %2790 = vmatprep.subr.bf16.mxu0 0
    %2791 = vmatpush2.bf16.msra.mxu0 0
    %2792 = vmatprep.subr.bf16.mxu0 0
    %2793 = vmatpush2.bf16.msra.mxu0 0
    %2794 = vmatprep.mubr.bf16.mxu0 0
    %2795 = vmatmul.mubr.bf16.gmra.mxu0 %v2761
    %v2796 = vpop.f32.mrf.mxu0
    %v2797 = vadd.f32 0.0, %v2796
    %v2798 = vpop.f32.mrf.mxu0
    %v2799 = vadd.f32 0.0, %v2798
    %v2800 = vpop.f32.mrf.mxu0
    %v2801 = vpop.f32.mrf.mxu0
    %2802 = vdwg.mxu0
    %2803 = vmatprep.subr.bf16.mxu0 0
    %2804 = vmatpush1.bf16.msra.mxu0 %v2309
    %2805 = vmatprep.subr.bf16.mxu0 0
    %2806 = vmatpush1.bf16.msra.mxu0 %v2306
    %2807 = vmatprep.subr.bf16.mxu0 0
    %2808 = vmatpush1.bf16.msra.mxu0 %v2303
    %2809 = vmatprep.subr.bf16.mxu0 0
    %2810 = vmatpush1.bf16.msra.mxu0 %v2300
    %2811 = vmatprep.subr.bf16.mxu0 0
    %2812 = vmatpush1.bf16.msra.mxu0 %v2297
    %2813 = vmatprep.subr.bf16.mxu0 0
    %2814 = vmatpush1.bf16.msra.mxu0 %v2294
    %2815 = vmatprep.subr.bf16.mxu0 0
    %2816 = vmatpush1.bf16.msra.mxu0 %v2291
    %2817 = vmatprep.subr.bf16.mxu0 0
    %2818 = vmatpush1.bf16.msra.mxu0 %v2288
    %2819 = vmatprep.subr.bf16.mxu0 0
    %2820 = vmatpush2.bf16.msra.mxu0 0
    %2821 = vmatprep.subr.bf16.mxu0 0
    %2822 = vmatpush2.bf16.msra.mxu0 0
    %2823 = vmatprep.subr.bf16.mxu0 0
    %2824 = vmatpush2.bf16.msra.mxu0 0
    %2825 = vmatprep.subr.bf16.mxu0 0
    %2826 = vmatpush2.bf16.msra.mxu0 0
    %2827 = vmatprep.subr.bf16.mxu0 0
    %2828 = vmatpush2.bf16.msra.mxu0 0
    %2829 = vmatprep.subr.bf16.mxu0 0
    %2830 = vmatpush2.bf16.msra.mxu0 0
    %2831 = vmatprep.subr.bf16.mxu0 0
    %2832 = vmatpush2.bf16.msra.mxu0 0
    %2833 = vmatprep.subr.bf16.mxu0 0
    %2834 = vmatpush2.bf16.msra.mxu0 0
    %2835 = vmatprep.mubr.bf16.mxu0 0
    %2836 = vmatmul.mubr.bf16.gmra.mxu0 %v2761
    %v2837 = vpop.f32.mrf.mxu0
    %v2838 = vadd.f32 0.0, %v2837
    %v2839 = vpop.f32.mrf.mxu0
    %v2840 = vpop.f32.mrf.mxu0
    %v2841 = vpop.f32.mrf.mxu0
    %2842 = vdwg.mxu0
    %v2843 = vadd.f32 %v2758, %v2797
    %v2844 = vadd.f32 %v2759, %v2799
    %v2845 = vxor.u32 %v2843, 2147483648
    %v2846 = vxor.u32 %v2844, 2147483648
    %v2847 = vmul.f32 %v2845, 1.442695
    %v2848 = vpow.pop %v2847
    %v2849 = vmul.f32 %v2846, 1.442695
    %v2850 = vpow.pop %v2849
    %v2851 = vadd.f32 %v2848, 1.0
    %v2852 = vadd.f32 %v2850, 1.0
    %v2853 = vrcp.pop %v2851
    %v2854 = vmul.f32 1.0, %v2853
    %v2855 = vrcp.pop %v2852
    %v2856 = vmul.f32 1.0, %v2855
    %v2857 = vadd.f32 %v2838, %v2200
    %v2858 = vmul.f32 %v2854, %v2857
    %v2859 = vadd.f32 %v2760, %v2858
    %v2860 = vtanh.pop %v2859
    %v2861 = vsub.f32 %v2756, %v2860
    %v2862 = vmul.f32 %v2856, %v2861
    %v2863 = vadd.f32 %v2860, %v2862
    %2864 = vst [vmem:[#allocation4 + $0x20] sm:$0xff] %v2863
    %v2865 = vld [vmem:[#allocation2 + $0x78] sm:$0xff]
    %v2866 = vld [vmem:[#allocation2 + $0x80] sm:$0xff]
    %v2867 = vld [vmem:[#allocation2 + $0x88] sm:$0xff]
    %v2868 = vpack.c.bf16 %v2863, %v2863
    %2869 = vmatprep.subr.bf16.mxu0 %v2308
    %2870 = vmatpush1.bf16.msra.mxu0 %v2307
    %2871 = vmatprep.subr.bf16.mxu0 %v2305
    %2872 = vmatpush1.bf16.msra.mxu0 %v2304
    %2873 = vmatprep.subr.bf16.mxu0 %v2302
    %2874 = vmatpush1.bf16.msra.mxu0 %v2301
    %2875 = vmatprep.subr.bf16.mxu0 %v2299
    %2876 = vmatpush1.bf16.msra.mxu0 %v2298
    %2877 = vmatprep.subr.bf16.mxu0 %v2296
    %2878 = vmatpush1.bf16.msra.mxu0 %v2295
    %2879 = vmatprep.subr.bf16.mxu0 %v2293
    %2880 = vmatpush1.bf16.msra.mxu0 %v2292
    %2881 = vmatprep.subr.bf16.mxu0 %v2290
    %2882 = vmatpush1.bf16.msra.mxu0 %v2289
    %2883 = vmatprep.subr.bf16.mxu0 %v2287
    %2884 = vmatpush1.bf16.msra.mxu0 %v2286
    %2885 = vmatprep.subr.bf16.mxu0 0
    %2886 = vmatpush2.bf16.msra.mxu0 0
    %2887 = vmatprep.subr.bf16.mxu0 0
    %2888 = vmatpush2.bf16.msra.mxu0 0
    %2889 = vmatprep.subr.bf16.mxu0 0
    %2890 = vmatpush2.bf16.msra.mxu0 0
    %2891 = vmatprep.subr.bf16.mxu0 0
    %2892 = vmatpush2.bf16.msra.mxu0 0
    %2893 = vmatprep.subr.bf16.mxu0 0
    %2894 = vmatpush2.bf16.msra.mxu0 0
    %2895 = vmatprep.subr.bf16.mxu0 0
    %2896 = vmatpush2.bf16.msra.mxu0 0
    %2897 = vmatprep.subr.bf16.mxu0 0
    %2898 = vmatpush2.bf16.msra.mxu0 0
    %2899 = vmatprep.subr.bf16.mxu0 0
    %2900 = vmatpush2.bf16.msra.mxu0 0
    %2901 = vmatprep.mubr.bf16.mxu0 0
    %2902 = vmatmul.mubr.bf16.gmra.mxu0 %v2868
    %v2903 = vpop.f32.mrf.mxu0
    %v2904 = vadd.f32 0.0, %v2903
    %v2905 = vpop.f32.mrf.mxu0
    %v2906 = vadd.f32 0.0, %v2905
    %v2907 = vpop.f32.mrf.mxu0
    %v2908 = vpop.f32.mrf.mxu0
    %2909 = vdwg.mxu0
    %2910 = vmatprep.subr.bf16.mxu0 0
    %2911 = vmatpush1.bf16.msra.mxu0 %v2309
    %2912 = vmatprep.subr.bf16.mxu0 0
    %2913 = vmatpush1.bf16.msra.mxu0 %v2306
    %2914 = vmatprep.subr.bf16.mxu0 0
    %2915 = vmatpush1.bf16.msra.mxu0 %v2303
    %2916 = vmatprep.subr.bf16.mxu0 0
    %2917 = vmatpush1.bf16.msra.mxu0 %v2300
    %2918 = vmatprep.subr.bf16.mxu0 0
    %2919 = vmatpush1.bf16.msra.mxu0 %v2297
    %2920 = vmatprep.subr.bf16.mxu0 0
    %2921 = vmatpush1.bf16.msra.mxu0 %v2294
    %2922 = vmatprep.subr.bf16.mxu0 0
    %2923 = vmatpush1.bf16.msra.mxu0 %v2291
    %2924 = vmatprep.subr.bf16.mxu0 0
    %2925 = vmatpush1.bf16.msra.mxu0 %v2288
    %2926 = vmatprep.subr.bf16.mxu0 0
    %2927 = vmatpush2.bf16.msra.mxu0 0
    %2928 = vmatprep.subr.bf16.mxu0 0
    %2929 = vmatpush2.bf16.msra.mxu0 0
    %2930 = vmatprep.subr.bf16.mxu0 0
    %2931 = vmatpush2.bf16.msra.mxu0 0
    %2932 = vmatprep.subr.bf16.mxu0 0
    %2933 = vmatpush2.bf16.msra.mxu0 0
    %2934 = vmatprep.subr.bf16.mxu0 0
    %2935 = vmatpush2.bf16.msra.mxu0 0
    %2936 = vmatprep.subr.bf16.mxu0 0
    %2937 = vmatpush2.bf16.msra.mxu0 0
    %2938 = vmatprep.subr.bf16.mxu0 0
    %2939 = vmatpush2.bf16.msra.mxu0 0
    %2940 = vmatprep.subr.bf16.mxu0 0
    %2941 = vmatpush2.bf16.msra.mxu0 0
    %2942 = vmatprep.mubr.bf16.mxu0 0
    %2943 = vmatmul.mubr.bf16.gmra.mxu0 %v2868
    %v2944 = vpop.f32.mrf.mxu0
    %v2945 = vadd.f32 0.0, %v2944
    %v2946 = vpop.f32.mrf.mxu0
    %v2947 = vpop.f32.mrf.mxu0
    %v2948 = vpop.f32.mrf.mxu0
    %2949 = vdwg.mxu0
    %v2950 = vadd.f32 %v2865, %v2904
    %v2951 = vadd.f32 %v2866, %v2906
    %v2952 = vxor.u32 %v2950, 2147483648
    %v2953 = vxor.u32 %v2951, 2147483648
    %v2954 = vmul.f32 %v2952, 1.442695
    %v2955 = vpow.pop %v2954
    %v2956 = vmul.f32 %v2953, 1.442695
    %v2957 = vpow.pop %v2956
    %v2958 = vadd.f32 %v2955, 1.0
    %v2959 = vadd.f32 %v2957, 1.0
    %v2960 = vrcp.pop %v2958
    %v2961 = vmul.f32 1.0, %v2960
    %v2962 = vrcp.pop %v2959
    %v2963 = vmul.f32 1.0, %v2962
    %v2964 = vadd.f32 %v2945, %v2200
    %v2965 = vmul.f32 %v2961, %v2964
    %v2966 = vadd.f32 %v2867, %v2965
    %v2967 = vtanh.pop %v2966
    %v2968 = vsub.f32 %v2863, %v2967
    %v2969 = vmul.f32 %v2963, %v2968
    %v2970 = vadd.f32 %v2967, %v2969
    %2971 = vst [vmem:[#allocation4 + $0x28] sm:$0xff] %v2970
    %v2972 = vld [vmem:[#allocation2 + $0x90] sm:$0xff]
    %v2973 = vld [vmem:[#allocation2 + $0x98] sm:$0xff]
    %v2974 = vld [vmem:[#allocation2 + $0xa0] sm:$0xff]
    %v2975 = vpack.c.bf16 %v2970, %v2970
    %2976 = vmatprep.subr.bf16.mxu0 %v2308
    %2977 = vmatpush1.bf16.msra.mxu0 %v2307
    %2978 = vmatprep.subr.bf16.mxu0 %v2305
    %2979 = vmatpush1.bf16.msra.mxu0 %v2304
    %2980 = vmatprep.subr.bf16.mxu0 %v2302
    %2981 = vmatpush1.bf16.msra.mxu0 %v2301
    %2982 = vmatprep.subr.bf16.mxu0 %v2299
    %2983 = vmatpush1.bf16.msra.mxu0 %v2298
    %2984 = vmatprep.subr.bf16.mxu0 %v2296
    %2985 = vmatpush1.bf16.msra.mxu0 %v2295
    %2986 = vmatprep.subr.bf16.mxu0 %v2293
    %2987 = vmatpush1.bf16.msra.mxu0 %v2292
    %2988 = vmatprep.subr.bf16.mxu0 %v2290
    %2989 = vmatpush1.bf16.msra.mxu0 %v2289
    %2990 = vmatprep.subr.bf16.mxu0 %v2287
    %2991 = vmatpush1.bf16.msra.mxu0 %v2286
    %2992 = vmatprep.subr.bf16.mxu0 0
    %2993 = vmatpush2.bf16.msra.mxu0 0
    %2994 = vmatprep.subr.bf16.mxu0 0
    %2995 = vmatpush2.bf16.msra.mxu0 0
    %2996 = vmatprep.subr.bf16.mxu0 0
    %2997 = vmatpush2.bf16.msra.mxu0 0
    %2998 = vmatprep.subr.bf16.mxu0 0
    %2999 = vmatpush2.bf16.msra.mxu0 0
    %3000 = vmatprep.subr.bf16.mxu0 0
    %3001 = vmatpush2.bf16.msra.mxu0 0
    %3002 = vmatprep.subr.bf16.mxu0 0
    %3003 = vmatpush2.bf16.msra.mxu0 0
    %3004 = vmatprep.subr.bf16.mxu0 0
    %3005 = vmatpush2.bf16.msra.mxu0 0
    %3006 = vmatprep.subr.bf16.mxu0 0
    %3007 = vmatpush2.bf16.msra.mxu0 0
    %3008 = vmatprep.mubr.bf16.mxu0 0
    %3009 = vmatmul.mubr.bf16.gmra.mxu0 %v2975
    %v3010 = vpop.f32.mrf.mxu0
    %v3011 = vadd.f32 0.0, %v3010
    %v3012 = vpop.f32.mrf.mxu0
    %v3013 = vadd.f32 0.0, %v3012
    %v3014 = vpop.f32.mrf.mxu0
    %v3015 = vpop.f32.mrf.mxu0
    %3016 = vdwg.mxu0
    %3017 = vmatprep.subr.bf16.mxu0 0
    %3018 = vmatpush1.bf16.msra.mxu0 %v2309
    %3019 = vmatprep.subr.bf16.mxu0 0
    %3020 = vmatpush1.bf16.msra.mxu0 %v2306
    %3021 = vmatprep.subr.bf16.mxu0 0
    %3022 = vmatpush1.bf16.msra.mxu0 %v2303
    %3023 = vmatprep.subr.bf16.mxu0 0
    %3024 = vmatpush1.bf16.msra.mxu0 %v2300
    %3025 = vmatprep.subr.bf16.mxu0 0
    %3026 = vmatpush1.bf16.msra.mxu0 %v2297
    %3027 = vmatprep.subr.bf16.mxu0 0
    %3028 = vmatpush1.bf16.msra.mxu0 %v2294
    %3029 = vmatprep.subr.bf16.mxu0 0
    %3030 = vmatpush1.bf16.msra.mxu0 %v2291
    %3031 = vmatprep.subr.bf16.mxu0 0
    %3032 = vmatpush1.bf16.msra.mxu0 %v2288
    %3033 = vmatprep.subr.bf16.mxu0 0
    %3034 = vmatpush2.bf16.msra.mxu0 0
    %3035 = vmatprep.subr.bf16.mxu0 0
    %3036 = vmatpush2.bf16.msra.mxu0 0
    %3037 = vmatprep.subr.bf16.mxu0 0
    %3038 = vmatpush2.bf16.msra.mxu0 0
    %3039 = vmatprep.subr.bf16.mxu0 0
    %3040 = vmatpush2.bf16.msra.mxu0 0
    %3041 = vmatprep.subr.bf16.mxu0 0
    %3042 = vmatpush2.bf16.msra.mxu0 0
    %3043 = vmatprep.subr.bf16.mxu0 0
    %3044 = vmatpush2.bf16.msra.mxu0 0
    %3045 = vmatprep.subr.bf16.mxu0 0
    %3046 = vmatpush2.bf16.msra.mxu0 0
    %3047 = vmatprep.subr.bf16.mxu0 0
    %3048 = vmatpush2.bf16.msra.mxu0 0
    %3049 = vmatprep.mubr.bf16.mxu0 0
    %3050 = vmatmul.mubr.bf16.gmra.mxu0 %v2975
    %v3051 = vpop.f32.mrf.mxu0
    %v3052 = vadd.f32 0.0, %v3051
    %v3053 = vpop.f32.mrf.mxu0
    %v3054 = vpop.f32.mrf.mxu0
    %v3055 = vpop.f32.mrf.mxu0
    %3056 = vdwg.mxu0
    %v3057 = vadd.f32 %v2972, %v3011
    %v3058 = vadd.f32 %v2973, %v3013
    %v3059 = vxor.u32 %v3057, 2147483648
    %v3060 = vxor.u32 %v3058, 2147483648
    %v3061 = vmul.f32 %v3059, 1.442695
    %v3062 = vpow.pop %v3061
    %v3063 = vmul.f32 %v3060, 1.442695
    %v3064 = vpow.pop %v3063
    %v3065 = vadd.f32 %v3062, 1.0
    %v3066 = vadd.f32 %v3064, 1.0
    %v3067 = vrcp.pop %v3065
    %v3068 = vmul.f32 1.0, %v3067
    %v3069 = vrcp.pop %v3066
    %v3070 = vmul.f32 1.0, %v3069
    %v3071 = vadd.f32 %v3052, %v2200
    %v3072 = vmul.f32 %v3068, %v3071
    %v3073 = vadd.f32 %v2974, %v3072
    %v3074 = vtanh.pop %v3073
    %v3075 = vsub.f32 %v2970, %v3074
    %v3076 = vmul.f32 %v3070, %v3075
    %v3077 = vadd.f32 %v3074, %v3076
    %3078 = vst [vmem:[#allocation4 + $0x30] sm:$0xff] %v3077
    %v3079 = vld [vmem:[#allocation2 + $0xa8] sm:$0xff]
    %v3080 = vld [vmem:[#allocation2 + $0xb0] sm:$0xff]
    %v3081 = vld [vmem:[#allocation2 + $0xb8] sm:$0xff]
    %v3082 = vpack.c.bf16 %v3077, %v3077
    %3083 = vmatprep.subr.bf16.mxu0 %v2308
    %3084 = vmatpush1.bf16.msra.mxu0 %v2307
    %3085 = vmatprep.subr.bf16.mxu0 %v2305
    %3086 = vmatpush1.bf16.msra.mxu0 %v2304
    %3087 = vmatprep.subr.bf16.mxu0 %v2302
    %3088 = vmatpush1.bf16.msra.mxu0 %v2301
    %3089 = vmatprep.subr.bf16.mxu0 %v2299
    %3090 = vmatpush1.bf16.msra.mxu0 %v2298
    %3091 = vmatprep.subr.bf16.mxu0 %v2296
    %3092 = vmatpush1.bf16.msra.mxu0 %v2295
    %3093 = vmatprep.subr.bf16.mxu0 %v2293
    %3094 = vmatpush1.bf16.msra.mxu0 %v2292
    %3095 = vmatprep.subr.bf16.mxu0 %v2290
    %3096 = vmatpush1.bf16.msra.mxu0 %v2289
    %3097 = vmatprep.subr.bf16.mxu0 %v2287
    %3098 = vmatpush1.bf16.msra.mxu0 %v2286
    %3099 = vmatprep.subr.bf16.mxu0 0
    %3100 = vmatpush2.bf16.msra.mxu0 0
    %3101 = vmatprep.subr.bf16.mxu0 0
    %3102 = vmatpush2.bf16.msra.mxu0 0
    %3103 = vmatprep.subr.bf16.mxu0 0
    %3104 = vmatpush2.bf16.msra.mxu0 0
    %3105 = vmatprep.subr.bf16.mxu0 0
    %3106 = vmatpush2.bf16.msra.mxu0 0
    %3107 = vmatprep.subr.bf16.mxu0 0
    %3108 = vmatpush2.bf16.msra.mxu0 0
    %3109 = vmatprep.subr.bf16.mxu0 0
    %3110 = vmatpush2.bf16.msra.mxu0 0
    %3111 = vmatprep.subr.bf16.mxu0 0
    %3112 = vmatpush2.bf16.msra.mxu0 0
    %3113 = vmatprep.subr.bf16.mxu0 0
    %3114 = vmatpush2.bf16.msra.mxu0 0
    %3115 = vmatprep.mubr.bf16.mxu0 0
    %3116 = vmatmul.mubr.bf16.gmra.mxu0 %v3082
    %v3117 = vpop.f32.mrf.mxu0
    %v3118 = vadd.f32 0.0, %v3117
    %v3119 = vpop.f32.mrf.mxu0
    %v3120 = vadd.f32 0.0, %v3119
    %v3121 = vpop.f32.mrf.mxu0
    %v3122 = vpop.f32.mrf.mxu0
    %3123 = vdwg.mxu0
    %3124 = vmatprep.subr.bf16.mxu0 0
    %3125 = vmatpush1.bf16.msra.mxu0 %v2309
    %3126 = vmatprep.subr.bf16.mxu0 0
    %3127 = vmatpush1.bf16.msra.mxu0 %v2306
    %3128 = vmatprep.subr.bf16.mxu0 0
    %3129 = vmatpush1.bf16.msra.mxu0 %v2303
    %3130 = vmatprep.subr.bf16.mxu0 0
    %3131 = vmatpush1.bf16.msra.mxu0 %v2300
    %3132 = vmatprep.subr.bf16.mxu0 0
    %3133 = vmatpush1.bf16.msra.mxu0 %v2297
    %3134 = vmatprep.subr.bf16.mxu0 0
    %3135 = vmatpush1.bf16.msra.mxu0 %v2294
    %3136 = vmatprep.subr.bf16.mxu0 0
    %3137 = vmatpush1.bf16.msra.mxu0 %v2291
    %3138 = vmatprep.subr.bf16.mxu0 0
    %3139 = vmatpush1.bf16.msra.mxu0 %v2288
    %3140 = vmatprep.subr.bf16.mxu0 0
    %3141 = vmatpush2.bf16.msra.mxu0 0
    %3142 = vmatprep.subr.bf16.mxu0 0
    %3143 = vmatpush2.bf16.msra.mxu0 0
    %3144 = vmatprep.subr.bf16.mxu0 0
    %3145 = vmatpush2.bf16.msra.mxu0 0
    %3146 = vmatprep.subr.bf16.mxu0 0
    %3147 = vmatpush2.bf16.msra.mxu0 0
    %3148 = vmatprep.subr.bf16.mxu0 0
    %3149 = vmatpush2.bf16.msra.mxu0 0
    %3150 = vmatprep.subr.bf16.mxu0 0
    %3151 = vmatpush2.bf16.msra.mxu0 0
    %3152 = vmatprep.subr.bf16.mxu0 0
    %3153 = vmatpush2.bf16.msra.mxu0 0
    %3154 = vmatprep.subr.bf16.mxu0 0
    %3155 = vmatpush2.bf16.msra.mxu0 0
    %3156 = vmatprep.mubr.bf16.mxu0 0
    %3157 = vmatmul.mubr.bf16.gmra.mxu0 %v3082
    %v3158 = vpop.f32.mrf.mxu0
    %v3159 = vadd.f32 0.0, %v3158
    %v3160 = vpop.f32.mrf.mxu0
    %v3161 = vpop.f32.mrf.mxu0
    %v3162 = vpop.f32.mrf.mxu0
    %3163 = vdwg.mxu0
    %v3164 = vadd.f32 %v3079, %v3118
    %v3165 = vadd.f32 %v3080, %v3120
    %v3166 = vxor.u32 %v3164, 2147483648
    %v3167 = vxor.u32 %v3165, 2147483648
    %v3168 = vmul.f32 %v3166, 1.442695
    %v3169 = vpow.pop %v3168
    %v3170 = vmul.f32 %v3167, 1.442695
    %v3171 = vpow.pop %v3170
    %v3172 = vadd.f32 %v3169, 1.0
    %v3173 = vadd.f32 %v3171, 1.0
    %v3174 = vrcp.pop %v3172
    %v3175 = vmul.f32 1.0, %v3174
    %v3176 = vrcp.pop %v3173
    %v3177 = vmul.f32 1.0, %v3176
    %v3178 = vadd.f32 %v3159, %v2200
    %v3179 = vmul.f32 %v3175, %v3178
    %v3180 = vadd.f32 %v3081, %v3179
    %v3181 = vtanh.pop %v3180
    %v3182 = vsub.f32 %v3077, %v3181
    %v3183 = vmul.f32 %v3177, %v3182
    %v3184 = vadd.f32 %v3181, %v3183
    %3185 = vst [vmem:[#allocation4 + $0x38] sm:$0xff] %v3184
    %3187 = vrot.lane.b32.xlu0 %v3184, 64
    %v3188 = vpop.permute.xlu0 %3187
    %vm3190 = vcmask 523264
    %v3191 = vsel %vm3190, %v1482, %v3188
    %3192 = vst [vmem:[#allocation25] sm:$0xff] %v3191
    %v3193 = vld [vmem:[#allocation4] sm:$0xff]
    %v3194 = vld [vmem:[#allocation4 + $0x8] sm:$0xff]
    %v3195 = vld [vmem:[#allocation4 + $0x10] sm:$0xff]
    %v3196 = vld [vmem:[#allocation4 + $0x18] sm:$0xff]
    %v3197 = vld [vmem:[#allocation4 + $0x20] sm:$0xff]
    %v3198 = vld [vmem:[#allocation4 + $0x28] sm:$0xff]
    %v3199 = vld [vmem:[#allocation4 + $0x30] sm:$0xff]
    %v3200 = vld [vmem:[#allocation4 + $0x38] sm:$0xff]
    %v3201 = vpack.c.bf16 %v3194, %v3193
    %v3202 = vpack.c.bf16 %v3196, %v3195
    %v3203 = vpack.c.bf16 %v3198, %v3197
    %v3204 = vpack.c.bf16 %v3200, %v3199
    %v3205 = vld [vmem:[%s11] sm:$0xf]
    %v3206 = vld [vmem:[%s11 + $0x4] sm:$0xf]
    %v3207 = vld [vmem:[%s11 + $0x8] sm:$0xf]
    %v3208 = vld [vmem:[%s11 + $0xc] sm:$0xf]
    %v3209 = vld [vmem:[%s11 + $0x10] sm:$0xf]
    %v3210 = vld [vmem:[%s11 + $0x14] sm:$0xf]
    %v3211 = vld [vmem:[%s11 + $0x18] sm:$0xf]
    %v3212 = vld [vmem:[%s11 + $0x1c] sm:$0xf]
    %v3213 = vld [vmem:[%s11 + $0x20] sm:$0xf]
    %v3214 = vld [vmem:[%s11 + $0x24] sm:$0xf]
    %v3215 = vld [vmem:[%s11 + $0x28] sm:$0xf]
    %v3216 = vld [vmem:[%s11 + $0x2c] sm:$0xf]
    %v3217 = vld [vmem:[%s11 + $0x30] sm:$0xf]
    %v3218 = vld [vmem:[%s11 + $0x34] sm:$0xf]
    %v3219 = vld [vmem:[%s11 + $0x38] sm:$0xf]
    %v3220 = vld [vmem:[%s11 + $0x3c] sm:$0xf]
    %v3221 = vpack.c.bf16 %v3199, %v3200
    %v3222 = vpack.c.bf16 %v3197, %v3198
    %v3223 = vpack.c.bf16 %v3195, %v3196
    %v3224 = vpack.c.bf16 %v3193, %v3194
    %v3225 = vld [vmem:[#allocation21] sm:$0xf]
    %v3226 = vld [vmem:[#allocation21 + $0x4] sm:$0xf]
    %v3227 = vld [vmem:[#allocation21 + $0x8] sm:$0xf]
    %v3228 = vld [vmem:[#allocation21 + $0xc] sm:$0xf]
    %v3229 = vld [vmem:[#allocation21 + $0x10] sm:$0xf]
    %v3230 = vld [vmem:[#allocation21 + $0x14] sm:$0xf]
    %v3231 = vld [vmem:[#allocation21 + $0x18] sm:$0xf]
    %v3232 = vld [vmem:[#allocation21 + $0x1c] sm:$0xf]
    %v3233 = vld [vmem:[#allocation21 + $0x20] sm:$0xf]
    %v3234 = vld [vmem:[#allocation21 + $0x24] sm:$0xf]
    %v3235 = vld [vmem:[#allocation21 + $0x28] sm:$0xf]
    %v3236 = vld [vmem:[#allocation21 + $0x2c] sm:$0xf]
    %v3237 = vld [vmem:[#allocation21 + $0x30] sm:$0xf]
    %v3238 = vld [vmem:[#allocation21 + $0x34] sm:$0xf]
    %v3239 = vld [vmem:[#allocation21 + $0x38] sm:$0xf]
    %v3240 = vld [vmem:[#allocation21 + $0x3c] sm:$0xf]
    %v3257 = vunpack.c.l.b16 %v3225
    %v3258 = vunpack.c.l.b16 %v3226
    %v3259 = vunpack.c.l.b16 %v3227
    %v3260 = vunpack.c.l.b16 %v3228
    %v3261 = vunpack.c.l.b16 %v3229
    %v3262 = vunpack.c.l.b16 %v3230
    %v3263 = vunpack.c.l.b16 %v3231
    %v3264 = vunpack.c.l.b16 %v3232
    %v3265 = vunpack.c.l.b16 %v3233
    %v3266 = vunpack.c.l.b16 %v3234
    %v3267 = vunpack.c.l.b16 %v3235
    %v3268 = vunpack.c.l.b16 %v3236
    %v3269 = vunpack.c.l.b16 %v3237
    %v3270 = vunpack.c.l.b16 %v3238
    %v3271 = vunpack.c.l.b16 %v3239
    %v3272 = vunpack.c.l.b16 %v3240
    %v3273 = vpack.c.b16 %v3258, %v3257
    %v3274 = vpack.c.b16 %v3260, %v3259
    %v3275 = vpack.c.b16 %v3262, %v3261
    %v3276 = vpack.c.b16 %v3264, %v3263
    %v3277 = vpack.c.b16 %v3266, %v3265
    %v3278 = vpack.c.b16 %v3268, %v3267
    %v3279 = vpack.c.b16 %v3270, %v3269
    %v3280 = vpack.c.b16 %v3272, %v3271
    %3289 = vmatprep.subr.bf16.mxu0 0
    %3290 = vmatpush1.bf16.msra.mxu0 %v3280
    %3291 = vmatprep.subr.bf16.mxu0 0
    %3292 = vmatpush1.bf16.msra.mxu0 %v3279
    %3293 = vmatprep.subr.bf16.mxu0 0
    %3294 = vmatpush1.bf16.msra.mxu0 %v3278
    %3295 = vmatprep.subr.bf16.mxu0 0
    %3296 = vmatpush1.bf16.msra.mxu0 %v3277
    %3297 = vmatprep.subr.bf16.mxu0 0
    %3298 = vmatpush1.bf16.msra.mxu0 %v3276
    %3299 = vmatprep.subr.bf16.mxu0 0
    %3300 = vmatpush1.bf16.msra.mxu0 %v3275
    %3301 = vmatprep.subr.bf16.mxu0 0
    %3302 = vmatpush1.bf16.msra.mxu0 %v3274
    %3303 = vmatprep.subr.bf16.mxu0 0
    %3304 = vmatpush1.bf16.msra.mxu0 %v3273
    %3305 = vmatprep.subr.bf16.mxu0 0
    %3306 = vmatpush2.bf16.msra.mxu0 0
    %3307 = vmatprep.subr.bf16.mxu0 0
    %3308 = vmatpush2.bf16.msra.mxu0 0
    %3309 = vmatprep.subr.bf16.mxu0 0
    %3310 = vmatpush2.bf16.msra.mxu0 0
    %3311 = vmatprep.subr.bf16.mxu0 0
    %3312 = vmatpush2.bf16.msra.mxu0 0
    %3313 = vmatprep.subr.bf16.mxu0 0
    %3314 = vmatpush2.bf16.msra.mxu0 0
    %3315 = vmatprep.subr.bf16.mxu0 0
    %3316 = vmatpush2.bf16.msra.mxu0 0
    %3317 = vmatprep.subr.bf16.mxu0 0
    %3318 = vmatpush2.bf16.msra.mxu0 0
    %3319 = vmatprep.subr.bf16.mxu0 0
    %3320 = vmatpush2.bf16.msra.mxu0 0
    %3321 = vmatprep.mubr.bf16.mxu0 0
    %3322 = vmatmul.mubr.bf16.gmra.mxu0 %v3221
    %v3323 = vpop.f32.mrf.mxu0
    %v3324 = vadd.f32 0.0, %v3323
    %v3325 = vpop.f32.mrf.mxu0
    %v3326 = vpop.f32.mrf.mxu0
    %v3327 = vadd.f32 0.0, %v3326
    %v3328 = vpop.f32.mrf.mxu0
    %3329 = vmatprep.mubr.bf16.mxu0 0
    %3330 = vmatmul.mubr.bf16.gmra.mxu0 %v3222
    %v3331 = vpop.f32.mrf.mxu0
    %v3332 = vadd.f32 0.0, %v3331
    %v3333 = vpop.f32.mrf.mxu0
    %v3334 = vpop.f32.mrf.mxu0
    %v3335 = vadd.f32 0.0, %v3334
    %v3336 = vpop.f32.mrf.mxu0
    %3337 = vmatprep.mubr.bf16.mxu0 0
    %3338 = vmatmul.mubr.bf16.gmra.mxu0 %v3223
    %v3339 = vpop.f32.mrf.mxu0
    %v3340 = vadd.f32 0.0, %v3339
    %v3341 = vpop.f32.mrf.mxu0
    %v3342 = vpop.f32.mrf.mxu0
    %v3343 = vadd.f32 0.0, %v3342
    %v3344 = vpop.f32.mrf.mxu0
    %3345 = vmatprep.mubr.bf16.mxu0 0
    %3346 = vmatmul.mubr.bf16.gmra.mxu0 %v3224
    %v3347 = vpop.f32.mrf.mxu0
    %v3348 = vadd.f32 0.0, %v3347
    %v3349 = vpop.f32.mrf.mxu0
    %v3350 = vpop.f32.mrf.mxu0
    %v3351 = vadd.f32 0.0, %v3350
    %v3352 = vpop.f32.mrf.mxu0
    %3353 = vdwg.mxu0
    %v3370 = vunpack.c.l.b16 %v3205
    %v3371 = vunpack.c.l.b16 %v3206
    %v3372 = vunpack.c.l.b16 %v3207
    %v3373 = vunpack.c.l.b16 %v3208
    %v3374 = vunpack.c.l.b16 %v3209
    %v3375 = vunpack.c.l.b16 %v3210
    %v3376 = vunpack.c.l.b16 %v3211
    %v3377 = vunpack.c.l.b16 %v3212
    %v3378 = vunpack.c.l.b16 %v3213
    %v3379 = vunpack.c.l.b16 %v3214
    %v3380 = vunpack.c.l.b16 %v3215
    %v3381 = vunpack.c.l.b16 %v3216
    %v3382 = vunpack.c.l.b16 %v3217
    %v3383 = vunpack.c.l.b16 %v3218
    %v3384 = vunpack.c.l.b16 %v3219
    %v3385 = vunpack.c.l.b16 %v3220
    %v3386 = vpack.c.b16 %v3371, %v3370
    %v3387 = vpack.c.b16 %v3373, %v3372
    %v3388 = vpack.c.b16 %v3375, %v3374
    %v3389 = vpack.c.b16 %v3377, %v3376
    %v3390 = vpack.c.b16 %v3379, %v3378
    %v3391 = vpack.c.b16 %v3381, %v3380
    %v3392 = vpack.c.b16 %v3383, %v3382
    %v3393 = vpack.c.b16 %v3385, %v3384
    %3402 = vmatprep.subr.bf16.mxu0 0
    %3403 = vmatpush1.bf16.msra.mxu0 %v3393
    %3404 = vmatprep.subr.bf16.mxu0 0
    %3405 = vmatpush1.bf16.msra.mxu0 %v3392
    %3406 = vmatprep.subr.bf16.mxu0 0
    %3407 = vmatpush1.bf16.msra.mxu0 %v3391
    %3408 = vmatprep.subr.bf16.mxu0 0
    %3409 = vmatpush1.bf16.msra.mxu0 %v3390
    %3410 = vmatprep.subr.bf16.mxu0 0
    %3411 = vmatpush1.bf16.msra.mxu0 %v3389
    %3412 = vmatprep.subr.bf16.mxu0 0
    %3413 = vmatpush1.bf16.msra.mxu0 %v3388
    %3414 = vmatprep.subr.bf16.mxu0 0
    %3415 = vmatpush1.bf16.msra.mxu0 %v3387
    %3416 = vmatprep.subr.bf16.mxu0 0
    %3417 = vmatpush1.bf16.msra.mxu0 %v3386
    %3418 = vmatprep.subr.bf16.mxu0 0
    %3419 = vmatpush2.bf16.msra.mxu0 0
    %3420 = vmatprep.subr.bf16.mxu0 0
    %3421 = vmatpush2.bf16.msra.mxu0 0
    %3422 = vmatprep.subr.bf16.mxu0 0
    %3423 = vmatpush2.bf16.msra.mxu0 0
    %3424 = vmatprep.subr.bf16.mxu0 0
    %3425 = vmatpush2.bf16.msra.mxu0 0
    %3426 = vmatprep.subr.bf16.mxu0 0
    %3427 = vmatpush2.bf16.msra.mxu0 0
    %3428 = vmatprep.subr.bf16.mxu0 0
    %3429 = vmatpush2.bf16.msra.mxu0 0
    %3430 = vmatprep.subr.bf16.mxu0 0
    %3431 = vmatpush2.bf16.msra.mxu0 0
    %3432 = vmatprep.subr.bf16.mxu0 0
    %3433 = vmatpush2.bf16.msra.mxu0 0
    %3434 = vmatprep.mubr.bf16.mxu0 0
    %3435 = vmatmul.mubr.bf16.gmra.mxu0 %v3201
    %v3436 = vpop.f32.mrf.mxu0
    %v3437 = vadd.f32 %v3324, %v3436
    %v3438 = vpop.f32.mrf.mxu0
    %v3439 = vpop.f32.mrf.mxu0
    %v3440 = vadd.f32 %v3327, %v3439
    %v3441 = vpop.f32.mrf.mxu0
    %3442 = vmatprep.mubr.bf16.mxu0 0
    %3443 = vmatmul.mubr.bf16.gmra.mxu0 %v3202
    %v3444 = vpop.f32.mrf.mxu0
    %v3445 = vadd.f32 %v3332, %v3444
    %v3446 = vpop.f32.mrf.mxu0
    %v3447 = vpop.f32.mrf.mxu0
    %v3448 = vadd.f32 %v3335, %v3447
    %v3449 = vpop.f32.mrf.mxu0
    %3450 = vmatprep.mubr.bf16.mxu0 0
    %3451 = vmatmul.mubr.bf16.gmra.mxu0 %v3203
    %v3452 = vpop.f32.mrf.mxu0
    %v3453 = vadd.f32 %v3340, %v3452
    %v3454 = vpop.f32.mrf.mxu0
    %v3455 = vpop.f32.mrf.mxu0
    %v3456 = vadd.f32 %v3343, %v3455
    %v3457 = vpop.f32.mrf.mxu0
    %3458 = vmatprep.mubr.bf16.mxu0 0
    %3459 = vmatmul.mubr.bf16.gmra.mxu0 %v3204
    %v3460 = vpop.f32.mrf.mxu0
    %v3461 = vadd.f32 %v3348, %v3460
    %v3462 = vpop.f32.mrf.mxu0
    %v3463 = vpop.f32.mrf.mxu0
    %v3464 = vadd.f32 %v3351, %v3463
    %v3465 = vpop.f32.mrf.mxu0
    %3466 = vdwg.mxu0
    %v3467 = vld [vmem:[%s13] sm:$0x1]
    %v3469 = vlaneseq
    %v3470 = vshrl.u32 %v3469, 7
    %v3471 = vsub.s32 0, %v3470
    %v3472 = vrot.slane %v3467, %v3471
    %v3474 = vadd.f32 %v3437, %v3472
    %v3475 = vadd.f32 %v3440, %v3472
    %v3476 = vadd.f32 %v3445, %v3472
    %v3477 = vadd.f32 %v3448, %v3472
    %v3478 = vadd.f32 %v3453, %v3472
    %v3479 = vadd.f32 %v3456, %v3472
    %v3480 = vadd.f32 %v3461, %v3472
    %v3481 = vadd.f32 %v3464, %v3472
    %v3482 = vmax.f32 %v3474, 0.0
    %v3483 = vmax.f32 %v3475, 0.0
    %v3484 = vmax.f32 %v3476, 0.0
    %v3485 = vmax.f32 %v3477, 0.0
    %v3486 = vmax.f32 %v3478, 0.0
    %v3487 = vmax.f32 %v3479, 0.0
    %v3488 = vmax.f32 %v3480, 0.0
    %v3489 = vmax.f32 %v3481, 0.0
    %v3490 = vld [vmem:[%s14] sm:$0x1]
    %v3492 = vlaneseq
    %v3493 = vshrl.u32 %v3492, 7
    %v3494 = vsub.s32 0, %v3493
    %v3495 = vrot.slane %v3490, %v3494
    %v3497 = vmul.f32 %v3482, %v3495
    %v3498 = vmul.f32 %v3483, %v3495
    %v3499 = vmul.f32 %v3484, %v3495
    %v3500 = vmul.f32 %v3485, %v3495
    %v3501 = vmul.f32 %v3486, %v3495
    %v3502 = vmul.f32 %v3487, %v3495
    %v3503 = vmul.f32 %v3488, %v3495
    %v3504 = vmul.f32 %v3489, %v3495
    %3505 = vadd.xlane.f32.xlu0 %v3497
    %v3506 = vpop.xlane.xlu0 %3505
    %3507 = vadd.xlane.f32.xlu0 %v3498
    %v3508 = vpop.xlane.xlu0 %3507
    %3509 = vadd.xlane.f32.xlu0 %v3499
    %v3510 = vpop.xlane.xlu0 %3509
    %3511 = vadd.xlane.f32.xlu0 %v3500
    %v3512 = vpop.xlane.xlu0 %3511
    %3513 = vadd.xlane.f32.xlu0 %v3501
    %v3514 = vpop.xlane.xlu0 %3513
    %3515 = vadd.xlane.f32.xlu0 %v3502
    %v3516 = vpop.xlane.xlu0 %3515
    %3517 = vadd.xlane.f32.xlu0 %v3503
    %v3518 = vpop.xlane.xlu0 %3517
    %3519 = vadd.xlane.f32.xlu0 %v3504
    %v3520 = vpop.xlane.xlu0 %3519
    %v3521 = vld [vmem:[#allocation5] sm:$0x1]
    %v3523 = vlaneseq
    %v3524 = vshrl.u32 %v3523, 7
    %v3525 = vsub.s32 0, %v3524
    %v3526 = vrot.slane %v3521, %v3525
    %v3528 = vadd.f32 %v3506, %v3526
    %v3529 = vadd.f32 %v3508, %v3526
    %v3530 = vadd.f32 %v3510, %v3526
    %v3531 = vadd.f32 %v3512, %v3526
    %v3532 = vadd.f32 %v3514, %v3526
    %v3533 = vadd.f32 %v3516, %v3526
    %v3534 = vadd.f32 %v3518, %v3526
    %v3535 = vadd.f32 %v3520, %v3526
    %v3536 = vmax.f32 %v3528, 0.0
    %v3537 = vmax.f32 %v3529, 0.0
    %v3538 = vmax.f32 %v3530, 0.0
    %v3539 = vmax.f32 %v3531, 0.0
    %v3540 = vmax.f32 %v3532, 0.0
    %v3541 = vmax.f32 %v3533, 0.0
    %v3542 = vmax.f32 %v3534, 0.0
    %v3543 = vmax.f32 %v3535, 0.0
    %v3544 = vadd.f32 %v208, %v3536
    %v3545 = vadd.f32 %v209, %v3537
    %v3546 = vadd.f32 %v210, %v3538
    %v3547 = vadd.f32 %v211, %v3539
    %v3548 = vadd.f32 %v212, %v3540
    %v3549 = vadd.f32 %v213, %v3541
    %v3550 = vadd.f32 %v214, %v3542
    %v3551 = vadd.f32 %v215, %v3543
    %v3552 = vld [vmem:[%s17] sm:$0xff]
    %v3553 = vld [vmem:[#allocation23] sm:$0xff]
    %v3554 = vld [vmem:[#allocation23 + $0x8] sm:$0xff]
    %v3555 = vld [vmem:[#allocation23 + $0x10] sm:$0xff]
    %v3556 = vld [vmem:[#allocation23 + $0x18] sm:$0xff]
    %v3557 = vld [vmem:[#allocation23 + $0x20] sm:$0xff]
    %v3558 = vld [vmem:[#allocation23 + $0x28] sm:$0xff]
    %v3559 = vld [vmem:[#allocation23 + $0x30] sm:$0xff]
    %v3560 = vld [vmem:[#allocation23 + $0x38] sm:$0xff]
    %3562 = vset.pattern.permute.xlu0 0
    %3563 = vperm.xlu0 %3562, %v3544
    %v3564 = vpop.permute.xlu0 %3563
    %3567 = vset.pattern.permute.xlu0 0
    %3568 = vperm.xlu0 %3567, %v3545
    %v3569 = vpop.permute.xlu0 %3568
    %3572 = vset.pattern.permute.xlu0 0
    %3573 = vperm.xlu0 %3572, %v3546
    %v3574 = vpop.permute.xlu0 %3573
    %3577 = vset.pattern.permute.xlu0 0
    %3578 = vperm.xlu0 %3577, %v3547
    %v3579 = vpop.permute.xlu0 %3578
    %3582 = vset.pattern.permute.xlu0 0
    %3583 = vperm.xlu0 %3582, %v3548
    %v3584 = vpop.permute.xlu0 %3583
    %3587 = vset.pattern.permute.xlu0 0
    %3588 = vperm.xlu0 %3587, %v3549
    %v3589 = vpop.permute.xlu0 %3588
    %3592 = vset.pattern.permute.xlu0 0
    %3593 = vperm.xlu0 %3592, %v3550
    %v3594 = vpop.permute.xlu0 %3593
    %3597 = vset.pattern.permute.xlu0 0
    %3598 = vperm.xlu0 %3597, %v3551
    %v3599 = vpop.permute.xlu0 %3598
    %v3601 = vmul.f32 %v3564, %v3553
    %v3602 = vmul.f32 %v3569, %v3554
    %v3603 = vmul.f32 %v3574, %v3555
    %v3604 = vmul.f32 %v3579, %v3556
    %v3605 = vmul.f32 %v3584, %v3557
    %v3606 = vmul.f32 %v3589, %v3558
    %v3607 = vmul.f32 %v3594, %v3559
    %v3608 = vmul.f32 %v3599, %v3560
    %v3609 = vld [vmem:[%s18] sm:$0x1]
    %v3611 = vlaneseq
    %v3612 = vshrl.u32 %v3611, 7
    %v3613 = vsub.s32 0, %v3612
    %v3614 = vrot.slane %v3609, %v3613
    %v3617 = vsel %vm3190, %v3552, 0
    %3619 = vmatprep.subr.mxu0 0.0
    %3620 = vmatpush1.msra.mxu0 0.0
    %3621 = vmatprep.subr.mxu0 0.0
    %3622 = vmatpush1.msra.mxu0 0.0
    %3623 = vmatprep.subr.mxu0 0.0
    %3624 = vmatpush1.msra.mxu0 0.0
    %3625 = vmatprep.subr.mxu0 0.0
    %3626 = vmatpush1.msra.mxu0 0.0
    %3627 = vmatprep.subr.mxu0 0.0
    %3628 = vmatpush1.msra.mxu0 0.0
    %3629 = vmatprep.subr.mxu0 0.0
    %3630 = vmatpush1.msra.mxu0 0.0
    %3631 = vmatprep.subr.mxu0 0.0
    %3632 = vmatpush1.msra.mxu0 0.0
    %3633 = vmatprep.subr.mxu0 0.0
    %3634 = vmatpush1.msra.mxu0 0.0
    %3635 = vmatprep.subr.mxu0 0.0
    %3636 = vmatpush1.msra.mxu0 %v3608
    %3637 = vmatprep.subr.mxu0 0.0
    %3638 = vmatpush1.msra.mxu0 %v3607
    %3639 = vmatprep.subr.mxu0 0.0
    %3640 = vmatpush1.msra.mxu0 %v3606
    %3641 = vmatprep.subr.mxu0 0.0
    %3642 = vmatpush1.msra.mxu0 %v3605
    %3643 = vmatprep.subr.mxu0 0.0
    %3644 = vmatpush1.msra.mxu0 %v3604
    %3645 = vmatprep.subr.mxu0 0.0
    %3646 = vmatpush1.msra.mxu0 %v3603
    %3647 = vmatprep.subr.mxu0 0.0
    %3648 = vmatpush1.msra.mxu0 %v3602
    %3649 = vmatprep.subr.mxu0 0.0
    %3650 = vmatpush1.msra.mxu0 %v3601
    %3651 = vmatprep.subr.mxu0 0.0
    %3652 = vmatpush2.msra.mxu0 0.0
    %3653 = vmatprep.subr.mxu0 0.0
    %3654 = vmatpush2.msra.mxu0 0.0
    %3655 = vmatprep.subr.mxu0 0.0
    %3656 = vmatpush2.msra.mxu0 0.0
    %3657 = vmatprep.subr.mxu0 0.0
    %3658 = vmatpush2.msra.mxu0 0.0
    %3659 = vmatprep.subr.mxu0 0.0
    %3660 = vmatpush2.msra.mxu0 0.0
    %3661 = vmatprep.subr.mxu0 0.0
    %3662 = vmatpush2.msra.mxu0 0.0
    %3663 = vmatprep.subr.mxu0 0.0
    %3664 = vmatpush2.msra.mxu0 0.0
    %3665 = vmatprep.subr.mxu0 0.0
    %3666 = vmatpush2.msra.mxu0 0.0
    %3667 = vmatprep.subr.mxu0 0.0
    %3668 = vmatpush2.msra.mxu0 0.0
    %3669 = vmatprep.subr.mxu0 0.0
    %3670 = vmatpush2.msra.mxu0 0.0
    %3671 = vmatprep.subr.mxu0 0.0
    %3672 = vmatpush2.msra.mxu0 0.0
    %3673 = vmatprep.subr.mxu0 0.0
    %3674 = vmatpush2.msra.mxu0 0.0
    %3675 = vmatprep.subr.mxu0 0.0
    %3676 = vmatpush2.msra.mxu0 0.0
    %3677 = vmatprep.subr.mxu0 0.0
    %3678 = vmatpush2.msra.mxu0 0.0
    %3679 = vmatprep.subr.mxu0 0.0
    %3680 = vmatpush2.msra.mxu0 0.0
    %3681 = vmatprep.subr.mxu0 0.0
    %3682 = vmatpush2.msra.mxu0 0.0
    %3683 = vmatprep.mubr.f32.mxu0 0.0
    %3684 = vmatmul.mubr.f32.gmra.mxu0 %v3617
    %v3685 = vpop.f32.mrf.mxu0
    %v3686 = vadd.f32 %v3614, %v3685
    %v3687 = vpop.f32.mrf.mxu0
    %3688 = vdwg.mxu0
    %v3689 = vxor.u32 %v3686, 2147483648
    %v3690 = vmul.f32 %v3689, 1.442695
    %v3691 = vpow.pop %v3690
    %v3692 = vadd.f32 %v3691, 1.0
    %v3693 = vrcp.pop %v3692
    %v3694 = vmul.f32 1.0, %v3693
    %3695 = vst [vmem:[#allocation24] sm:$0xff] %v3694
    // Predicated region
    $region122: #{tpu_custom_call.1} parent=1 // pred_check
      _
    $region123: #{tpu_custom_call.1} parent=1 // pred_check_branch
      %3697 = sbr.rel (0) target = $region125
    $region124: #{tpu_custom_call.1} parent=1 // pred_region
      %s3699 = ssub.s32 128, 128
      %3700 = vsyncadd [#allocation8], %s3699
      %s3702 = sshll.u32 [#allocation24], 4
      %s3703 = int_to_ptr.vmem [resolvable:$true] %s3702
      %3705 = dma.vmem_to_hbm [thread:$0]  %s3703, 128, %s19, [#allocation8]
    $region125: #{tpu_custom_call.1} parent=1 // pred_fallthru
      _
    // Predicated region
    $region126: #{tpu_custom_call.1} parent=1 // pred_check
      _
    $region127: #{tpu_custom_call.1} parent=1 // pred_check_branch
      %3707 = sbr.rel (0) target = $region129
    $region128: #{tpu_custom_call.1} parent=1 // pred_region
      %s3709 = ssub.s32 128, 128
      %3710 = vsyncadd [#allocation26], %s3709
      %s3712 = sshll.u32 [#allocation25], 4
      %s3713 = int_to_ptr.vmem [resolvable:$true] %s3712
      %3715 = dma.vmem_to_hbm [thread:$0]  %s3713, 128, %s20, [#allocation26]
    $region129: #{tpu_custom_call.1} parent=1 // pred_fallthru
      _
    // Predicated region
    $region130: #{tpu_custom_call.1} parent=1 // pred_check
      _
    $region131: #{tpu_custom_call.1} parent=1 // pred_check_branch
      %3717 = sbr.rel (0) target = $region133
    $region132: #{tpu_custom_call.1} parent=1 // pred_region
      %3718 = dma.done [#allocation8], 128
    $region133: #{tpu_custom_call.1} parent=1 // pred_fallthru
      _
    // Predicated region
    $region134: #{tpu_custom_call.1} parent=1 // pred_check
      _
    $region135: #{tpu_custom_call.1} parent=1 // pred_check_branch
      %3720 = sbr.rel (0) target = $region137
    $region136: #{tpu_custom_call.1} parent=1 // pred_region
      %3721 = dma.done [#allocation26], 128
    $region137: #{tpu_custom_call.1} parent=1 // pred_fallthru
      _
    %3722 = vsyncpa [#allocation7], 1
    %3723 = vsyncpa [#allocation10], 1
    %3724 = vsyncpa [#allocation13], 1
    %3725 = vsyncpa [#allocation16], 1
    %3726 = vsyncpa [#allocation19], 1
    %3727 = vsyncpa [#allocation22], 1
    %3728 = vsyncpa [#allocation8], 1
    %3729 = vsyncpa [#allocation26], 1

</llo_original>
